<compile_context>
chip_gen: v6e
topology: v6e:2x2x1
jax: 0.10.0
libtpu: 0.0.40
codegen_flags: <defaults>
</compile_context>

<pallas_src>
import jax
import jax.numpy as jnp
from jax.experimental import pallas as pl
from jax.experimental.pallas import tpu as pltpu

BN_EPS = 1e-5
DIST_EPS = 1e-8
BIG_KEY = 0x7F7FFFFF   # max finite-f32 bit pattern; larger than any real distance key


def _rup(x, m):
    return ((x + m - 1) // m) * m


def _vmem_tile_bytes(rows, cols, itemsize):
    """VMEM footprint of a 2-D block after (sublane, lane) tiling / padding."""
    packing = max(1, 4 // itemsize)
    return _rup(max(rows, 1), 8 * packing) * _rup(max(cols, 1), 128) * itemsize


def _make_kernel(lane_bits):
    lane_mask = (1 << lane_bits) - 1          # Python ints -> weak int32 constants in-trace

    def propagation_kernel(x1_ref, x2t_ref, f1_ref, f2_ref,
                           w0a_ref, w0b_ref, ba0_ref, w1_ref, ba1_ref,
                           out_ref):
        x1 = x1_ref[0]                          # (TN, 3)  f32 coordinates
        x2t = x2t_ref[0]                        # (3, S)   f32 coordinates (transposed)
        f1 = f1_ref[0].astype(jnp.bfloat16)     # (TN, D1p)
        f2 = f2_ref[0].astype(jnp.bfloat16)     # (S, D2p)
        tn = x1.shape[0]
        s = x2t.shape[1]

        # ---- exact ||x1_i - x2_j||^2 on the VPU (no MXU pass, no cancellation) ----
        d0 = x1[:, 0:1] - x2t[0:1, :]           # (TN, S) via lane + sublane broadcast
        d1 = x1[:, 1:2] - x2t[1:2, :]
        d2 = x1[:, 2:3] - x2t[2:3, :]
        dists = d0 * d0 + d1 * d1 + d2 * d2     # (TN, S) f32, >= 0 by construction

        # Exact inverse distances, computed once; the selection below only decides which
        # lanes contribute, so the key-mantissa truncation never touches the weights.
        recip = 1.0 / (dists + DIST_EPS)

        # ---- top-3 NN: pack the lane index into the low mantissa bits of the
        #      non-negative f32 distance -> one XLU integer min per neighbor ----
        lane = jax.lax.broadcasted_iota(jnp.int32, (tn, s), 1)
        key = (pltpu.bitcast(dists, jnp.int32) & (~lane_mask)) | lane

        w_acc = jnp.zeros((tn, s), jnp.float32)
        for _ in range(3):                                    # static unroll
            kmin = jnp.min(key, axis=-1, keepdims=True)       # (TN, 1) int32
            onehot = lane == (kmin & lane_mask)
            w_acc = w_acc + jnp.where(onehot, recip, 0.0)
            key = jnp.where(onehot, BIG_KEY, key)
        norm = jnp.sum(w_acc, axis=-1, keepdims=True)         # (TN, 1)

        # ---- interpolation: unnormalized-weight matmul (bf16 MXU, f32 acc), then scale
        #      the small (TN, D2p) result by an EUP approx reciprocal ----
        interp = jnp.dot(w_acc.astype(jnp.bfloat16), f2,
                         preferred_element_type=jnp.float32)
        interp = interp * pl.reciprocal(norm, approx=True)

        # ---- MLP layer 0: Conv1d(k=1) on concat([f1, interp]) == split-weight matmuls;
        #      eval-mode BN already folded into weights/bias; PReLU (scalar alpha) ----
        h = (jnp.dot(f1, w0a_ref[...], preferred_element_type=jnp.float32)
             + jnp.dot(interp.astype(jnp.bfloat16), w0b_ref[...],
                       preferred_element_type=jnp.float32)
             + ba0_ref[0:1, :])
        h = jnp.where(h > 0, h, h * ba0_ref[1:2, :])

        # ---- MLP layer 1 ----
        h = (jnp.dot(h.astype(jnp.bfloat16), w1_ref[...],
                     preferred_element_type=jnp.float32)
             + ba1_ref[0:1, :])
        h = jnp.where(h > 0, h, h * ba1_ref[1:2, :])

        out_ref[0] = h.astype(out_ref.dtype)

    return propagation_kernel


def pointnet_propagation(xyz1, xyz2, feat1, feat2, params,
                         tile_n=None, out_dtype=jnp.float32):
    """params: raw (unfolded) 15-tuple matching the PyTorch module (see make_params)."""
    (w0a, w0b, b0, g0, be0, rm0, rv0, a0,
     w1, b1, g1, be1, rm1, rv1, a1) = params

    B, N, _ = xyz1.shape
    _, S, _ = xyz2.shape
    D1 = feat1.shape[-1]
    D2 = feat2.shape[-1]
    C0, C1 = w1.shape

    f32, bf16 = jnp.float32, jnp.bfloat16

    # ---- fold eval-mode BatchNorm into the conv weights / bias ----
    s0 = (g0 * jax.lax.rsqrt(rv0 + BN_EPS)).astype(f32)           # (1, C0)
    w0a_f = w0a * s0
    w0b_f = w0b * s0
    b0_f = (b0 - rm0) * s0 + be0
    s1 = (g1 * jax.lax.rsqrt(rv1 + BN_EPS)).astype(f32)           # (1, C1)
    w1_f = w1 * s1
    b1_f = (b1 - rm1) * s1 + be1

    # ---- pad all channel dims to multiples of 128 (lane-dense stores, full MXU lanes) ----
    D1p, D2p, C0p, C1p = [_rup(c, 128) for c in (D1, D2, C0, C1)]

    def pad2(w, r, c):
        return jnp.pad(w, ((0, r - w.shape[0]), (0, c - w.shape[1])))

    w0a_b = pad2(w0a_f, D1p, C0p).astype(bf16)
    w0b_b = pad2(w0b_f, D2p, C0p).astype(bf16)
    w1_b = pad2(w1_f, C0p, C1p).astype(bf16)
    # pack [bias ; broadcast-alpha] into a single (2, C) f32 param per layer
    ba0 = jnp.concatenate([pad2(b0_f, 1, C0p),
                           jnp.broadcast_to(a0, (1, C0p))], axis=0).astype(f32)
    ba1 = jnp.concatenate([pad2(b1_f, 1, C1p),
                           jnp.broadcast_to(a1, (1, C1p))], axis=0).astype(f32)

    # ---- per-generation scoped-VMEM budget ----
    try:
        vmem_cap = int(getattr(pltpu.get_tpu_info(), "vmem_capacity_bytes", 64 << 20))
    except Exception:
        vmem_cap = 64 << 20                                   # conservative (v7x-sized)
    # v5e/v6e have 128 MiB of VMEM -> allow up to 96 MiB scoped; v7x (64 MiB) -> 48 MiB.
    vmem_ceiling = (96 << 20) if vmem_cap >= (100 << 20) else (48 << 20)

    f1_it = 2 if D1 != D1p else jnp.dtype(feat1.dtype).itemsize
    f2_it = 2 if D2 != D2p else jnp.dtype(feat2.dtype).itemsize
    out_it = jnp.dtype(out_dtype).itemsize
    s_lanes = _rup(S, 128)

    # Bytes that do NOT scale with the N tile (per-batch residents + weights/bias); counted
    # at 2 buffers so the estimate also covers the double-buffered fallback path.
    fixed_bytes = (2 * (_vmem_tile_bytes(3, S, 4) + _vmem_tile_bytes(S, D2p, f2_it))
                   + 2 * (_vmem_tile_bytes(D1p, C0p, 2) + _vmem_tile_bytes(D2p, C0p, 2)
                          + _vmem_tile_bytes(C0p, C1p, 2)
                          + _vmem_tile_bytes(2, C0p, 4) + _vmem_tile_bytes(2, C1p, 4)))
    # Bytes per row of the N tile: double-buffered streamed blocks (the xyz tile is
    # lane-padded 3 -> 128) plus the in-kernel f32 temporaries (dists/key/recip/w_acc,
    # interp, two activation slabs), all lane-padded.
    per_row_bytes = (2 * (128 * 4 + D1p * f1_it + C1p * out_it)
                     + (6 * s_lanes + D2p + C0p + C1p) * 4)

    # ---- choose the N tile from the VMEM budget (big tiles amortize ~0.35 us/step) ----
    if tile_n is not None:
        TN = max(8, _rup(min(tile_n, N), 8))
    elif N <= 256:
        TN = _rup(N, 8)
    else:
        budget = int(0.8 * vmem_ceiling) - fixed_bytes
        tn_cap = max(256, budget // per_row_bytes)
        TN = max(256, (min(2048, tn_cap, _rup(N, 256)) // 256) * 256)
    N_pad = _rup(N, TN)
    # v7x has 2 TensorCores: a single "parallel" grid step serializes onto one of them,
    # so split the tile whenever the parallel extent would otherwise be < 2.
    if tile_n is None and B * (N_pad // TN) < 2 and TN >= 16:
        TN = _rup((TN + 1) // 2, 8)
        N_pad = _rup(N, TN)

    # ---- inputs: pad only what needs padding; otherwise pass through and cast in-kernel ----
    xyz1_f = xyz1.astype(f32)
    x1_in = xyz1_f if N_pad == N else jnp.pad(xyz1_f, ((0, 0), (0, N_pad - N), (0, 0)))
    x2t_in = jnp.transpose(xyz2.astype(f32), (0, 2, 1))           # (B, 3, S)

    if D1 != D1p or N_pad != N:
        f1_in = jnp.pad(feat1, ((0, 0), (0, N_pad - N), (0, D1p - D1))).astype(bf16)
    else:
        f1_in = feat1                                             # kernel casts to bf16
    if D2 != D2p:
        f2_in = jnp.pad(feat2, ((0, 0), (0, 0), (0, D2p - D2))).astype(bf16)
    else:
        f2_in = feat2

    lane_bits = max((S - 1).bit_length(), 1)
    kernel = _make_kernel(lane_bits)

    # accurate lane/sublane-padded per-step footprint -> explicit scoped-VMEM limit
    vmem_needed = (fixed_bytes
                   + 2 * (_vmem_tile_bytes(TN, 3, 4)
                          + _vmem_tile_bytes(TN, D1p, jnp.dtype(f1_in.dtype).itemsize)
                          + _vmem_tile_bytes(TN, C1p, out_it))
                   + TN * (6 * s_lanes + D2p + C0p + C1p) * 4)
    vmem_limit = int(min(vmem_ceiling, max(32 << 20, int(1.25 * vmem_needed))))

    grid = (B, N_pad // TN)

    def run(single_buffer_consts):
        const_mode = ({"pipeline_mode": pl.Buffered(1)} if single_buffer_consts else {})

        def tile_spec(c):                       # streamed along the N-tile axis
            return pl.BlockSpec((1, TN, c), lambda b, i: (b, i, 0))

        def res_spec(shape):                    # per-batch resident across the N-tile axis
            kw = const_mode if B == 1 else {}
            return pl.BlockSpec((1,) + shape, lambda b, i: (b, 0, 0), **kw)

        def param_spec(p):                      # grid-invariant weights / bias
            return pl.BlockSpec(p.shape, lambda b, i: (0,) * p.ndim, **const_mode)

        return pl.pallas_call(
            kernel,
            out_shape=jax.ShapeDtypeStruct((B, N_pad, C1p), out_dtype),
            grid=grid,
            in_specs=[tile_spec(3), res_spec((3, S)),
                      tile_spec(D1p), res_spec((S, D2p)),
                      param_spec(w0a_b), param_spec(w0b_b), param_spec(ba0),
                      param_spec(w1_b), param_spec(ba1)],
            out_specs=tile_spec(C1p),
            compiler_params=pltpu.CompilerParams(
                dimension_semantics=("parallel", "parallel"),
                vmem_limit_bytes=vmem_limit),
        )(x1_in, x2t_in, f1_in, f2_in, w0a_b, w0b_b, ba0, w1_b, ba1)

    try:
        out = run(True)
    except Exception:
        # pl.Buffered(1) single-buffering not supported by this jax build -> default buffering
        out = run(False)

    if N_pad == N and C1p == C1:
        return out
    if C1p == C1:
        return out[:, :N]
    return out[:, :N, :C1]


def reference(xyz1, xyz2, feat1, feat2, params):
    (w0a, w0b, b0, g0, be0, rm0, rv0, a0,
     w1, b1, g1, be1, rm1, rv1, a1) = params
    d = jnp.sum((xyz1[:, :, None, :] - xyz2[:, None, :, :]) ** 2, axis=-1)   # (B,N,S)
    idx = jnp.argsort(d, axis=-1)[:, :, :3]                                  # (B,N,3)
    dd = jnp.take_along_axis(d, idx, axis=-1)
    recip = 1.0 / (dd + DIST_EPS)
    w = recip / jnp.sum(recip, axis=-1, keepdims=True)                       # (B,N,3)
    gathered = jax.vmap(lambda f, i: f[i])(feat2, idx)                       # (B,N,3,D2)
    interp = jnp.sum(gathered * w[..., None], axis=2)                        # (B,N,D2)
    h = jnp.concatenate([feat1, interp], axis=-1)
    w0 = jnp.concatenate([w0a, w0b], axis=0)
    h = h @ w0 + b0
    h = (h - rm0) * jax.lax.rsqrt(rv0 + BN_EPS) * g0 + be0
    h = jnp.where(h > 0, h, h * a0)
    h = h @ w1 + b1
    h = (h - rm1) * jax.lax.rsqrt(rv1 + BN_EPS) * g1 + be1
    h = jnp.where(h > 0, h, h * a1)
    return h


def make_params(key, d1, d2, c0, c1):
    ks = jax.random.split(key, 12)
    w0a = jax.random.normal(ks[0], (d1, c0), jnp.float32) / jnp.sqrt(d1 + d2)
    w0b = jax.random.normal(ks[1], (d2, c0), jnp.float32) / jnp.sqrt(d1 + d2)
    b0 = jax.random.normal(ks[2], (1, c0), jnp.float32) * 0.1
    g0 = 1.0 + 0.1 * jax.random.normal(ks[3], (1, c0), jnp.float32)
    be0 = 0.1 * jax.random.normal(ks[4], (1, c0), jnp.float32)
    rm0 = 0.1 * jax.random.normal(ks[5], (1, c0), jnp.float32)
    rv0 = jax.random.uniform(ks[6], (1, c0), jnp.float32, 0.5, 1.5)
    a0 = jnp.full((1, 1), 0.25, jnp.float32)   # torch PReLU default init
    w1 = jax.random.normal(ks[7], (c0, c1), jnp.float32) / jnp.sqrt(c0)
    b1 = jax.random.normal(ks[8], (1, c1), jnp.float32) * 0.1
    g1 = 1.0 + 0.1 * jax.random.normal(ks[9], (1, c1), jnp.float32)
    be1 = 0.1 * jax.random.normal(ks[10], (1, c1), jnp.float32)
    rm1 = 0.1 * jax.random.normal(ks[11], (1, c1), jnp.float32)
    rv1 = jnp.full((1, c1), 1.0, jnp.float32)
    a1 = jnp.full((1, 1), 0.25, jnp.float32)
    return (w0a, w0b, b0, g0, be0, rm0, rv0, a0,
            w1, b1, g1, be1, rm1, rv1, a1)


if __name__ == "__main__":
    B, N, S = 2, 64, 16
    D1, D2 = 16, 16
    MLP = [32, 16]

    key = jax.random.PRNGKey(0)
    k1, k2, k3, k4, kp = jax.random.split(key, 5)
    xyz1 = jax.random.normal(k1, (B, N, 3), jnp.float32)
    xyz2 = jax.random.normal(k2, (B, S, 3), jnp.float32)
    feat1 = jax.random.normal(k3, (B, N, D1), jnp.float32)
    feat2 = jax.random.normal(k4, (B, S, D2), jnp.float32)
    params = make_params(kp, D1, D2, MLP[0], MLP[1])

    out = pointnet_propagation(xyz1, xyz2, feat1, feat2, params)
    out = jax.block_until_ready(out)

    ref = reference(xyz1, xyz2, feat1, feat2, params)
    assert out.shape == (B, N, MLP[1]), out.shape
    max_err = float(jnp.max(jnp.abs(out - ref)))
    # bf16 MXU matmuls with f32 accumulation -> bf16-appropriate tolerance
    assert jnp.allclose(out, ref, atol=2e-2, rtol=2e-2), max_err

    print("KERNEL_OK")
</pallas_src>

<mosaic_0001>
module attributes {stable_mosaic.version = 11 : i64} {
  func.func @propagation_kernel(%arg0: i32, %arg1: i32, %arg2: memref<1x64x3xf32, #tpu.memory_space<vmem>>, %arg3: memref<1x3x16xf32, #tpu.memory_space<vmem>>, %arg4: memref<1x64x128xbf16, #tpu.memory_space<vmem>>, %arg5: memref<1x16x128xbf16, #tpu.memory_space<vmem>>, %arg6: memref<128x128xbf16, #tpu.memory_space<vmem>>, %arg7: memref<128x128xbf16, #tpu.memory_space<vmem>>, %arg8: memref<2x128xf32, #tpu.memory_space<vmem>>, %arg9: memref<128x128xbf16, #tpu.memory_space<vmem>>, %arg10: memref<2x128xf32, #tpu.memory_space<vmem>>, %arg11: memref<1x64x128xf32, #tpu.memory_space<vmem>>) attributes {dimension_semantics = [#tpu.dimension_semantics<parallel>, #tpu.dimension_semantics<parallel>], iteration_bounds = array<i64: 2, 1>, scalar_prefetch = 0 : i64, scratch_operands = 0 : i64, tpu.core_type = #tpu.core_type<tc>, window_params = [{transform_indices = @transform_0, window_bounds = array<i64: 1, 64, 3>}, {transform_indices = @transform_1, window_bounds = array<i64: 1, 3, 16>}, {transform_indices = @transform_2, window_bounds = array<i64: 1, 64, 128>}, {transform_indices = @transform_3, window_bounds = array<i64: 1, 16, 128>}, {pipeline_mode = #tpu.pipeline_mode<synchronous>, transform_indices = @transform_4, window_bounds = array<i64: 128, 128>}, {pipeline_mode = #tpu.pipeline_mode<synchronous>, transform_indices = @transform_5, window_bounds = array<i64: 128, 128>}, {pipeline_mode = #tpu.pipeline_mode<synchronous>, transform_indices = @transform_6, window_bounds = array<i64: 2, 128>}, {pipeline_mode = #tpu.pipeline_mode<synchronous>, transform_indices = @transform_7, window_bounds = array<i64: 128, 128>}, {pipeline_mode = #tpu.pipeline_mode<synchronous>, transform_indices = @transform_8, window_bounds = array<i64: 2, 128>}, {transform_indices = @transform_9, window_bounds = array<i64: 1, 64, 128>}]} {
    %c0 = arith.constant 0 : index
    %c0_0 = arith.constant 0 : index
    %c0_1 = arith.constant 0 : index
    %0 = vector.load %arg2[%c0, %c0_0, %c0_1] : memref<1x64x3xf32, #tpu.memory_space<vmem>>, vector<1x64x3xf32>
    %1 = vector.shape_cast %0 : vector<1x64x3xf32> to vector<64x3xf32>
    %c0_2 = arith.constant 0 : index
    %c0_3 = arith.constant 0 : index
    %c0_4 = arith.constant 0 : index
    %2 = vector.load %arg3[%c0_2, %c0_3, %c0_4] : memref<1x3x16xf32, #tpu.memory_space<vmem>>, vector<1x3x16xf32>
    %3 = vector.shape_cast %2 : vector<1x3x16xf32> to vector<3x16xf32>
    %c0_5 = arith.constant 0 : index
    %c0_6 = arith.constant 0 : index
    %c0_7 = arith.constant 0 : index
    %4 = vector.load %arg4[%c0_5, %c0_6, %c0_7] : memref<1x64x128xbf16, #tpu.memory_space<vmem>>, vector<1x64x128xbf16>
    %5 = vector.shape_cast %4 : vector<1x64x128xbf16> to vector<64x128xbf16>
    %c0_8 = arith.constant 0 : index
    %c0_9 = arith.constant 0 : index
    %c0_10 = arith.constant 0 : index
    %6 = vector.load %arg5[%c0_8, %c0_9, %c0_10] : memref<1x16x128xbf16, #tpu.memory_space<vmem>>, vector<1x16x128xbf16>
    %7 = vector.shape_cast %6 : vector<1x16x128xbf16> to vector<16x128xbf16>
    %8 = vector.extract_strided_slice %1 {offsets = [0, 0], sizes = [64, 1], strides = [1, 1]} : vector<64x3xf32> to vector<64x1xf32>
    %9 = vector.extract_strided_slice %3 {offsets = [0, 0], sizes = [1, 16], strides = [1, 1]} : vector<3x16xf32> to vector<1x16xf32>
    %10 = vector.broadcast %8 : vector<64x1xf32> to vector<64x16xf32>
    %11 = vector.broadcast %9 : vector<1x16xf32> to vector<64x16xf32>
    %12 = arith.subf %10, %11 : vector<64x16xf32>
    %13 = vector.extract_strided_slice %1 {offsets = [0, 1], sizes = [64, 1], strides = [1, 1]} : vector<64x3xf32> to vector<64x1xf32>
    %14 = vector.extract_strided_slice %3 {offsets = [1, 0], sizes = [1, 16], strides = [1, 1]} : vector<3x16xf32> to vector<1x16xf32>
    %15 = vector.broadcast %13 : vector<64x1xf32> to vector<64x16xf32>
    %16 = vector.broadcast %14 : vector<1x16xf32> to vector<64x16xf32>
    %17 = arith.subf %15, %16 : vector<64x16xf32>
    %18 = vector.extract_strided_slice %1 {offsets = [0, 2], sizes = [64, 1], strides = [1, 1]} : vector<64x3xf32> to vector<64x1xf32>
    %19 = vector.extract_strided_slice %3 {offsets = [2, 0], sizes = [1, 16], strides = [1, 1]} : vector<3x16xf32> to vector<1x16xf32>
    %20 = vector.broadcast %18 : vector<64x1xf32> to vector<64x16xf32>
    %21 = vector.broadcast %19 : vector<1x16xf32> to vector<64x16xf32>
    %22 = arith.subf %20, %21 : vector<64x16xf32>
    %23 = arith.mulf %12, %12 : vector<64x16xf32>
    %24 = arith.mulf %17, %17 : vector<64x16xf32>
    %25 = arith.addf %23, %24 : vector<64x16xf32>
    %26 = arith.mulf %22, %22 : vector<64x16xf32>
    %27 = arith.addf %25, %26 : vector<64x16xf32>
    %cst = arith.constant 9.99999993E-9 : f32
    %28 = vector.broadcast %cst : f32 to vector<64x16xf32>
    %29 = arith.addf %27, %28 : vector<64x16xf32>
    %cst_11 = arith.constant 1.000000e+00 : f32
    %30 = vector.broadcast %cst_11 : f32 to vector<64x16xf32>
    %31 = arith.divf %30, %29 : vector<64x16xf32>
    %32 = tpu.iota {dimensions = array<i32: 1>} : vector<64x16xi32>
    %33 = tpu.bitcast %27 : vector<64x16xf32> -> vector<64x16xi32>
    %c-16_i32 = arith.constant -16 : i32
    %34 = vector.broadcast %c-16_i32 : i32 to vector<64x16xi32>
    %35 = arith.andi %33, %34 : vector<64x16xi32>
    %36 = arith.ori %35, %32 : vector<64x16xi32>
    %cst_12 = arith.constant 0.000000e+00 : f32
    %37 = vector.broadcast %cst_12 : f32 to vector<64x16xf32>
    %cst_13 = arith.constant dense<2147483647> : vector<64xi32>
    %38 = vector.multi_reduction <minsi>, %36, %cst_13 [1] : vector<64x16xi32> to vector<64xi32>
    %39 = vector.shape_cast %38 : vector<64xi32> to vector<64x1xi32>
    %c15_i32 = arith.constant 15 : i32
    %40 = vector.broadcast %c15_i32 : i32 to vector<64x1xi32>
    %41 = arith.andi %39, %40 : vector<64x1xi32>
    %42 = vector.broadcast %41 : vector<64x1xi32> to vector<64x16xi32>
    %43 = arith.cmpi eq, %32, %42 : vector<64x16xi32>
    %cst_14 = arith.constant 0.000000e+00 : f32
    %44 = vector.broadcast %cst_14 : f32 to vector<64x16xf32>
    %45 = arith.select %43, %31, %44 : vector<64x16xi1>, vector<64x16xf32>
    %46 = arith.addf %37, %45 : vector<64x16xf32>
    %c2139095039_i32 = arith.constant 2139095039 : i32
    %47 = vector.broadcast %c2139095039_i32 : i32 to vector<64x16xi32>
    %48 = arith.select %43, %47, %36 : vector<64x16xi1>, vector<64x16xi32>
    %cst_15 = arith.constant dense<2147483647> : vector<64xi32>
    %49 = vector.multi_reduction <minsi>, %48, %cst_15 [1] : vector<64x16xi32> to vector<64xi32>
    %50 = vector.shape_cast %49 : vector<64xi32> to vector<64x1xi32>
    %c15_i32_16 = arith.constant 15 : i32
    %51 = vector.broadcast %c15_i32_16 : i32 to vector<64x1xi32>
    %52 = arith.andi %50, %51 : vector<64x1xi32>
    %53 = vector.broadcast %52 : vector<64x1xi32> to vector<64x16xi32>
    %54 = arith.cmpi eq, %32, %53 : vector<64x16xi32>
    %cst_17 = arith.constant 0.000000e+00 : f32
    %55 = vector.broadcast %cst_17 : f32 to vector<64x16xf32>
    %56 = arith.select %54, %31, %55 : vector<64x16xi1>, vector<64x16xf32>
    %57 = arith.addf %46, %56 : vector<64x16xf32>
    %c2139095039_i32_18 = arith.constant 2139095039 : i32
    %58 = vector.broadcast %c2139095039_i32_18 : i32 to vector<64x16xi32>
    %59 = arith.select %54, %58, %48 : vector<64x16xi1>, vector<64x16xi32>
    %cst_19 = arith.constant dense<2147483647> : vector<64xi32>
    %60 = vector.multi_reduction <minsi>, %59, %cst_19 [1] : vector<64x16xi32> to vector<64xi32>
    %61 = vector.shape_cast %60 : vector<64xi32> to vector<64x1xi32>
    %c15_i32_20 = arith.constant 15 : i32
    %62 = vector.broadcast %c15_i32_20 : i32 to vector<64x1xi32>
    %63 = arith.andi %61, %62 : vector<64x1xi32>
    %64 = vector.broadcast %63 : vector<64x1xi32> to vector<64x16xi32>
    %65 = arith.cmpi eq, %32, %64 : vector<64x16xi32>
    %cst_21 = arith.constant 0.000000e+00 : f32
    %66 = vector.broadcast %cst_21 : f32 to vector<64x16xf32>
    %67 = arith.select %65, %31, %66 : vector<64x16xi1>, vector<64x16xf32>
    %68 = arith.addf %57, %67 : vector<64x16xf32>
    %cst_22 = arith.constant dense<0.000000e+00> : vector<64xf32>
    %69 = vector.multi_reduction <add>, %68, %cst_22 [1] : vector<64x16xf32> to vector<64xf32>
    %70 = vector.shape_cast %69 : vector<64xf32> to vector<64x1xf32>
    %71 = arith.truncf %68 : vector<64x16xf32> to vector<64x16xbf16>
    %cst_23 = arith.constant dense<0.000000e+00> : vector<64x128xf32>
    %72 = tpu.matmul %71, %7, %cst_23 {dimension_numbers = #tpu.dot_dimension_numbers<[1], [0], [0], [1], [0, 0, 1, 1], [], []>} : vector<64x16xbf16>, vector<16x128xbf16>, vector<64x128xf32> -> vector<64x128xf32>
    %73 = tpu.reciprocal %70 {approx = true} : vector<64x1xf32> -> vector<64x1xf32>
    %74 = vector.broadcast %73 : vector<64x1xf32> to vector<64x128xf32>
    %75 = arith.mulf %72, %74 : vector<64x128xf32>
    %c0_24 = arith.constant 0 : index
    %c0_25 = arith.constant 0 : index
    %76 = vector.load %arg6[%c0_24, %c0_25] : memref<128x128xbf16, #tpu.memory_space<vmem>>, vector<128x128xbf16>
    %cst_26 = arith.constant dense<0.000000e+00> : vector<64x128xf32>
    %77 = tpu.matmul %5, %76, %cst_26 {dimension_numbers = #tpu.dot_dimension_numbers<[1], [0], [0], [1], [0, 0, 1, 1], [], []>} : vector<64x128xbf16>, vector<128x128xbf16>, vector<64x128xf32> -> vector<64x128xf32>
    %78 = arith.truncf %75 : vector<64x128xf32> to vector<64x128xbf16>
    %c0_27 = arith.constant 0 : index
    %c0_28 = arith.constant 0 : index
    %79 = vector.load %arg7[%c0_27, %c0_28] : memref<128x128xbf16, #tpu.memory_space<vmem>>, vector<128x128xbf16>
    %cst_29 = arith.constant dense<0.000000e+00> : vector<64x128xf32>
    %80 = tpu.matmul %78, %79, %cst_29 {dimension_numbers = #tpu.dot_dimension_numbers<[1], [0], [0], [1], [0, 0, 1, 1], [], []>} : vector<64x128xbf16>, vector<128x128xbf16>, vector<64x128xf32> -> vector<64x128xf32>
    %81 = arith.addf %77, %80 : vector<64x128xf32>
    %c0_30 = arith.constant 0 : index
    %c0_31 = arith.constant 0 : index
    %82 = vector.load %arg8[%c0_30, %c0_31] : memref<2x128xf32, #tpu.memory_space<vmem>>, vector<1x128xf32>
    %83 = vector.broadcast %82 : vector<1x128xf32> to vector<64x128xf32>
    %84 = arith.addf %81, %83 : vector<64x128xf32>
    %cst_32 = arith.constant 0.000000e+00 : f32
    %85 = vector.broadcast %cst_32 : f32 to vector<64x128xf32>
    %86 = arith.cmpf ogt, %84, %85 : vector<64x128xf32>
    %c1 = arith.constant 1 : index
    %c0_33 = arith.constant 0 : index
    %87 = vector.load %arg8[%c1, %c0_33] : memref<2x128xf32, #tpu.memory_space<vmem>>, vector<1x128xf32>
    %88 = vector.broadcast %87 : vector<1x128xf32> to vector<64x128xf32>
    %89 = arith.mulf %84, %88 : vector<64x128xf32>
    %90 = arith.select %86, %84, %89 : vector<64x128xi1>, vector<64x128xf32>
    %91 = arith.truncf %90 : vector<64x128xf32> to vector<64x128xbf16>
    %c0_34 = arith.constant 0 : index
    %c0_35 = arith.constant 0 : index
    %92 = vector.load %arg9[%c0_34, %c0_35] : memref<128x128xbf16, #tpu.memory_space<vmem>>, vector<128x128xbf16>
    %cst_36 = arith.constant dense<0.000000e+00> : vector<64x128xf32>
    %93 = tpu.matmul %91, %92, %cst_36 {dimension_numbers = #tpu.dot_dimension_numbers<[1], [0], [0], [1], [0, 0, 1, 1], [], []>} : vector<64x128xbf16>, vector<128x128xbf16>, vector<64x128xf32> -> vector<64x128xf32>
    %c0_37 = arith.constant 0 : index
    %c0_38 = arith.constant 0 : index
    %94 = vector.load %arg10[%c0_37, %c0_38] : memref<2x128xf32, #tpu.memory_space<vmem>>, vector<1x128xf32>
    %95 = vector.broadcast %94 : vector<1x128xf32> to vector<64x128xf32>
    %96 = arith.addf %93, %95 : vector<64x128xf32>
    %cst_39 = arith.constant 0.000000e+00 : f32
    %97 = vector.broadcast %cst_39 : f32 to vector<64x128xf32>
    %98 = arith.cmpf ogt, %96, %97 : vector<64x128xf32>
    %c1_40 = arith.constant 1 : index
    %c0_41 = arith.constant 0 : index
    %99 = vector.load %arg10[%c1_40, %c0_41] : memref<2x128xf32, #tpu.memory_space<vmem>>, vector<1x128xf32>
    %100 = vector.broadcast %99 : vector<1x128xf32> to vector<64x128xf32>
    %101 = arith.mulf %96, %100 : vector<64x128xf32>
    %102 = arith.select %98, %96, %101 : vector<64x128xi1>, vector<64x128xf32>
    %c0_42 = arith.constant 0 : index
    %c0_43 = arith.constant 0 : index
    %c0_44 = arith.constant 0 : index
    %103 = vector.load %arg11[%c0_42, %c0_43, %c0_44] : memref<1x64x128xf32, #tpu.memory_space<vmem>>, vector<1x64x128xf32>
    %104 = vector.shape_cast %103 : vector<1x64x128xf32> to vector<64x128xf32>
    %105 = vector.shape_cast %102 : vector<64x128xf32> to vector<1x64x128xf32>
    tpu.vector_store %arg11[%c0_42, %c0_43, %c0_44], %105 {strides = array<i32>} : memref<1x64x128xf32, #tpu.memory_space<vmem>>, vector<1x64x128xf32>,
    return
  }
  func.func @transform_0(%arg0: i32, %arg1: i32) -> (i32, i32, i32) {
    %c0_i32 = arith.constant 0 : i32
    %c0_i32_0 = arith.constant 0 : i32
    return %arg0, %arg1, %c0_i32 : i32, i32, i32
  }
  func.func @transform_1(%arg0: i32, %arg1: i32) -> (i32, i32, i32) {
    %c0_i32 = arith.constant 0 : i32
    %c0_i32_0 = arith.constant 0 : i32
    %c0_i32_1 = arith.constant 0 : i32
    return %arg0, %c0_i32, %c0_i32_0 : i32, i32, i32
  }
  func.func @transform_2(%arg0: i32, %arg1: i32) -> (i32, i32, i32) {
    %c0_i32 = arith.constant 0 : i32
    %c0_i32_0 = arith.constant 0 : i32
    return %arg0, %arg1, %c0_i32 : i32, i32, i32
  }
  func.func @transform_3(%arg0: i32, %arg1: i32) -> (i32, i32, i32) {
    %c0_i32 = arith.constant 0 : i32
    %c0_i32_0 = arith.constant 0 : i32
    %c0_i32_1 = arith.constant 0 : i32
    return %arg0, %c0_i32, %c0_i32_0 : i32, i32, i32
  }
  func.func @transform_4(%arg0: i32, %arg1: i32) -> (i32, i32) {
    %c0_i32 = arith.constant 0 : i32
    %c0_i32_0 = arith.constant 0 : i32
    %c0_i32_1 = arith.constant 0 : i32
    return %c0_i32, %c0_i32_0 : i32, i32
  }
  func.func @transform_5(%arg0: i32, %arg1: i32) -> (i32, i32) {
    %c0_i32 = arith.constant 0 : i32
    %c0_i32_0 = arith.constant 0 : i32
    %c0_i32_1 = arith.constant 0 : i32
    return %c0_i32, %c0_i32_0 : i32, i32
  }
  func.func @transform_6(%arg0: i32, %arg1: i32) -> (i32, i32) {
    %c0_i32 = arith.constant 0 : i32
    %c0_i32_0 = arith.constant 0 : i32
    %c0_i32_1 = arith.constant 0 : i32
    return %c0_i32, %c0_i32_0 : i32, i32
  }
  func.func @transform_7(%arg0: i32, %arg1: i32) -> (i32, i32) {
    %c0_i32 = arith.constant 0 : i32
    %c0_i32_0 = arith.constant 0 : i32
    %c0_i32_1 = arith.constant 0 : i32
    return %c0_i32, %c0_i32_0 : i32, i32
  }
  func.func @transform_8(%arg0: i32, %arg1: i32) -> (i32, i32) {
    %c0_i32 = arith.constant 0 : i32
    %c0_i32_0 = arith.constant 0 : i32
    %c0_i32_1 = arith.constant 0 : i32
    return %c0_i32, %c0_i32_0 : i32, i32
  }
  func.func @transform_9(%arg0: i32, %arg1: i32) -> (i32, i32, i32) {
    %c0_i32 = arith.constant 0 : i32
    %c0_i32_0 = arith.constant 0 : i32
    return %arg0, %arg1, %c0_i32 : i32, i32, i32
  }
}

module attributes {stable_mosaic.version = 11 : i64} {
  func.func @propagation_kernel(%arg0: i32, %arg1: i32, %arg2: memref<1x64x3xf32, #tpu.memory_space<vmem>>, %arg3: memref<1x3x16xf32, #tpu.memory_space<vmem>>, %arg4: memref<1x64x128xbf16, #tpu.memory_space<vmem>>, %arg5: memref<1x16x128xbf16, #tpu.memory_space<vmem>>, %arg6: memref<128x128xbf16, #tpu.memory_space<vmem>>, %arg7: memref<128x128xbf16, #tpu.memory_space<vmem>>, %arg8: memref<2x128xf32, #tpu.memory_space<vmem>>, %arg9: memref<128x128xbf16, #tpu.memory_space<vmem>>, %arg10: memref<2x128xf32, #tpu.memory_space<vmem>>, %arg11: memref<1x64x128xf32, #tpu.memory_space<vmem>>) attributes {dimension_semantics = [#tpu.dimension_semantics<parallel>, #tpu.dimension_semantics<parallel>], iteration_bounds = array<i64: 2, 1>, scalar_prefetch = 0 : i64, scratch_operands = 0 : i64, tpu.core_type = #tpu.core_type<tc>, window_params = [{transform_indices = @transform_0, window_bounds = array<i64: 1, 64, 3>}, {transform_indices = @transform_1, window_bounds = array<i64: 1, 3, 16>}, {transform_indices = @transform_2, window_bounds = array<i64: 1, 64, 128>}, {transform_indices = @transform_3, window_bounds = array<i64: 1, 16, 128>}, {pipeline_mode = #tpu.pipeline_mode<synchronous>, transform_indices = @transform_4, window_bounds = array<i64: 128, 128>}, {pipeline_mode = #tpu.pipeline_mode<synchronous>, transform_indices = @transform_5, window_bounds = array<i64: 128, 128>}, {pipeline_mode = #tpu.pipeline_mode<synchronous>, transform_indices = @transform_6, window_bounds = array<i64: 2, 128>}, {pipeline_mode = #tpu.pipeline_mode<synchronous>, transform_indices = @transform_7, window_bounds = array<i64: 128, 128>}, {pipeline_mode = #tpu.pipeline_mode<synchronous>, transform_indices = @transform_8, window_bounds = array<i64: 2, 128>}, {transform_indices = @transform_9, window_bounds = array<i64: 1, 64, 128>}]} {
    %c0 = arith.constant 0 : index
    %c0_0 = arith.constant 0 : index
    %c0_1 = arith.constant 0 : index
    %0 = vector.load %arg2[%c0, %c0_0, %c0_1] : memref<1x64x3xf32, #tpu.memory_space<vmem>>, vector<1x64x3xf32>
    %1 = vector.shape_cast %0 : vector<1x64x3xf32> to vector<64x3xf32>
    %c0_2 = arith.constant 0 : index
    %c0_3 = arith.constant 0 : index
    %c0_4 = arith.constant 0 : index
    %2 = vector.load %arg3[%c0_2, %c0_3, %c0_4] : memref<1x3x16xf32, #tpu.memory_space<vmem>>, vector<1x3x16xf32>
    %3 = vector.shape_cast %2 : vector<1x3x16xf32> to vector<3x16xf32>
    %c0_5 = arith.constant 0 : index
    %c0_6 = arith.constant 0 : index
    %c0_7 = arith.constant 0 : index
    %4 = vector.load %arg4[%c0_5, %c0_6, %c0_7] : memref<1x64x128xbf16, #tpu.memory_space<vmem>>, vector<1x64x128xbf16>
    %5 = vector.shape_cast %4 : vector<1x64x128xbf16> to vector<64x128xbf16>
    %c0_8 = arith.constant 0 : index
    %c0_9 = arith.constant 0 : index
    %c0_10 = arith.constant 0 : index
    %6 = vector.load %arg5[%c0_8, %c0_9, %c0_10] : memref<1x16x128xbf16, #tpu.memory_space<vmem>>, vector<1x16x128xbf16>
    %7 = vector.shape_cast %6 : vector<1x16x128xbf16> to vector<16x128xbf16>
    %8 = vector.extract_strided_slice %1 {offsets = [0, 0], sizes = [64, 1], strides = [1, 1]} : vector<64x3xf32> to vector<64x1xf32>
    %9 = vector.extract_strided_slice %3 {offsets = [0, 0], sizes = [1, 16], strides = [1, 1]} : vector<3x16xf32> to vector<1x16xf32>
    %10 = vector.broadcast %8 : vector<64x1xf32> to vector<64x16xf32>
    %11 = vector.broadcast %9 : vector<1x16xf32> to vector<64x16xf32>
    %12 = arith.subf %10, %11 : vector<64x16xf32>
    %13 = vector.extract_strided_slice %1 {offsets = [0, 1], sizes = [64, 1], strides = [1, 1]} : vector<64x3xf32> to vector<64x1xf32>
    %14 = vector.extract_strided_slice %3 {offsets = [1, 0], sizes = [1, 16], strides = [1, 1]} : vector<3x16xf32> to vector<1x16xf32>
    %15 = vector.broadcast %13 : vector<64x1xf32> to vector<64x16xf32>
    %16 = vector.broadcast %14 : vector<1x16xf32> to vector<64x16xf32>
    %17 = arith.subf %15, %16 : vector<64x16xf32>
    %18 = vector.extract_strided_slice %1 {offsets = [0, 2], sizes = [64, 1], strides = [1, 1]} : vector<64x3xf32> to vector<64x1xf32>
    %19 = vector.extract_strided_slice %3 {offsets = [2, 0], sizes = [1, 16], strides = [1, 1]} : vector<3x16xf32> to vector<1x16xf32>
    %20 = vector.broadcast %18 : vector<64x1xf32> to vector<64x16xf32>
    %21 = vector.broadcast %19 : vector<1x16xf32> to vector<64x16xf32>
    %22 = arith.subf %20, %21 : vector<64x16xf32>
    %23 = arith.mulf %12, %12 : vector<64x16xf32>
    %24 = arith.mulf %17, %17 : vector<64x16xf32>
    %25 = arith.addf %23, %24 : vector<64x16xf32>
    %26 = arith.mulf %22, %22 : vector<64x16xf32>
    %27 = arith.addf %25, %26 : vector<64x16xf32>
    %cst = arith.constant 9.99999993E-9 : f32
    %28 = vector.broadcast %cst : f32 to vector<64x16xf32>
    %29 = arith.addf %27, %28 : vector<64x16xf32>
    %cst_11 = arith.constant 1.000000e+00 : f32
    %30 = vector.broadcast %cst_11 : f32 to vector<64x16xf32>
    %31 = arith.divf %30, %29 : vector<64x16xf32>
    %32 = tpu.iota {dimensions = array<i32: 1>} : vector<64x16xi32>
    %33 = tpu.bitcast %27 : vector<64x16xf32> -> vector<64x16xi32>
    %c-16_i32 = arith.constant -16 : i32
    %34 = vector.broadcast %c-16_i32 : i32 to vector<64x16xi32>
    %35 = arith.andi %33, %34 : vector<64x16xi32>
    %36 = arith.ori %35, %32 : vector<64x16xi32>
    %cst_12 = arith.constant 0.000000e+00 : f32
    %37 = vector.broadcast %cst_12 : f32 to vector<64x16xf32>
    %cst_13 = arith.constant dense<2147483647> : vector<64xi32>
    %38 = vector.multi_reduction <minsi>, %36, %cst_13 [1] : vector<64x16xi32> to vector<64xi32>
    %39 = vector.shape_cast %38 : vector<64xi32> to vector<64x1xi32>
    %c15_i32 = arith.constant 15 : i32
    %40 = vector.broadcast %c15_i32 : i32 to vector<64x1xi32>
    %41 = arith.andi %39, %40 : vector<64x1xi32>
    %42 = vector.broadcast %41 : vector<64x1xi32> to vector<64x16xi32>
    %43 = arith.cmpi eq, %32, %42 : vector<64x16xi32>
    %cst_14 = arith.constant 0.000000e+00 : f32
    %44 = vector.broadcast %cst_14 : f32 to vector<64x16xf32>
    %45 = arith.select %43, %31, %44 : vector<64x16xi1>, vector<64x16xf32>
    %46 = arith.addf %37, %45 : vector<64x16xf32>
    %c2139095039_i32 = arith.constant 2139095039 : i32
    %47 = vector.broadcast %c2139095039_i32 : i32 to vector<64x16xi32>
    %48 = arith.select %43, %47, %36 : vector<64x16xi1>, vector<64x16xi32>
    %cst_15 = arith.constant dense<2147483647> : vector<64xi32>
    %49 = vector.multi_reduction <minsi>, %48, %cst_15 [1] : vector<64x16xi32> to vector<64xi32>
    %50 = vector.shape_cast %49 : vector<64xi32> to vector<64x1xi32>
    %c15_i32_16 = arith.constant 15 : i32
    %51 = vector.broadcast %c15_i32_16 : i32 to vector<64x1xi32>
    %52 = arith.andi %50, %51 : vector<64x1xi32>
    %53 = vector.broadcast %52 : vector<64x1xi32> to vector<64x16xi32>
    %54 = arith.cmpi eq, %32, %53 : vector<64x16xi32>
    %cst_17 = arith.constant 0.000000e+00 : f32
    %55 = vector.broadcast %cst_17 : f32 to vector<64x16xf32>
    %56 = arith.select %54, %31, %55 : vector<64x16xi1>, vector<64x16xf32>
    %57 = arith.addf %46, %56 : vector<64x16xf32>
    %c2139095039_i32_18 = arith.constant 2139095039 : i32
    %58 = vector.broadcast %c2139095039_i32_18 : i32 to vector<64x16xi32>
    %59 = arith.select %54, %58, %48 : vector<64x16xi1>, vector<64x16xi32>
    %cst_19 = arith.constant dense<2147483647> : vector<64xi32>
    %60 = vector.multi_reduction <minsi>, %59, %cst_19 [1] : vector<64x16xi32> to vector<64xi32>
    %61 = vector.shape_cast %60 : vector<64xi32> to vector<64x1xi32>
    %c15_i32_20 = arith.constant 15 : i32
    %62 = vector.broadcast %c15_i32_20 : i32 to vector<64x1xi32>
    %63 = arith.andi %61, %62 : vector<64x1xi32>
    %64 = vector.broadcast %63 : vector<64x1xi32> to vector<64x16xi32>
    %65 = arith.cmpi eq, %32, %64 : vector<64x16xi32>
    %cst_21 = arith.constant 0.000000e+00 : f32
    %66 = vector.broadcast %cst_21 : f32 to vector<64x16xf32>
    %67 = arith.select %65, %31, %66 : vector<64x16xi1>, vector<64x16xf32>
    %68 = arith.addf %57, %67 : vector<64x16xf32>
    %cst_22 = arith.constant dense<0.000000e+00> : vector<64xf32>
    %69 = vector.multi_reduction <add>, %68, %cst_22 [1] : vector<64x16xf32> to vector<64xf32>
    %70 = vector.shape_cast %69 : vector<64xf32> to vector<64x1xf32>
    %71 = arith.truncf %68 : vector<64x16xf32> to vector<64x16xbf16>
    %cst_23 = arith.constant dense<0.000000e+00> : vector<64x128xf32>
    %72 = tpu.matmul %71, %7, %cst_23 {dimension_numbers = #tpu.dot_dimension_numbers<[1], [0], [0], [1], [0, 0, 1, 1], [], []>} : vector<64x16xbf16>, vector<16x128xbf16>, vector<64x128xf32> -> vector<64x128xf32>
    %73 = tpu.reciprocal %70 {approx = true} : vector<64x1xf32> -> vector<64x1xf32>
    %74 = vector.broadcast %73 : vector<64x1xf32> to vector<64x128xf32>
    %75 = arith.mulf %72, %74 : vector<64x128xf32>
    %c0_24 = arith.constant 0 : index
    %c0_25 = arith.constant 0 : index
    %76 = vector.load %arg6[%c0_24, %c0_25] : memref<128x128xbf16, #tpu.memory_space<vmem>>, vector<128x128xbf16>
    %cst_26 = arith.constant dense<0.000000e+00> : vector<64x128xf32>
    %77 = tpu.matmul %5, %76, %cst_26 {dimension_numbers = #tpu.dot_dimension_numbers<[1], [0], [0], [1], [0, 0, 1, 1], [], []>} : vector<64x128xbf16>, vector<128x128xbf16>, vector<64x128xf32> -> vector<64x128xf32>
    %78 = arith.truncf %75 : vector<64x128xf32> to vector<64x128xbf16>
    %c0_27 = arith.constant 0 : index
    %c0_28 = arith.constant 0 : index
    %79 = vector.load %arg7[%c0_27, %c0_28] : memref<128x128xbf16, #tpu.memory_space<vmem>>, vector<128x128xbf16>
    %cst_29 = arith.constant dense<0.000000e+00> : vector<64x128xf32>
    %80 = tpu.matmul %78, %79, %cst_29 {dimension_numbers = #tpu.dot_dimension_numbers<[1], [0], [0], [1], [0, 0, 1, 1], [], []>} : vector<64x128xbf16>, vector<128x128xbf16>, vector<64x128xf32> -> vector<64x128xf32>
    %81 = arith.addf %77, %80 : vector<64x128xf32>
    %c0_30 = arith.constant 0 : index
    %c0_31 = arith.constant 0 : index
    %82 = vector.load %arg8[%c0_30, %c0_31] : memref<2x128xf32, #tpu.memory_space<vmem>>, vector<1x128xf32>
    %83 = vector.broadcast %82 : vector<1x128xf32> to vector<64x128xf32>
    %84 = arith.addf %81, %83 : vector<64x128xf32>
    %cst_32 = arith.constant 0.000000e+00 : f32
    %85 = vector.broadcast %cst_32 : f32 to vector<64x128xf32>
    %86 = arith.cmpf ogt, %84, %85 : vector<64x128xf32>
    %c1 = arith.constant 1 : index
    %c0_33 = arith.constant 0 : index
    %87 = vector.load %arg8[%c1, %c0_33] : memref<2x128xf32, #tpu.memory_space<vmem>>, vector<1x128xf32>
    %88 = vector.broadcast %87 : vector<1x128xf32> to vector<64x128xf32>
    %89 = arith.mulf %84, %88 : vector<64x128xf32>
    %90 = arith.select %86, %84, %89 : vector<64x128xi1>, vector<64x128xf32>
    %91 = arith.truncf %90 : vector<64x128xf32> to vector<64x128xbf16>
    %c0_34 = arith.constant 0 : index
    %c0_35 = arith.constant 0 : index
    %92 = vector.load %arg9[%c0_34, %c0_35] : memref<128x128xbf16, #tpu.memory_space<vmem>>, vector<128x128xbf16>
    %cst_36 = arith.constant dense<0.000000e+00> : vector<64x128xf32>
    %93 = tpu.matmul %91, %92, %cst_36 {dimension_numbers = #tpu.dot_dimension_numbers<[1], [0], [0], [1], [0, 0, 1, 1], [], []>} : vector<64x128xbf16>, vector<128x128xbf16>, vector<64x128xf32> -> vector<64x128xf32>
    %c0_37 = arith.constant 0 : index
    %c0_38 = arith.constant 0 : index
    %94 = vector.load %arg10[%c0_37, %c0_38] : memref<2x128xf32, #tpu.memory_space<vmem>>, vector<1x128xf32>
    %95 = vector.broadcast %94 : vector<1x128xf32> to vector<64x128xf32>
    %96 = arith.addf %93, %95 : vector<64x128xf32>
    %cst_39 = arith.constant 0.000000e+00 : f32
    %97 = vector.broadcast %cst_39 : f32 to vector<64x128xf32>
    %98 = arith.cmpf ogt, %96, %97 : vector<64x128xf32>
    %c1_40 = arith.constant 1 : index
    %c0_41 = arith.constant 0 : index
    %99 = vector.load %arg10[%c1_40, %c0_41] : memref<2x128xf32, #tpu.memory_space<vmem>>, vector<1x128xf32>
    %100 = vector.broadcast %99 : vector<1x128xf32> to vector<64x128xf32>
    %101 = arith.mulf %96, %100 : vector<64x128xf32>
    %102 = arith.select %98, %96, %101 : vector<64x128xi1>, vector<64x128xf32>
    %c0_42 = arith.constant 0 : index
    %c0_43 = arith.constant 0 : index
    %c0_44 = arith.constant 0 : index
    %103 = vector.load %arg11[%c0_42, %c0_43, %c0_44] : memref<1x64x128xf32, #tpu.memory_space<vmem>>, vector<1x64x128xf32>
    %104 = vector.shape_cast %103 : vector<1x64x128xf32> to vector<64x128xf32>
    %105 = vector.shape_cast %102 : vector<64x128xf32> to vector<1x64x128xf32>
    tpu.vector_store %arg11[%c0_42, %c0_43, %c0_44], %105 {strides = array<i32>} : memref<1x64x128xf32, #tpu.memory_space<vmem>>, vector<1x64x128xf32>,
    return
  }
  func.func @transform_0(%arg0: i32, %arg1: i32) -> (i32, i32, i32) {
    %c0_i32 = arith.constant 0 : i32
    %c0_i32_0 = arith.constant 0 : i32
    return %arg0, %arg1, %c0_i32 : i32, i32, i32
  }
  func.func @transform_1(%arg0: i32, %arg1: i32) -> (i32, i32, i32) {
    %c0_i32 = arith.constant 0 : i32
    %c0_i32_0 = arith.constant 0 : i32
    %c0_i32_1 = arith.constant 0 : i32
    return %arg0, %c0_i32, %c0_i32_0 : i32, i32, i32
  }
  func.func @transform_2(%arg0: i32, %arg1: i32) -> (i32, i32, i32) {
    %c0_i32 = arith.constant 0 : i32
    %c0_i32_0 = arith.constant 0 : i32
    return %arg0, %arg1, %c0_i32 : i32, i32, i32
  }
  func.func @transform_3(%arg0: i32, %arg1: i32) -> (i32, i32, i32) {
    %c0_i32 = arith.constant 0 : i32
    %c0_i32_0 = arith.constant 0 : i32
    %c0_i32_1 = arith.constant 0 : i32
    return %arg0, %c0_i32, %c0_i32_0 : i32, i32, i32
  }
  func.func @transform_4(%arg0: i32, %arg1: i32) -> (i32, i32) {
    %c0_i32 = arith.constant 0 : i32
    %c0_i32_0 = arith.constant 0 : i32
    %c0_i32_1 = arith.constant 0 : i32
    return %c0_i32, %c0_i32_0 : i32, i32
  }
  func.func @transform_5(%arg0: i32, %arg1: i32) -> (i32, i32) {
    %c0_i32 = arith.constant 0 : i32
    %c0_i32_0 = arith.constant 0 : i32
    %c0_i32_1 = arith.constant 0 : i32
    return %c0_i32, %c0_i32_0 : i32, i32
  }
  func.func @transform_6(%arg0: i32, %arg1: i32) -> (i32, i32) {
    %c0_i32 = arith.constant 0 : i32
    %c0_i32_0 = arith.constant 0 : i32
    %c0_i32_1 = arith.constant 0 : i32
    return %c0_i32, %c0_i32_0 : i32, i32
  }
  func.func @transform_7(%arg0: i32, %arg1: i32) -> (i32, i32) {
    %c0_i32 = arith.constant 0 : i32
    %c0_i32_0 = arith.constant 0 : i32
    %c0_i32_1 = arith.constant 0 : i32
    return %c0_i32, %c0_i32_0 : i32, i32
  }
  func.func @transform_8(%arg0: i32, %arg1: i32) -> (i32, i32) {
    %c0_i32 = arith.constant 0 : i32
    %c0_i32_0 = arith.constant 0 : i32
    %c0_i32_1 = arith.constant 0 : i32
    return %c0_i32, %c0_i32_0 : i32, i32
  }
  func.func @transform_9(%arg0: i32, %arg1: i32) -> (i32, i32, i32) {
    %c0_i32 = arith.constant 0 : i32
    %c0_i32_0 = arith.constant 0 : i32
    return %arg0, %arg1, %c0_i32 : i32, i32, i32
  }
}

</mosaic_0001>

<llo_original>
// kernel: tpu_custom_call.1
$region0: #{tpu_custom_call.1}
  #allocation0 [shape = 'u32[]', space=smem, size = 0x4, offset = 0x4, fixed_abs, tag = 'smem constant byte address 0x4 - core index']
  #allocation1 [shape = 'u32[144,128]{1,0:T(1,128)}', space=vmem, size = 0x12000, scoped, tag = 'internal scratch']
  %s0 = inlined_call_operand.vmem [shape: f32[2,64,3], index: 0, kind: input, shape index: {}]
  %s1 = inlined_call_operand.vmem [shape: f32[2,3,16], index: 1, kind: input, shape index: {}]
  %s2 = inlined_call_operand.vmem [shape: bf16[2,64,128], index: 2, kind: input, shape index: {}]
  %s3 = inlined_call_operand.vmem [shape: bf16[2,16,128], index: 3, kind: input, shape index: {}]
  %s4 = inlined_call_operand.vmem [shape: bf16[128,128], index: 4, kind: input, shape index: {}]
  %s5 = inlined_call_operand.hbm [shape: bf16[128,128], index: 5, kind: input, shape index: {}]
  %s6 = inlined_call_operand.vmem [shape: f32[2,128], index: 6, kind: input, shape index: {}]
  %s7 = inlined_call_operand.hbm [shape: bf16[128,128], index: 7, kind: input, shape index: {}]
  %s8 = inlined_call_operand.vmem [shape: f32[2,128], index: 8, kind: input, shape index: {}]
  %s9 = inlined_call_operand.hbm [shape: f32[2,64,128], index: 9, kind: output, shape index: {}]
  %s10 = sld [smem:[#allocation0]]
  $region77: #{tpu_custom_call.1} parent=0
    _
  %s12 = ssub.s32 1, %s10
  %s13 = scalar_select 0, %s12, %s10
  $region1: #{tpu_custom_call.1} parent=0
    #allocation2 [shape = 'u8[32768]{0}', space=vmem, size = 0x8000, scoped, tag = 'input window, operand 5, single buffered']
    #allocation3 [shape = 's32[2]{0}', space=sflag, size = 0x8, scoped, tag = 'scoped memory for tpu_custom_call.1']
    #allocation4 [shape = 's32[2]{0}', space=sflag, size = 0x8, scoped, tag = 'scoped memory for tpu_custom_call.1']
    #allocation5 [shape = 'u8[32768]{0}', space=vmem, size = 0x8000, scoped, tag = 'input window, operand 7, single buffered']
    #allocation6 [shape = 's32[1]{0}', space=sflag, size = 0x4, scoped, tag = 'scoped memory for tpu_custom_call.1']
    #allocation7 [shape = 'u8[65536]{0}', space=vmem, size = 0x10000, scoped, tag = 'output window, operand 0']
    %14 = vsyncpa [#allocation3], 0
    %15 = vsyncpa [#allocation6], 0
    %16 = vsyncpa [#allocation4], 0
    %s17 = scalar_lea.sflag [#allocation4], 1
    %18 = vsyncpa %s17, 0
    loop: start=0, step=1, limit=4
    $region2: #{tpu_custom_call.1} parent=1 // loop_pre_header
      _
    $region3: #{tpu_custom_call.1} parent=1 // loop_header
      %s20 = sphi 0, %s24
      %p21 = scmp.ge.s32.totalorder %s20, 4
      %s27 = sphi 0, %s39
      %s28 = sphi 0, %s35
      %s29 = sphi 0, %s27
      %s30 = sphi 0, %s28
      %s31 = sphi 0, %s29
      %s32 = sphi 0, %s30
      %s44 = sphi 0, %s46
      %s47 = sphi 0, %s44
      %s48 = sphi 0, %s47
      %s64 = sphi 0, %s48
      %s70 = sphi 0, %s72
      %s73 = sphi 0, %s70
      %s74 = sphi 0, %s73
      %s90 = sphi 0, %s74
      %s98 = sphi 0, %s100
      %s101 = sphi 0, %s98
      %s102 = sphi 0, %s101
      %s118 = sphi 0, %s102
      %s124 = sphi 0, %s126
      %s127 = sphi 0, %s124
      %s128 = sphi 0, %s127
      %s144 = sphi 0, %s128
      %s148 = sphi 0, %s148
      %s150 = sphi 0, %s148
      %s151 = sphi 0, %s150
      %s165 = sphi 0, %s151
      %s169 = sphi 0, %s169
      %s171 = sphi 0, %s169
      %s172 = sphi 0, %s171
      %s186 = sphi 0, %s172
      %s190 = sphi 0, %s190
      %s192 = sphi 0, %s190
      %s193 = sphi 0, %s192
      %s207 = sphi 0, %s193
      %s211 = sphi 0, %s211
      %s213 = sphi 0, %s211
      %s214 = sphi 0, %s213
      %s228 = sphi 0, %s214
      %s232 = sphi 0, %s232
      %s234 = sphi 0, %s232
      %s235 = sphi 0, %s234
      %s249 = sphi 0, %s235
      %s257 = sphi 0, %s259
      %s260 = sphi 0, %s257
      %s261 = sphi 0, %s260
      %s277 = sphi 0, %s261
    $region4: #{tpu_custom_call.1} parent=1 // loop_header_branch
      %23 = sbr.rel (%p21) target = $region8
    $region5: #{tpu_custom_call.1} parent=1 // loop_body
      %s25 = ssub.s32 %s20, 1
      %s26 = ssub.s32 %s20, 2
      %s33 = sadd.s32 1, %s28
      %p34 = scmp.ge.s32.totalorder %s33, 1
      %s35 = scalar_select %p34, 0, %s33
      %s36 = sadd.s32 1, %s27
      %s37 = scalar_select %p34, %s36, %s27
      %p38 = scmp.ge.s32.totalorder %s37, 2
      %s39 = scalar_select %p38, 0, %s37
      %s40 = ssub.s32 %s27, %s39
      %s41 = ssub.s32 %s28, %s35
      %s42 = sor.u32 %s40, %s41
      %p43 = scmp.eq.s32.totalorder %s42, 0
      %s45 = sadd.s32 %s44, 1
      %s46 = scalar_select %p43, %s44, %s45
      %p49 = pneg %p43
      %p50 = scmp.eq.s32.totalorder %s20, 1
      %p51 = por %p49, %p50
      %p52 = scmp.ne.s32.totalorder %s44, %s47
      %p53 = scmp.eq.s32.totalorder %s20, 0
      %p54 = por %p52, %p53
      %p55 = scmp.ne.s32.totalorder %s44, %s47
      %p56 = scmp.eq.s32.totalorder %s25, 1
      %p57 = por %p55, %p56
      %p58 = scmp.ne.s32.totalorder %s47, %s48
      %p59 = scmp.eq.s32.totalorder %s25, 0
      %p60 = por %p58, %p59
      %p61 = scmp.ne.s32.totalorder %s47, %s48
      %p62 = scmp.eq.s32.totalorder %s26, 1
      %p63 = por %p61, %p62
      %p65 = scmp.ne.s32.totalorder %s48, %s64
      %p66 = scmp.eq.s32.totalorder %s26, 0
      %p67 = por %p65, %p66
      %s68 = ssub.s32 %s27, %s39
      %p69 = scmp.eq.s32.totalorder %s68, 0
      %s71 = sadd.s32 %s70, 1
      %s72 = scalar_select %p69, %s70, %s71
      %p75 = pneg %p69
      %p76 = scmp.eq.s32.totalorder %s20, 1
      %p77 = por %p75, %p76
      %p78 = scmp.ne.s32.totalorder %s70, %s73
      %p79 = scmp.eq.s32.totalorder %s20, 0
      %p80 = por %p78, %p79
      %p81 = scmp.ne.s32.totalorder %s70, %s73
      %p82 = scmp.eq.s32.totalorder %s25, 1
      %p83 = por %p81, %p82
      %p84 = scmp.ne.s32.totalorder %s73, %s74
      %p85 = scmp.eq.s32.totalorder %s25, 0
      %p86 = por %p84, %p85
      %p87 = scmp.ne.s32.totalorder %s73, %s74
      %p88 = scmp.eq.s32.totalorder %s26, 1
      %p89 = por %p87, %p88
      %p91 = scmp.ne.s32.totalorder %s74, %s90
      %p92 = scmp.eq.s32.totalorder %s26, 0
      %p93 = por %p91, %p92
      %s94 = ssub.s32 %s27, %s39
      %s95 = ssub.s32 %s28, %s35
      %s96 = sor.u32 %s94, %s95
      %p97 = scmp.eq.s32.totalorder %s96, 0
      %s99 = sadd.s32 %s98, 1
      %s100 = scalar_select %p97, %s98, %s99
      %p103 = pneg %p97
      %p104 = scmp.eq.s32.totalorder %s20, 1
      %p105 = por %p103, %p104
      %p106 = scmp.ne.s32.totalorder %s98, %s101
      %p107 = scmp.eq.s32.totalorder %s20, 0
      %p108 = por %p106, %p107
      %p109 = scmp.ne.s32.totalorder %s98, %s101
      %p110 = scmp.eq.s32.totalorder %s25, 1
      %p111 = por %p109, %p110
      %p112 = scmp.ne.s32.totalorder %s101, %s102
      %p113 = scmp.eq.s32.totalorder %s25, 0
      %p114 = por %p112, %p113
      %p115 = scmp.ne.s32.totalorder %s101, %s102
      %p116 = scmp.eq.s32.totalorder %s26, 1
      %p117 = por %p115, %p116
      %p119 = scmp.ne.s32.totalorder %s102, %s118
      %p120 = scmp.eq.s32.totalorder %s26, 0
      %p121 = por %p119, %p120
      %s122 = ssub.s32 %s27, %s39
      %p123 = scmp.eq.s32.totalorder %s122, 0
      %s125 = sadd.s32 %s124, 1
      %s126 = scalar_select %p123, %s124, %s125
      %p129 = pneg %p123
      %p130 = scmp.eq.s32.totalorder %s20, 1
      %p131 = por %p129, %p130
      %p132 = scmp.ne.s32.totalorder %s124, %s127
      %p133 = scmp.eq.s32.totalorder %s20, 0
      %p134 = por %p132, %p133
      %p135 = scmp.ne.s32.totalorder %s124, %s127
      %p136 = scmp.eq.s32.totalorder %s25, 1
      %p137 = por %p135, %p136
      %p138 = scmp.ne.s32.totalorder %s127, %s128
      %p139 = scmp.eq.s32.totalorder %s25, 0
      %p140 = por %p138, %p139
      %p141 = scmp.ne.s32.totalorder %s127, %s128
      %p142 = scmp.eq.s32.totalorder %s26, 1
      %p143 = por %p141, %p142
      %p145 = scmp.ne.s32.totalorder %s128, %s144
      %p146 = scmp.eq.s32.totalorder %s26, 0
      %p147 = por %p145, %p146
      %s149 = sadd.s32 %s148, 1
      %p152 = scmp.eq.s32.totalorder %s20, 1
      %p153 = scmp.ne.s32.totalorder %s148, %s150
      %p154 = scmp.eq.s32.totalorder %s20, 0
      %p155 = por %p153, %p154
      %p156 = scmp.ne.s32.totalorder %s148, %s150
      %p157 = scmp.eq.s32.totalorder %s25, 1
      %p158 = por %p156, %p157
      %p159 = scmp.ne.s32.totalorder %s150, %s151
      %p160 = scmp.eq.s32.totalorder %s25, 0
      %p161 = por %p159, %p160
      %p162 = scmp.ne.s32.totalorder %s150, %s151
      %p163 = scmp.eq.s32.totalorder %s26, 1
      %p164 = por %p162, %p163
      %p166 = scmp.ne.s32.totalorder %s151, %s165
      %p167 = scmp.eq.s32.totalorder %s26, 0
      %p168 = por %p166, %p167
      %s170 = sadd.s32 %s169, 1
      %p173 = scmp.eq.s32.totalorder %s20, 1
      %p174 = scmp.ne.s32.totalorder %s169, %s171
      %p175 = scmp.eq.s32.totalorder %s20, 0
      %p176 = por %p174, %p175
      %p177 = scmp.ne.s32.totalorder %s169, %s171
      %p178 = scmp.eq.s32.totalorder %s25, 1
      %p179 = por %p177, %p178
      %p180 = scmp.ne.s32.totalorder %s171, %s172
      %p181 = scmp.eq.s32.totalorder %s25, 0
      %p182 = por %p180, %p181
      %p183 = scmp.ne.s32.totalorder %s171, %s172
      %p184 = scmp.eq.s32.totalorder %s26, 1
      %p185 = por %p183, %p184
      %p187 = scmp.ne.s32.totalorder %s172, %s186
      %p188 = scmp.eq.s32.totalorder %s26, 0
      %p189 = por %p187, %p188
      %s191 = sadd.s32 %s190, 1
      %p194 = scmp.eq.s32.totalorder %s20, 1
      %p195 = scmp.ne.s32.totalorder %s190, %s192
      %p196 = scmp.eq.s32.totalorder %s20, 0
      %p197 = por %p195, %p196
      %p198 = scmp.ne.s32.totalorder %s190, %s192
      %p199 = scmp.eq.s32.totalorder %s25, 1
      %p200 = por %p198, %p199
      %p201 = scmp.ne.s32.totalorder %s192, %s193
      %p202 = scmp.eq.s32.totalorder %s25, 0
      %p203 = por %p201, %p202
      %p204 = scmp.ne.s32.totalorder %s192, %s193
      %p205 = scmp.eq.s32.totalorder %s26, 1
      %p206 = por %p204, %p205
      %p208 = scmp.ne.s32.totalorder %s193, %s207
      %p209 = scmp.eq.s32.totalorder %s26, 0
      %p210 = por %p208, %p209
      %s212 = sadd.s32 %s211, 1
      %p215 = scmp.eq.s32.totalorder %s20, 1
      %p216 = scmp.ne.s32.totalorder %s211, %s213
      %p217 = scmp.eq.s32.totalorder %s20, 0
      %p218 = por %p216, %p217
      %p219 = scmp.ne.s32.totalorder %s211, %s213
      %p220 = scmp.eq.s32.totalorder %s25, 1
      %p221 = por %p219, %p220
      %p222 = scmp.ne.s32.totalorder %s213, %s214
      %p223 = scmp.eq.s32.totalorder %s25, 0
      %p224 = por %p222, %p223
      %p225 = scmp.ne.s32.totalorder %s213, %s214
      %p226 = scmp.eq.s32.totalorder %s26, 1
      %p227 = por %p225, %p226
      %p229 = scmp.ne.s32.totalorder %s214, %s228
      %p230 = scmp.eq.s32.totalorder %s26, 0
      %p231 = por %p229, %p230
      %s233 = sadd.s32 %s232, 1
      %p236 = scmp.eq.s32.totalorder %s20, 1
      %p237 = scmp.ne.s32.totalorder %s232, %s234
      %p238 = scmp.eq.s32.totalorder %s20, 0
      %p239 = por %p237, %p238
      %p240 = scmp.ne.s32.totalorder %s232, %s234
      %p241 = scmp.eq.s32.totalorder %s25, 1
      %p242 = por %p240, %p241
      %p243 = scmp.ne.s32.totalorder %s234, %s235
      %p244 = scmp.eq.s32.totalorder %s25, 0
      %p245 = por %p243, %p244
      %p246 = scmp.ne.s32.totalorder %s234, %s235
      %p247 = scmp.eq.s32.totalorder %s26, 1
      %p248 = por %p246, %p247
      %p250 = scmp.ne.s32.totalorder %s235, %s249
      %p251 = scmp.eq.s32.totalorder %s26, 0
      %p252 = por %p250, %p251
      %s253 = ssub.s32 %s27, %s39
      %s254 = ssub.s32 %s28, %s35
      %s255 = sor.u32 %s253, %s254
      %p256 = scmp.eq.s32.totalorder %s255, 0
      %s258 = sadd.s32 %s257, 1
      %s259 = scalar_select %p256, %s257, %s258
      %p262 = pneg %p256
      %p263 = scmp.eq.s32.totalorder %s20, 1
      %p264 = por %p262, %p263
      %p265 = scmp.ne.s32.totalorder %s257, %s260
      %p266 = scmp.eq.s32.totalorder %s20, 0
      %p267 = por %p265, %p266
      %p268 = scmp.ne.s32.totalorder %s257, %s260
      %p269 = scmp.eq.s32.totalorder %s25, 1
      %p270 = por %p268, %p269
      %p271 = scmp.ne.s32.totalorder %s260, %s261
      %p272 = scmp.eq.s32.totalorder %s25, 0
      %p273 = por %p271, %p272
      %p274 = scmp.ne.s32.totalorder %s260, %s261
      %p275 = scmp.eq.s32.totalorder %s26, 1
      %p276 = por %p274, %p275
      %p278 = scmp.ne.s32.totalorder %s261, %s277
      %p279 = scmp.eq.s32.totalorder %s26, 0
      %p280 = por %p278, %p279
      %p281 = scmp.le.s32.totalorder 1, %s20
      %p282 = scmp.lt.s32.totalorder %s20, 3
      %p283 = pnand %p281, %p282
      %p284 = pneg %p283
      // Predicated region
      $region9: #{tpu_custom_call.1} parent=5 // pred_check
        _
      $region10: #{tpu_custom_call.1} parent=5 // pred_check_branch
        %286 = sbr.rel (%p283) target = $region12
      $region11: #{tpu_custom_call.1} parent=5 // pred_region
        %s287 = ssub.s32 %s20, 1
        // Predicated region
        $region13: #{tpu_custom_call.1} parent=11 // pred_check
          %p288 = pneg %p161
        $region14: #{tpu_custom_call.1} parent=11 // pred_check_branch
          %290 = sbr.rel (%p288) target = $region16
        $region15: #{tpu_custom_call.1} parent=11 // pred_region
          _
        $region16: #{tpu_custom_call.1} parent=11 // pred_fallthru
          _
        // Predicated region
        $region17: #{tpu_custom_call.1} parent=11 // pred_check
          %p291 = pneg %p182
        $region18: #{tpu_custom_call.1} parent=11 // pred_check_branch
          %293 = sbr.rel (%p291) target = $region20
        $region19: #{tpu_custom_call.1} parent=11 // pred_region
          %s295 = ssub.s32 1024, 1024
          %296 = vsyncadd [#allocation3], %s295
          %s297 = sshll.u32 [#allocation2], 4
          %s298 = int_to_ptr.vmem [resolvable:$true] %s297
          %303 = dma.hbm_to_vmem [thread:$0]  %s5, 1024, %s298, [#allocation3], 64, 64, 4
        $region20: #{tpu_custom_call.1} parent=11 // pred_fallthru
          _
        // Predicated region
        $region21: #{tpu_custom_call.1} parent=11 // pred_check
          %p304 = pneg %p203
        $region22: #{tpu_custom_call.1} parent=11 // pred_check_branch
          %306 = sbr.rel (%p304) target = $region24
        $region23: #{tpu_custom_call.1} parent=11 // pred_region
          _
        $region24: #{tpu_custom_call.1} parent=11 // pred_fallthru
          _
        // Predicated region
        $region25: #{tpu_custom_call.1} parent=11 // pred_check
          %p307 = pneg %p224
        $region26: #{tpu_custom_call.1} parent=11 // pred_check_branch
          %309 = sbr.rel (%p307) target = $region28
        $region27: #{tpu_custom_call.1} parent=11 // pred_region
          %s311 = ssub.s32 1024, 1024
          %312 = vsyncadd [#allocation6], %s311
          %s313 = sshll.u32 [#allocation5], 4
          %s314 = int_to_ptr.vmem [resolvable:$true] %s313
          %319 = dma.hbm_to_vmem [thread:$0]  %s7, 1024, %s314, [#allocation6], 64, 64, 4
        $region28: #{tpu_custom_call.1} parent=11 // pred_fallthru
          _
        // Predicated region
        $region29: #{tpu_custom_call.1} parent=11 // pred_check
          %p320 = pneg %p245
        $region30: #{tpu_custom_call.1} parent=11 // pred_check_branch
          %322 = sbr.rel (%p320) target = $region32
        $region31: #{tpu_custom_call.1} parent=11 // pred_region
          _
        $region32: #{tpu_custom_call.1} parent=11 // pred_fallthru
          _
      $region12: #{tpu_custom_call.1} parent=5 // pred_fallthru
        _
      %p323 = scmp.lt.s32.totalorder %s20, 2
      // Predicated region
      $region33: #{tpu_custom_call.1} parent=5 // pred_check
        %p324 = pneg %p323
      $region34: #{tpu_custom_call.1} parent=5 // pred_check_branch
        %326 = sbr.rel (%p324) target = $region36
      $region35: #{tpu_custom_call.1} parent=5 // pred_region
        // Predicated region
        $region37: #{tpu_custom_call.1} parent=35 // pred_check
          %p327 = pneg %p54
        $region38: #{tpu_custom_call.1} parent=35 // pred_check_branch
          %329 = sbr.rel (%p327) target = $region40
        $region39: #{tpu_custom_call.1} parent=35 // pred_region
          %s330 = smul.u32 8, %s28
          %p331 = scmp.lt.s32.totalorder %s27, 1
          %s332 = scalar_select %p331, %s27, 1
          %p333 = scmp.lt.s32.totalorder %s330, 7
          %s334 = scalar_select %p333, %s330, 7
          %s335 = smul.addr %s332, 8
          %s336 = sadd.s32 %s334, %s335
          %s337 = smul.addr %s336, 8
          %s338 = scalar_lea.vmem %s0, %s337
          %s339 = smul.u32 8, %s28
        $region40: #{tpu_custom_call.1} parent=35 // pred_fallthru
          _
        // Predicated region
        $region41: #{tpu_custom_call.1} parent=35 // pred_check
          %p340 = pneg %p80
        $region42: #{tpu_custom_call.1} parent=35 // pred_check_branch
          %342 = sbr.rel (%p340) target = $region44
        $region43: #{tpu_custom_call.1} parent=35 // pred_region
          %p343 = scmp.lt.s32.totalorder %s27, 1
          %s344 = scalar_select %p343, %s27, 1
          %s345 = smul.addr %s344, 4
          %s346 = scalar_lea.vmem %s1, %s345
        $region44: #{tpu_custom_call.1} parent=35 // pred_fallthru
          _
        // Predicated region
        $region45: #{tpu_custom_call.1} parent=35 // pred_check
          %p347 = pneg %p108
        $region46: #{tpu_custom_call.1} parent=35 // pred_check_branch
          %349 = sbr.rel (%p347) target = $region48
        $region47: #{tpu_custom_call.1} parent=35 // pred_region
          %s350 = smul.u32 8, %s28
          %p351 = scmp.lt.s32.totalorder %s27, 1
          %s352 = scalar_select %p351, %s27, 1
          %p353 = scmp.lt.s32.totalorder %s350, 7
          %s354 = scalar_select %p353, %s350, 7
          %s355 = smul.addr %s352, 8
          %s356 = sadd.s32 %s354, %s355
          %s357 = smul.addr %s356, 4
          %s358 = scalar_lea.vmem %s2, %s357
          %s359 = smul.u32 8, %s28
        $region48: #{tpu_custom_call.1} parent=35 // pred_fallthru
          _
        // Predicated region
        $region49: #{tpu_custom_call.1} parent=35 // pred_check
          %p360 = pneg %p134
        $region50: #{tpu_custom_call.1} parent=35 // pred_check_branch
          %362 = sbr.rel (%p360) target = $region52
        $region51: #{tpu_custom_call.1} parent=35 // pred_region
          %p363 = scmp.lt.s32.totalorder %s27, 1
          %s364 = scalar_select %p363, %s27, 1
          %s365 = smul.addr %s364, 2
          %s366 = smul.addr %s365, 4
          %s367 = scalar_lea.vmem %s3, %s366
        $region52: #{tpu_custom_call.1} parent=35 // pred_fallthru
          _
      $region36: #{tpu_custom_call.1} parent=5 // pred_fallthru
        _
      %p368 = scmp.le.s32.totalorder 1, %s20
      %p369 = scmp.lt.s32.totalorder %s20, 3
      %p370 = pnand %p368, %p369
      %p371 = pneg %p370
      // Predicated region
      $region53: #{tpu_custom_call.1} parent=5 // pred_check
        _
      $region54: #{tpu_custom_call.1} parent=5 // pred_check_branch
        %373 = sbr.rel (%p370) target = $region56
      $region55: #{tpu_custom_call.1} parent=5 // pred_region
        %s374 = ssub.s32 %s20, 1
        // Predicated region
        $region57: #{tpu_custom_call.1} parent=55 // pred_check
          %p375 = pneg %p182
        $region58: #{tpu_custom_call.1} parent=55 // pred_check_branch
          %377 = sbr.rel (%p375) target = $region60
        $region59: #{tpu_custom_call.1} parent=55 // pred_region
          %378 = dma.done [#allocation3], 1024
        $region60: #{tpu_custom_call.1} parent=55 // pred_fallthru
          _
        // Predicated region
        $region61: #{tpu_custom_call.1} parent=55 // pred_check
          %p379 = pneg %p224
        $region62: #{tpu_custom_call.1} parent=55 // pred_check_branch
          %381 = sbr.rel (%p379) target = $region64
        $region63: #{tpu_custom_call.1} parent=55 // pred_region
          %382 = dma.done [#allocation6], 1024
        $region64: #{tpu_custom_call.1} parent=55 // pred_fallthru
          _
        %s383 = smul.u32 8, %s30
        %p384 = scmp.lt.s32.totalorder %s29, 1
        %s385 = scalar_select %p384, %s29, 1
        %p386 = scmp.lt.s32.totalorder %s383, 7
        %s387 = scalar_select %p386, %s383, 7
        %s388 = smul.addr %s385, 8
        %s389 = sadd.s32 %s387, %s388
        %s390 = smul.addr %s389, 8
        %s391 = scalar_lea.vmem %s0, %s390
        %p392 = pneg %p60
        %p393 = pneg %p57
        %p394 = scmp.lt.s32.totalorder %s29, 1
        %s395 = scalar_select %p394, %s29, 1
        %s396 = smul.addr %s395, 4
        %s397 = scalar_lea.vmem %s1, %s396
        %p398 = pneg %p86
        %p399 = pneg %p83
        %s400 = smul.u32 8, %s30
        %p401 = scmp.lt.s32.totalorder %s29, 1
        %s402 = scalar_select %p401, %s29, 1
        %p403 = scmp.lt.s32.totalorder %s400, 7
        %s404 = scalar_select %p403, %s400, 7
        %s405 = smul.addr %s402, 8
        %s406 = sadd.s32 %s404, %s405
        %s407 = smul.addr %s406, 4
        %s408 = scalar_lea.vmem %s2, %s407
        %p409 = pneg %p114
        %p410 = pneg %p111
        %p411 = scmp.lt.s32.totalorder %s29, 1
        %s412 = scalar_select %p411, %s29, 1
        %s413 = smul.addr %s412, 2
        %s414 = smul.addr %s413, 4
        %s415 = scalar_lea.vmem %s3, %s414
        %p416 = pneg %p140
        %p417 = pneg %p137
        %p418 = pneg %p161
        %p419 = pneg %p158
        %p420 = pneg %p182
        %p421 = pneg %p179
        %p422 = pneg %p203
        %p423 = pneg %p200
        %p424 = pneg %p224
        %p425 = pneg %p221
        %p426 = pneg %p245
        %p427 = pneg %p242
        %p428 = pneg %p273
        %p429 = pneg %p270
        %s430 = sand.u32 %s260, 1
        %s431 = scalar_lea.sflag [#allocation4], %s430
        %s432 = sand.u32 %s260, 1
        %s433 = smul.addr %s432, 64
        %s434 = scalar_lea.vmem [#allocation7], %s433
        %s435 = smul.u32 8, %s30
        %p436 = scmp.lt.s32.totalorder %s29, 1
        %s437 = scalar_select %p436, %s29, 1
        %p438 = scmp.lt.s32.totalorder %s435, 7
        %s439 = scalar_select %p438, %s435, 7
        %s440 = smul.addr %s437, 8
        %s441 = sadd.s32 %s439, %s440
        %s442 = smul.addr %s441, 8
        %s443 = scalar_lea.vmem %s0, %s442
        %s444 = smul.u32 8, %s30
        %p445 = scmp.lt.s32.totalorder %s29, 1
        %s446 = scalar_select %p445, %s29, 1
        %s447 = smul.addr %s446, 4
        %s448 = scalar_lea.vmem %s1, %s447
        %s449 = smul.u32 8, %s30
        %p450 = scmp.lt.s32.totalorder %s29, 1
        %s451 = scalar_select %p450, %s29, 1
        %p452 = scmp.lt.s32.totalorder %s449, 7
        %s453 = scalar_select %p452, %s449, 7
        %s454 = smul.addr %s451, 8
        %s455 = sadd.s32 %s453, %s454
        %s456 = smul.addr %s455, 4
        %s457 = scalar_lea.vmem %s2, %s456
        %s458 = smul.u32 8, %s30
        %p459 = scmp.lt.s32.totalorder %s29, 1
        %s460 = scalar_select %p459, %s29, 1
        %s461 = smul.addr %s460, 2
        %s462 = smul.addr %s461, 4
        %s463 = scalar_lea.vmem %s3, %s462
        %s464 = smul.u32 8, %s30
        %v466 = vld [vmem:[%s443] sm:$0xff]
        %v467 = vld [vmem:[%s443 + $0x8] sm:$0xff]
        %v468 = vld [vmem:[%s443 + $0x10] sm:$0xff]
        %v469 = vld [vmem:[%s443 + $0x18] sm:$0xff]
        %v470 = vld [vmem:[%s443 + $0x20] sm:$0xff]
        %v471 = vld [vmem:[%s443 + $0x28] sm:$0xff]
        %v472 = vld [vmem:[%s443 + $0x30] sm:$0xff]
        %v473 = vld [vmem:[%s443 + $0x38] sm:$0xff]
        %v474 = vld [vmem:[%s448] sm:$0x7]
        %v475 = vld [vmem:[%s457] sm:$0xf]
        %v476 = vld [vmem:[%s457 + $0x4] sm:$0xf]
        %v477 = vld [vmem:[%s457 + $0x8] sm:$0xf]
        %v478 = vld [vmem:[%s457 + $0xc] sm:$0xf]
        %v479 = vld [vmem:[%s457 + $0x10] sm:$0xf]
        %v480 = vld [vmem:[%s457 + $0x14] sm:$0xf]
        %v481 = vld [vmem:[%s457 + $0x18] sm:$0xf]
        %v482 = vld [vmem:[%s457 + $0x1c] sm:$0xf]
        %v483 = vld [vmem:[%s463] sm:$0xf]
        %v484 = vld [vmem:[%s463 + $0x4] sm:$0xf]
        %486 = vset.pattern.permute.xlu0 0
        %487 = vperm.xlu0 %486, %v466
        %v488 = vpop.permute.xlu0 %487
        %491 = vset.pattern.permute.xlu0 0
        %492 = vperm.xlu0 %491, %v467
        %v493 = vpop.permute.xlu0 %492
        %496 = vset.pattern.permute.xlu0 0
        %497 = vperm.xlu0 %496, %v468
        %v498 = vpop.permute.xlu0 %497
        %501 = vset.pattern.permute.xlu0 0
        %502 = vperm.xlu0 %501, %v469
        %v503 = vpop.permute.xlu0 %502
        %506 = vset.pattern.permute.xlu0 0
        %507 = vperm.xlu0 %506, %v470
        %v508 = vpop.permute.xlu0 %507
        %511 = vset.pattern.permute.xlu0 0
        %512 = vperm.xlu0 %511, %v471
        %v513 = vpop.permute.xlu0 %512
        %516 = vset.pattern.permute.xlu0 0
        %517 = vperm.xlu0 %516, %v472
        %v518 = vpop.permute.xlu0 %517
        %521 = vset.pattern.permute.xlu0 0
        %522 = vperm.xlu0 %521, %v473
        %v523 = vpop.permute.xlu0 %522
        %v525 = vlaneseq
        %v526 = vshrl.u32 %v525, 7
        %v527 = vsub.s32 0, %v526
        %v528 = vrot.slane %v474, %v527
        %v529 = vsub.f32 %v488, %v528
        %v530 = vsub.f32 %v493, %v528
        %v531 = vsub.f32 %v498, %v528
        %v532 = vsub.f32 %v503, %v528
        %v533 = vsub.f32 %v508, %v528
        %v534 = vsub.f32 %v513, %v528
        %v535 = vsub.f32 %v518, %v528
        %v536 = vsub.f32 %v523, %v528
        %537 = vset.pattern.permute.xlu0 1
        %538 = vperm.xlu0 %537, %v466
        %v539 = vpop.permute.xlu0 %538
        %541 = vset.pattern.permute.xlu0 1
        %542 = vperm.xlu0 %541, %v467
        %v543 = vpop.permute.xlu0 %542
        %545 = vset.pattern.permute.xlu0 1
        %546 = vperm.xlu0 %545, %v468
        %v547 = vpop.permute.xlu0 %546
        %549 = vset.pattern.permute.xlu0 1
        %550 = vperm.xlu0 %549, %v469
        %v551 = vpop.permute.xlu0 %550
        %553 = vset.pattern.permute.xlu0 1
        %554 = vperm.xlu0 %553, %v470
        %v555 = vpop.permute.xlu0 %554
        %557 = vset.pattern.permute.xlu0 1
        %558 = vperm.xlu0 %557, %v471
        %v559 = vpop.permute.xlu0 %558
        %561 = vset.pattern.permute.xlu0 1
        %562 = vperm.xlu0 %561, %v472
        %v563 = vpop.permute.xlu0 %562
        %565 = vset.pattern.permute.xlu0 1
        %566 = vperm.xlu0 %565, %v473
        %v567 = vpop.permute.xlu0 %566
        %v569 = vlaneseq
        %v570 = vshrl.u32 %v569, 7
        %v571 = vsub.s32 1, %v570
        %v572 = vrot.slane %v474, %v571
        %v573 = vsub.f32 %v539, %v572
        %v574 = vsub.f32 %v543, %v572
        %v575 = vsub.f32 %v547, %v572
        %v576 = vsub.f32 %v551, %v572
        %v577 = vsub.f32 %v555, %v572
        %v578 = vsub.f32 %v559, %v572
        %v579 = vsub.f32 %v563, %v572
        %v580 = vsub.f32 %v567, %v572
        %581 = vset.pattern.permute.xlu0 2
        %582 = vperm.xlu0 %581, %v466
        %v583 = vpop.permute.xlu0 %582
        %585 = vset.pattern.permute.xlu0 2
        %586 = vperm.xlu0 %585, %v467
        %v587 = vpop.permute.xlu0 %586
        %589 = vset.pattern.permute.xlu0 2
        %590 = vperm.xlu0 %589, %v468
        %v591 = vpop.permute.xlu0 %590
        %593 = vset.pattern.permute.xlu0 2
        %594 = vperm.xlu0 %593, %v469
        %v595 = vpop.permute.xlu0 %594
        %597 = vset.pattern.permute.xlu0 2
        %598 = vperm.xlu0 %597, %v470
        %v599 = vpop.permute.xlu0 %598
        %601 = vset.pattern.permute.xlu0 2
        %602 = vperm.xlu0 %601, %v471
        %v603 = vpop.permute.xlu0 %602
        %605 = vset.pattern.permute.xlu0 2
        %606 = vperm.xlu0 %605, %v472
        %v607 = vpop.permute.xlu0 %606
        %609 = vset.pattern.permute.xlu0 2
        %610 = vperm.xlu0 %609, %v473
        %v611 = vpop.permute.xlu0 %610
        %v613 = vlaneseq
        %v614 = vshrl.u32 %v613, 7
        %v615 = vsub.s32 2, %v614
        %v616 = vrot.slane %v474, %v615
        %v617 = vsub.f32 %v583, %v616
        %v618 = vsub.f32 %v587, %v616
        %v619 = vsub.f32 %v591, %v616
        %v620 = vsub.f32 %v595, %v616
        %v621 = vsub.f32 %v599, %v616
        %v622 = vsub.f32 %v603, %v616
        %v623 = vsub.f32 %v607, %v616
        %v624 = vsub.f32 %v611, %v616
        %v625 = vmul.f32 %v529, %v529
        %v626 = vmul.f32 %v530, %v530
        %v627 = vmul.f32 %v531, %v531
        %v628 = vmul.f32 %v532, %v532
        %v629 = vmul.f32 %v533, %v533
        %v630 = vmul.f32 %v534, %v534
        %v631 = vmul.f32 %v535, %v535
        %v632 = vmul.f32 %v536, %v536
        %v633 = vmul.f32 %v573, %v573
        %v634 = vmul.f32 %v574, %v574
        %v635 = vmul.f32 %v575, %v575
        %v636 = vmul.f32 %v576, %v576
        %v637 = vmul.f32 %v577, %v577
        %v638 = vmul.f32 %v578, %v578
        %v639 = vmul.f32 %v579, %v579
        %v640 = vmul.f32 %v580, %v580
        %v641 = vadd.f32 %v625, %v633
        %v642 = vadd.f32 %v626, %v634
        %v643 = vadd.f32 %v627, %v635
        %v644 = vadd.f32 %v628, %v636
        %v645 = vadd.f32 %v629, %v637
        %v646 = vadd.f32 %v630, %v638
        %v647 = vadd.f32 %v631, %v639
        %v648 = vadd.f32 %v632, %v640
        %v649 = vmul.f32 %v617, %v617
        %v650 = vmul.f32 %v618, %v618
        %v651 = vmul.f32 %v619, %v619
        %v652 = vmul.f32 %v620, %v620
        %v653 = vmul.f32 %v621, %v621
        %v654 = vmul.f32 %v622, %v622
        %v655 = vmul.f32 %v623, %v623
        %v656 = vmul.f32 %v624, %v624
        %v657 = vadd.f32 %v641, %v649
        %v658 = vadd.f32 %v642, %v650
        %v659 = vadd.f32 %v643, %v651
        %v660 = vadd.f32 %v644, %v652
        %v661 = vadd.f32 %v645, %v653
        %v662 = vadd.f32 %v646, %v654
        %v663 = vadd.f32 %v647, %v655
        %v664 = vadd.f32 %v648, %v656
        %v665 = vadd.f32 %v657, 1e-08
        %v666 = vadd.f32 %v658, 1e-08
        %v667 = vadd.f32 %v659, 1e-08
        %v668 = vadd.f32 %v660, 1e-08
        %v669 = vadd.f32 %v661, 1e-08
        %v670 = vadd.f32 %v662, 1e-08
        %v671 = vadd.f32 %v663, 1e-08
        %v672 = vadd.f32 %v664, 1e-08
        %v673 = vrcp.pop %v665
        %v674 = vmul.f32 1.0, %v673
        %v675 = vrcp.pop %v666
        %v676 = vmul.f32 1.0, %v675
        %v677 = vrcp.pop %v667
        %v678 = vmul.f32 1.0, %v677
        %v679 = vrcp.pop %v668
        %v680 = vmul.f32 1.0, %v679
        %v681 = vrcp.pop %v669
        %v682 = vmul.f32 1.0, %v681
        %v683 = vrcp.pop %v670
        %v684 = vmul.f32 1.0, %v683
        %v685 = vrcp.pop %v671
        %v686 = vmul.f32 1.0, %v685
        %v687 = vrcp.pop %v672
        %v688 = vmul.f32 1.0, %v687
        %v689 = vlaneseq
        %v690 = vand.u32 %v689, 127
        %v699 = vand.u32 %v657, 4294967280
        %v700 = vand.u32 %v658, 4294967280
        %v701 = vand.u32 %v659, 4294967280
        %v702 = vand.u32 %v660, 4294967280
        %v703 = vand.u32 %v661, 4294967280
        %v704 = vand.u32 %v662, 4294967280
        %v705 = vand.u32 %v663, 4294967280
        %v706 = vand.u32 %v664, 4294967280
        %v707 = vor.u32 %v699, %v690
        %v708 = vor.u32 %v700, %v690
        %v709 = vor.u32 %v701, %v690
        %v710 = vor.u32 %v702, %v690
        %v711 = vor.u32 %v703, %v690
        %v712 = vor.u32 %v704, %v690
        %v713 = vor.u32 %v705, %v690
        %v714 = vor.u32 %v706, %v690
        %vm715 = vcmask 130048
        %v716 = vsel %vm715, %v707, 2147483647
        %v717 = vand.u32 %v716, 65535
        %v718 = vshra.s32 %v716, 16
        %v719 = vcvt.s32.f32 %v717
        %v720 = vcvt.s32.f32 %v718
        %721 = vmin.xlane.f32.xlu0 %v720
        %v722 = vpop.xlane.xlu0 %721
        %vm723 = vcmp.eq.f32.partialorder %v720, %v722
        %v724 = vsel %vm723, %v719, inf
        %725 = vmin.xlane.f32.xlu0 %v724
        %v726 = vpop.xlane.xlu0 %725
        %v727 = vcvt.f32.s32 %v726
        %v728 = vcvt.f32.s32 %v722
        %v729 = vshll.u32 %v728, 16
        %v730 = vadd.s32 %v729, %v727
        %v731 = vsel %vm715, %v708, 2147483647
        %v732 = vand.u32 %v731, 65535
        %v733 = vshra.s32 %v731, 16
        %v734 = vcvt.s32.f32 %v732
        %v735 = vcvt.s32.f32 %v733
        %736 = vmin.xlane.f32.xlu0 %v735
        %v737 = vpop.xlane.xlu0 %736
        %vm738 = vcmp.eq.f32.partialorder %v735, %v737
        %v739 = vsel %vm738, %v734, inf
        %740 = vmin.xlane.f32.xlu0 %v739
        %v741 = vpop.xlane.xlu0 %740
        %v742 = vcvt.f32.s32 %v741
        %v743 = vcvt.f32.s32 %v737
        %v744 = vshll.u32 %v743, 16
        %v745 = vadd.s32 %v744, %v742
        %v746 = vsel %vm715, %v709, 2147483647
        %v747 = vand.u32 %v746, 65535
        %v748 = vshra.s32 %v746, 16
        %v749 = vcvt.s32.f32 %v747
        %v750 = vcvt.s32.f32 %v748
        %751 = vmin.xlane.f32.xlu0 %v750
        %v752 = vpop.xlane.xlu0 %751
        %vm753 = vcmp.eq.f32.partialorder %v750, %v752
        %v754 = vsel %vm753, %v749, inf
        %755 = vmin.xlane.f32.xlu0 %v754
        %v756 = vpop.xlane.xlu0 %755
        %v757 = vcvt.f32.s32 %v756
        %v758 = vcvt.f32.s32 %v752
        %v759 = vshll.u32 %v758, 16
        %v760 = vadd.s32 %v759, %v757
        %v761 = vsel %vm715, %v710, 2147483647
        %v762 = vand.u32 %v761, 65535
        %v763 = vshra.s32 %v761, 16
        %v764 = vcvt.s32.f32 %v762
        %v765 = vcvt.s32.f32 %v763
        %766 = vmin.xlane.f32.xlu0 %v765
        %v767 = vpop.xlane.xlu0 %766
        %vm768 = vcmp.eq.f32.partialorder %v765, %v767
        %v769 = vsel %vm768, %v764, inf
        %770 = vmin.xlane.f32.xlu0 %v769
        %v771 = vpop.xlane.xlu0 %770
        %v772 = vcvt.f32.s32 %v771
        %v773 = vcvt.f32.s32 %v767
        %v774 = vshll.u32 %v773, 16
        %v775 = vadd.s32 %v774, %v772
        %v776 = vsel %vm715, %v711, 2147483647
        %v777 = vand.u32 %v776, 65535
        %v778 = vshra.s32 %v776, 16
        %v779 = vcvt.s32.f32 %v777
        %v780 = vcvt.s32.f32 %v778
        %781 = vmin.xlane.f32.xlu0 %v780
        %v782 = vpop.xlane.xlu0 %781
        %vm783 = vcmp.eq.f32.partialorder %v780, %v782
        %v784 = vsel %vm783, %v779, inf
        %785 = vmin.xlane.f32.xlu0 %v784
        %v786 = vpop.xlane.xlu0 %785
        %v787 = vcvt.f32.s32 %v786
        %v788 = vcvt.f32.s32 %v782
        %v789 = vshll.u32 %v788, 16
        %v790 = vadd.s32 %v789, %v787
        %v791 = vsel %vm715, %v712, 2147483647
        %v792 = vand.u32 %v791, 65535
        %v793 = vshra.s32 %v791, 16
        %v794 = vcvt.s32.f32 %v792
        %v795 = vcvt.s32.f32 %v793
        %796 = vmin.xlane.f32.xlu0 %v795
        %v797 = vpop.xlane.xlu0 %796
        %vm798 = vcmp.eq.f32.partialorder %v795, %v797
        %v799 = vsel %vm798, %v794, inf
        %800 = vmin.xlane.f32.xlu0 %v799
        %v801 = vpop.xlane.xlu0 %800
        %v802 = vcvt.f32.s32 %v801
        %v803 = vcvt.f32.s32 %v797
        %v804 = vshll.u32 %v803, 16
        %v805 = vadd.s32 %v804, %v802
        %v806 = vsel %vm715, %v713, 2147483647
        %v807 = vand.u32 %v806, 65535
        %v808 = vshra.s32 %v806, 16
        %v809 = vcvt.s32.f32 %v807
        %v810 = vcvt.s32.f32 %v808
        %811 = vmin.xlane.f32.xlu0 %v810
        %v812 = vpop.xlane.xlu0 %811
        %vm813 = vcmp.eq.f32.partialorder %v810, %v812
        %v814 = vsel %vm813, %v809, inf
        %815 = vmin.xlane.f32.xlu0 %v814
        %v816 = vpop.xlane.xlu0 %815
        %v817 = vcvt.f32.s32 %v816
        %v818 = vcvt.f32.s32 %v812
        %v819 = vshll.u32 %v818, 16
        %v820 = vadd.s32 %v819, %v817
        %v821 = vsel %vm715, %v714, 2147483647
        %v822 = vand.u32 %v821, 65535
        %v823 = vshra.s32 %v821, 16
        %v824 = vcvt.s32.f32 %v822
        %v825 = vcvt.s32.f32 %v823
        %826 = vmin.xlane.f32.xlu0 %v825
        %v827 = vpop.xlane.xlu0 %826
        %vm828 = vcmp.eq.f32.partialorder %v825, %v827
        %v829 = vsel %vm828, %v824, inf
        %830 = vmin.xlane.f32.xlu0 %v829
        %v831 = vpop.xlane.xlu0 %830
        %v832 = vcvt.f32.s32 %v831
        %v833 = vcvt.f32.s32 %v827
        %v834 = vshll.u32 %v833, 16
        %v835 = vadd.s32 %v834, %v832
        %v836 = vand.u32 %v730, 15
        %v837 = vand.u32 %v745, 15
        %v838 = vand.u32 %v760, 15
        %v839 = vand.u32 %v775, 15
        %v840 = vand.u32 %v790, 15
        %v841 = vand.u32 %v805, 15
        %v842 = vand.u32 %v820, 15
        %v843 = vand.u32 %v835, 15
        %vm844 = vcmp.eq.s32.totalorder %v690, %v836
        %vm845 = vcmp.eq.s32.totalorder %v690, %v837
        %vm846 = vcmp.eq.s32.totalorder %v690, %v838
        %vm847 = vcmp.eq.s32.totalorder %v690, %v839
        %vm848 = vcmp.eq.s32.totalorder %v690, %v840
        %vm849 = vcmp.eq.s32.totalorder %v690, %v841
        %vm850 = vcmp.eq.s32.totalorder %v690, %v842
        %vm851 = vcmp.eq.s32.totalorder %v690, %v843
        %v852 = vsel %vm844, %v674, 0.0
        %v853 = vsel %vm845, %v676, 0.0
        %v854 = vsel %vm846, %v678, 0.0
        %v855 = vsel %vm847, %v680, 0.0
        %v856 = vsel %vm848, %v682, 0.0
        %v857 = vsel %vm849, %v684, 0.0
        %v858 = vsel %vm850, %v686, 0.0
        %v859 = vsel %vm851, %v688, 0.0
        %v860 = vadd.f32 %v852, 0.0
        %v861 = vadd.f32 %v853, 0.0
        %v862 = vadd.f32 %v854, 0.0
        %v863 = vadd.f32 %v855, 0.0
        %v864 = vadd.f32 %v856, 0.0
        %v865 = vadd.f32 %v857, 0.0
        %v866 = vadd.f32 %v858, 0.0
        %v867 = vadd.f32 %v859, 0.0
        %v868 = vsel %vm844, 2139095039, %v707
        %v869 = vsel %vm845, 2139095039, %v708
        %v870 = vsel %vm846, 2139095039, %v709
        %v871 = vsel %vm847, 2139095039, %v710
        %v872 = vsel %vm848, 2139095039, %v711
        %v873 = vsel %vm849, 2139095039, %v712
        %v874 = vsel %vm850, 2139095039, %v713
        %v875 = vsel %vm851, 2139095039, %v714
        %v876 = vsel %vm715, %v868, 2147483647
        %v877 = vand.u32 %v876, 65535
        %v878 = vshra.s32 %v876, 16
        %v879 = vcvt.s32.f32 %v877
        %v880 = vcvt.s32.f32 %v878
        %881 = vmin.xlane.f32.xlu0 %v880
        %v882 = vpop.xlane.xlu0 %881
        %vm883 = vcmp.eq.f32.partialorder %v880, %v882
        %v884 = vsel %vm883, %v879, inf
        %885 = vmin.xlane.f32.xlu0 %v884
        %v886 = vpop.xlane.xlu0 %885
        %v887 = vcvt.f32.s32 %v886
        %v888 = vcvt.f32.s32 %v882
        %v889 = vshll.u32 %v888, 16
        %v890 = vadd.s32 %v889, %v887
        %v891 = vsel %vm715, %v869, 2147483647
        %v892 = vand.u32 %v891, 65535
        %v893 = vshra.s32 %v891, 16
        %v894 = vcvt.s32.f32 %v892
        %v895 = vcvt.s32.f32 %v893
        %896 = vmin.xlane.f32.xlu0 %v895
        %v897 = vpop.xlane.xlu0 %896
        %vm898 = vcmp.eq.f32.partialorder %v895, %v897
        %v899 = vsel %vm898, %v894, inf
        %900 = vmin.xlane.f32.xlu0 %v899
        %v901 = vpop.xlane.xlu0 %900
        %v902 = vcvt.f32.s32 %v901
        %v903 = vcvt.f32.s32 %v897
        %v904 = vshll.u32 %v903, 16
        %v905 = vadd.s32 %v904, %v902
        %v906 = vsel %vm715, %v870, 2147483647
        %v907 = vand.u32 %v906, 65535
        %v908 = vshra.s32 %v906, 16
        %v909 = vcvt.s32.f32 %v907
        %v910 = vcvt.s32.f32 %v908
        %911 = vmin.xlane.f32.xlu0 %v910
        %v912 = vpop.xlane.xlu0 %911
        %vm913 = vcmp.eq.f32.partialorder %v910, %v912
        %v914 = vsel %vm913, %v909, inf
        %915 = vmin.xlane.f32.xlu0 %v914
        %v916 = vpop.xlane.xlu0 %915
        %v917 = vcvt.f32.s32 %v916
        %v918 = vcvt.f32.s32 %v912
        %v919 = vshll.u32 %v918, 16
        %v920 = vadd.s32 %v919, %v917
        %v921 = vsel %vm715, %v871, 2147483647
        %v922 = vand.u32 %v921, 65535
        %v923 = vshra.s32 %v921, 16
        %v924 = vcvt.s32.f32 %v922
        %v925 = vcvt.s32.f32 %v923
        %926 = vmin.xlane.f32.xlu0 %v925
        %v927 = vpop.xlane.xlu0 %926
        %vm928 = vcmp.eq.f32.partialorder %v925, %v927
        %v929 = vsel %vm928, %v924, inf
        %930 = vmin.xlane.f32.xlu0 %v929
        %v931 = vpop.xlane.xlu0 %930
        %v932 = vcvt.f32.s32 %v931
        %v933 = vcvt.f32.s32 %v927
        %v934 = vshll.u32 %v933, 16
        %v935 = vadd.s32 %v934, %v932
        %v936 = vsel %vm715, %v872, 2147483647
        %v937 = vand.u32 %v936, 65535
        %v938 = vshra.s32 %v936, 16
        %v939 = vcvt.s32.f32 %v937
        %v940 = vcvt.s32.f32 %v938
        %941 = vmin.xlane.f32.xlu0 %v940
        %v942 = vpop.xlane.xlu0 %941
        %vm943 = vcmp.eq.f32.partialorder %v940, %v942
        %v944 = vsel %vm943, %v939, inf
        %945 = vmin.xlane.f32.xlu0 %v944
        %v946 = vpop.xlane.xlu0 %945
        %v947 = vcvt.f32.s32 %v946
        %v948 = vcvt.f32.s32 %v942
        %v949 = vshll.u32 %v948, 16
        %v950 = vadd.s32 %v949, %v947
        %v951 = vsel %vm715, %v873, 2147483647
        %v952 = vand.u32 %v951, 65535
        %v953 = vshra.s32 %v951, 16
        %v954 = vcvt.s32.f32 %v952
        %v955 = vcvt.s32.f32 %v953
        %956 = vmin.xlane.f32.xlu0 %v955
        %v957 = vpop.xlane.xlu0 %956
        %vm958 = vcmp.eq.f32.partialorder %v955, %v957
        %v959 = vsel %vm958, %v954, inf
        %960 = vmin.xlane.f32.xlu0 %v959
        %v961 = vpop.xlane.xlu0 %960
        %v962 = vcvt.f32.s32 %v961
        %v963 = vcvt.f32.s32 %v957
        %v964 = vshll.u32 %v963, 16
        %v965 = vadd.s32 %v964, %v962
        %v966 = vsel %vm715, %v874, 2147483647
        %v967 = vand.u32 %v966, 65535
        %v968 = vshra.s32 %v966, 16
        %v969 = vcvt.s32.f32 %v967
        %v970 = vcvt.s32.f32 %v968
        %971 = vmin.xlane.f32.xlu0 %v970
        %v972 = vpop.xlane.xlu0 %971
        %vm973 = vcmp.eq.f32.partialorder %v970, %v972
        %v974 = vsel %vm973, %v969, inf
        %975 = vmin.xlane.f32.xlu0 %v974
        %v976 = vpop.xlane.xlu0 %975
        %v977 = vcvt.f32.s32 %v976
        %v978 = vcvt.f32.s32 %v972
        %v979 = vshll.u32 %v978, 16
        %v980 = vadd.s32 %v979, %v977
        %v981 = vsel %vm715, %v875, 2147483647
        %v982 = vand.u32 %v981, 65535
        %v983 = vshra.s32 %v981, 16
        %v984 = vcvt.s32.f32 %v982
        %v985 = vcvt.s32.f32 %v983
        %986 = vmin.xlane.f32.xlu0 %v985
        %v987 = vpop.xlane.xlu0 %986
        %vm988 = vcmp.eq.f32.partialorder %v985, %v987
        %v989 = vsel %vm988, %v984, inf
        %990 = vmin.xlane.f32.xlu0 %v989
        %v991 = vpop.xlane.xlu0 %990
        %v992 = vcvt.f32.s32 %v991
        %v993 = vcvt.f32.s32 %v987
        %v994 = vshll.u32 %v993, 16
        %v995 = vadd.s32 %v994, %v992
        %v996 = vand.u32 %v890, 15
        %v997 = vand.u32 %v905, 15
        %v998 = vand.u32 %v920, 15
        %v999 = vand.u32 %v935, 15
        %v1000 = vand.u32 %v950, 15
        %v1001 = vand.u32 %v965, 15
        %v1002 = vand.u32 %v980, 15
        %v1003 = vand.u32 %v995, 15
        %vm1004 = vcmp.eq.s32.totalorder %v690, %v996
        %vm1005 = vcmp.eq.s32.totalorder %v690, %v997
        %vm1006 = vcmp.eq.s32.totalorder %v690, %v998
        %vm1007 = vcmp.eq.s32.totalorder %v690, %v999
        %vm1008 = vcmp.eq.s32.totalorder %v690, %v1000
        %vm1009 = vcmp.eq.s32.totalorder %v690, %v1001
        %vm1010 = vcmp.eq.s32.totalorder %v690, %v1002
        %vm1011 = vcmp.eq.s32.totalorder %v690, %v1003
        %v1012 = vsel %vm1004, %v674, 0.0
        %v1013 = vsel %vm1005, %v676, 0.0
        %v1014 = vsel %vm1006, %v678, 0.0
        %v1015 = vsel %vm1007, %v680, 0.0
        %v1016 = vsel %vm1008, %v682, 0.0
        %v1017 = vsel %vm1009, %v684, 0.0
        %v1018 = vsel %vm1010, %v686, 0.0
        %v1019 = vsel %vm1011, %v688, 0.0
        %v1020 = vadd.f32 %v860, %v1012
        %v1021 = vadd.f32 %v861, %v1013
        %v1022 = vadd.f32 %v862, %v1014
        %v1023 = vadd.f32 %v863, %v1015
        %v1024 = vadd.f32 %v864, %v1016
        %v1025 = vadd.f32 %v865, %v1017
        %v1026 = vadd.f32 %v866, %v1018
        %v1027 = vadd.f32 %v867, %v1019
        %v1028 = vsel %vm1004, 2139095039, %v868
        %v1029 = vsel %vm1005, 2139095039, %v869
        %v1030 = vsel %vm1006, 2139095039, %v870
        %v1031 = vsel %vm1007, 2139095039, %v871
        %v1032 = vsel %vm1008, 2139095039, %v872
        %v1033 = vsel %vm1009, 2139095039, %v873
        %v1034 = vsel %vm1010, 2139095039, %v874
        %v1035 = vsel %vm1011, 2139095039, %v875
        %v1036 = vsel %vm715, %v1028, 2147483647
        %v1037 = vand.u32 %v1036, 65535
        %v1038 = vshra.s32 %v1036, 16
        %v1039 = vcvt.s32.f32 %v1037
        %v1040 = vcvt.s32.f32 %v1038
        %1041 = vmin.xlane.f32.xlu0 %v1040
        %v1042 = vpop.xlane.xlu0 %1041
        %vm1043 = vcmp.eq.f32.partialorder %v1040, %v1042
        %v1044 = vsel %vm1043, %v1039, inf
        %1045 = vmin.xlane.f32.xlu0 %v1044
        %v1046 = vpop.xlane.xlu0 %1045
        %v1047 = vcvt.f32.s32 %v1046
        %v1048 = vcvt.f32.s32 %v1042
        %v1049 = vshll.u32 %v1048, 16
        %v1050 = vadd.s32 %v1049, %v1047
        %v1051 = vsel %vm715, %v1029, 2147483647
        %v1052 = vand.u32 %v1051, 65535
        %v1053 = vshra.s32 %v1051, 16
        %v1054 = vcvt.s32.f32 %v1052
        %v1055 = vcvt.s32.f32 %v1053
        %1056 = vmin.xlane.f32.xlu0 %v1055
        %v1057 = vpop.xlane.xlu0 %1056
        %vm1058 = vcmp.eq.f32.partialorder %v1055, %v1057
        %v1059 = vsel %vm1058, %v1054, inf
        %1060 = vmin.xlane.f32.xlu0 %v1059
        %v1061 = vpop.xlane.xlu0 %1060
        %v1062 = vcvt.f32.s32 %v1061
        %v1063 = vcvt.f32.s32 %v1057
        %v1064 = vshll.u32 %v1063, 16
        %v1065 = vadd.s32 %v1064, %v1062
        %v1066 = vsel %vm715, %v1030, 2147483647
        %v1067 = vand.u32 %v1066, 65535
        %v1068 = vshra.s32 %v1066, 16
        %v1069 = vcvt.s32.f32 %v1067
        %v1070 = vcvt.s32.f32 %v1068
        %1071 = vmin.xlane.f32.xlu0 %v1070
        %v1072 = vpop.xlane.xlu0 %1071
        %vm1073 = vcmp.eq.f32.partialorder %v1070, %v1072
        %v1074 = vsel %vm1073, %v1069, inf
        %1075 = vmin.xlane.f32.xlu0 %v1074
        %v1076 = vpop.xlane.xlu0 %1075
        %v1077 = vcvt.f32.s32 %v1076
        %v1078 = vcvt.f32.s32 %v1072
        %v1079 = vshll.u32 %v1078, 16
        %v1080 = vadd.s32 %v1079, %v1077
        %v1081 = vsel %vm715, %v1031, 2147483647
        %v1082 = vand.u32 %v1081, 65535
        %v1083 = vshra.s32 %v1081, 16
        %v1084 = vcvt.s32.f32 %v1082
        %v1085 = vcvt.s32.f32 %v1083
        %1086 = vmin.xlane.f32.xlu0 %v1085
        %v1087 = vpop.xlane.xlu0 %1086
        %vm1088 = vcmp.eq.f32.partialorder %v1085, %v1087
        %v1089 = vsel %vm1088, %v1084, inf
        %1090 = vmin.xlane.f32.xlu0 %v1089
        %v1091 = vpop.xlane.xlu0 %1090
        %v1092 = vcvt.f32.s32 %v1091
        %v1093 = vcvt.f32.s32 %v1087
        %v1094 = vshll.u32 %v1093, 16
        %v1095 = vadd.s32 %v1094, %v1092
        %v1096 = vsel %vm715, %v1032, 2147483647
        %v1097 = vand.u32 %v1096, 65535
        %v1098 = vshra.s32 %v1096, 16
        %v1099 = vcvt.s32.f32 %v1097
        %v1100 = vcvt.s32.f32 %v1098
        %1101 = vmin.xlane.f32.xlu0 %v1100
        %v1102 = vpop.xlane.xlu0 %1101
        %vm1103 = vcmp.eq.f32.partialorder %v1100, %v1102
        %v1104 = vsel %vm1103, %v1099, inf
        %1105 = vmin.xlane.f32.xlu0 %v1104
        %v1106 = vpop.xlane.xlu0 %1105
        %v1107 = vcvt.f32.s32 %v1106
        %v1108 = vcvt.f32.s32 %v1102
        %v1109 = vshll.u32 %v1108, 16
        %v1110 = vadd.s32 %v1109, %v1107
        %v1111 = vsel %vm715, %v1033, 2147483647
        %v1112 = vand.u32 %v1111, 65535
        %v1113 = vshra.s32 %v1111, 16
        %v1114 = vcvt.s32.f32 %v1112
        %v1115 = vcvt.s32.f32 %v1113
        %1116 = vmin.xlane.f32.xlu0 %v1115
        %v1117 = vpop.xlane.xlu0 %1116
        %vm1118 = vcmp.eq.f32.partialorder %v1115, %v1117
        %v1119 = vsel %vm1118, %v1114, inf
        %1120 = vmin.xlane.f32.xlu0 %v1119
        %v1121 = vpop.xlane.xlu0 %1120
        %v1122 = vcvt.f32.s32 %v1121
        %v1123 = vcvt.f32.s32 %v1117
        %v1124 = vshll.u32 %v1123, 16
        %v1125 = vadd.s32 %v1124, %v1122
        %v1126 = vsel %vm715, %v1034, 2147483647
        %v1127 = vand.u32 %v1126, 65535
        %v1128 = vshra.s32 %v1126, 16
        %v1129 = vcvt.s32.f32 %v1127
        %v1130 = vcvt.s32.f32 %v1128
        %1131 = vmin.xlane.f32.xlu0 %v1130
        %v1132 = vpop.xlane.xlu0 %1131
        %vm1133 = vcmp.eq.f32.partialorder %v1130, %v1132
        %v1134 = vsel %vm1133, %v1129, inf
        %1135 = vmin.xlane.f32.xlu0 %v1134
        %v1136 = vpop.xlane.xlu0 %1135
        %v1137 = vcvt.f32.s32 %v1136
        %v1138 = vcvt.f32.s32 %v1132
        %v1139 = vshll.u32 %v1138, 16
        %v1140 = vadd.s32 %v1139, %v1137
        %v1141 = vsel %vm715, %v1035, 2147483647
        %v1142 = vand.u32 %v1141, 65535
        %v1143 = vshra.s32 %v1141, 16
        %v1144 = vcvt.s32.f32 %v1142
        %v1145 = vcvt.s32.f32 %v1143
        %1146 = vmin.xlane.f32.xlu0 %v1145
        %v1147 = vpop.xlane.xlu0 %1146
        %vm1148 = vcmp.eq.f32.partialorder %v1145, %v1147
        %v1149 = vsel %vm1148, %v1144, inf
        %1150 = vmin.xlane.f32.xlu0 %v1149
        %v1151 = vpop.xlane.xlu0 %1150
        %v1152 = vcvt.f32.s32 %v1151
        %v1153 = vcvt.f32.s32 %v1147
        %v1154 = vshll.u32 %v1153, 16
        %v1155 = vadd.s32 %v1154, %v1152
        %v1156 = vand.u32 %v1050, 15
        %v1157 = vand.u32 %v1065, 15
        %v1158 = vand.u32 %v1080, 15
        %v1159 = vand.u32 %v1095, 15
        %v1160 = vand.u32 %v1110, 15
        %v1161 = vand.u32 %v1125, 15
        %v1162 = vand.u32 %v1140, 15
        %v1163 = vand.u32 %v1155, 15
        %vm1164 = vcmp.eq.s32.totalorder %v690, %v1156
        %vm1165 = vcmp.eq.s32.totalorder %v690, %v1157
        %vm1166 = vcmp.eq.s32.totalorder %v690, %v1158
        %vm1167 = vcmp.eq.s32.totalorder %v690, %v1159
        %vm1168 = vcmp.eq.s32.totalorder %v690, %v1160
        %vm1169 = vcmp.eq.s32.totalorder %v690, %v1161
        %vm1170 = vcmp.eq.s32.totalorder %v690, %v1162
        %vm1171 = vcmp.eq.s32.totalorder %v690, %v1163
        %v1172 = vsel %vm1164, %v674, 0.0
        %v1173 = vsel %vm1165, %v676, 0.0
        %v1174 = vsel %vm1166, %v678, 0.0
        %v1175 = vsel %vm1167, %v680, 0.0
        %v1176 = vsel %vm1168, %v682, 0.0
        %v1177 = vsel %vm1169, %v684, 0.0
        %v1178 = vsel %vm1170, %v686, 0.0
        %v1179 = vsel %vm1171, %v688, 0.0
        %v1180 = vadd.f32 %v1020, %v1172
        %v1181 = vadd.f32 %v1021, %v1173
        %v1182 = vadd.f32 %v1022, %v1174
        %v1183 = vadd.f32 %v1023, %v1175
        %v1184 = vadd.f32 %v1024, %v1176
        %v1185 = vadd.f32 %v1025, %v1177
        %v1186 = vadd.f32 %v1026, %v1178
        %v1187 = vadd.f32 %v1027, %v1179
        %v1188 = vsel %vm715, %v1180, 0.0
        %1189 = vadd.xlane.f32.xlu0 %v1188
        %v1190 = vpop.xlane.xlu0 %1189
        %v1191 = vsel %vm715, %v1181, 0.0
        %1192 = vadd.xlane.f32.xlu0 %v1191
        %v1193 = vpop.xlane.xlu0 %1192
        %v1194 = vsel %vm715, %v1182, 0.0
        %1195 = vadd.xlane.f32.xlu0 %v1194
        %v1196 = vpop.xlane.xlu0 %1195
        %v1197 = vsel %vm715, %v1183, 0.0
        %1198 = vadd.xlane.f32.xlu0 %v1197
        %v1199 = vpop.xlane.xlu0 %1198
        %v1200 = vsel %vm715, %v1184, 0.0
        %1201 = vadd.xlane.f32.xlu0 %v1200
        %v1202 = vpop.xlane.xlu0 %1201
        %v1203 = vsel %vm715, %v1185, 0.0
        %1204 = vadd.xlane.f32.xlu0 %v1203
        %v1205 = vpop.xlane.xlu0 %1204
        %v1206 = vsel %vm715, %v1186, 0.0
        %1207 = vadd.xlane.f32.xlu0 %v1206
        %v1208 = vpop.xlane.xlu0 %1207
        %v1209 = vsel %vm715, %v1187, 0.0
        %1210 = vadd.xlane.f32.xlu0 %v1209
        %v1211 = vpop.xlane.xlu0 %1210
        %v1212 = vpack.c.bf16 %v1181, %v1180
        %v1213 = vpack.c.bf16 %v1183, %v1182
        %v1214 = vpack.c.bf16 %v1185, %v1184
        %v1215 = vpack.c.bf16 %v1187, %v1186
        %v1218 = vunpack.c.l.b16 %v483
        %v1219 = vunpack.c.l.b16 %v484
        %v1220 = vpack.c.b16 %v1219, %v1218
        %v1223 = vsel %vm715, %v1212, 0
        %v1226 = vsel %vm715, %v1213, 0
        %v1229 = vsel %vm715, %v1214, 0
        %v1232 = vsel %vm715, %v1215, 0
        %1234 = vmatprep.subr.bf16.mxu0 0
        %1235 = vmatpush1.bf16.msra.mxu0 0
        %1236 = vmatprep.subr.bf16.mxu0 0
        %1237 = vmatpush1.bf16.msra.mxu0 0
        %1238 = vmatprep.subr.bf16.mxu0 0
        %1239 = vmatpush1.bf16.msra.mxu0 0
        %1240 = vmatprep.subr.bf16.mxu0 0
        %1241 = vmatpush1.bf16.msra.mxu0 0
        %1242 = vmatprep.subr.bf16.mxu0 0
        %1243 = vmatpush1.bf16.msra.mxu0 0
        %1244 = vmatprep.subr.bf16.mxu0 0
        %1245 = vmatpush1.bf16.msra.mxu0 0
        %1246 = vmatprep.subr.bf16.mxu0 0
        %1247 = vmatpush1.bf16.msra.mxu0 0
        %1248 = vmatprep.subr.bf16.mxu0 0
        %1249 = vmatpush1.bf16.msra.mxu0 %v1220
        %1250 = vmatprep.subr.bf16.mxu0 0
        %1251 = vmatpush2.bf16.msra.mxu0 0
        %1252 = vmatprep.subr.bf16.mxu0 0
        %1253 = vmatpush2.bf16.msra.mxu0 0
        %1254 = vmatprep.subr.bf16.mxu0 0
        %1255 = vmatpush2.bf16.msra.mxu0 0
        %1256 = vmatprep.subr.bf16.mxu0 0
        %1257 = vmatpush2.bf16.msra.mxu0 0
        %1258 = vmatprep.subr.bf16.mxu0 0
        %1259 = vmatpush2.bf16.msra.mxu0 0
        %1260 = vmatprep.subr.bf16.mxu0 0
        %1261 = vmatpush2.bf16.msra.mxu0 0
        %1262 = vmatprep.subr.bf16.mxu0 0
        %1263 = vmatpush2.bf16.msra.mxu0 0
        %1264 = vmatprep.subr.bf16.mxu0 0
        %1265 = vmatpush2.bf16.msra.mxu0 0
        %1266 = vmatprep.mubr.bf16.mxu0 0
        %1267 = vmatmul.mubr.bf16.gmra.mxu0 %v1223
        %v1268 = vpop.f32.mrf.mxu0
        %v1269 = vadd.f32 0.0, %v1268
        %v1270 = vpop.f32.mrf.mxu0
        %v1271 = vpop.f32.mrf.mxu0
        %v1272 = vadd.f32 0.0, %v1271
        %v1273 = vpop.f32.mrf.mxu0
        %1274 = vmatprep.mubr.bf16.mxu0 0
        %1275 = vmatmul.mubr.bf16.gmra.mxu0 %v1226
        %v1276 = vpop.f32.mrf.mxu0
        %v1277 = vadd.f32 0.0, %v1276
        %v1278 = vpop.f32.mrf.mxu0
        %v1279 = vpop.f32.mrf.mxu0
        %v1280 = vadd.f32 0.0, %v1279
        %v1281 = vpop.f32.mrf.mxu0
        %1282 = vmatprep.mubr.bf16.mxu0 0
        %1283 = vmatmul.mubr.bf16.gmra.mxu0 %v1229
        %v1284 = vpop.f32.mrf.mxu0
        %v1285 = vadd.f32 0.0, %v1284
        %v1286 = vpop.f32.mrf.mxu0
        %v1287 = vpop.f32.mrf.mxu0
        %v1288 = vadd.f32 0.0, %v1287
        %v1289 = vpop.f32.mrf.mxu0
        %1290 = vmatprep.mubr.bf16.mxu0 0
        %1291 = vmatmul.mubr.bf16.gmra.mxu0 %v1232
        %v1292 = vpop.f32.mrf.mxu0
        %v1293 = vadd.f32 0.0, %v1292
        %v1294 = vpop.f32.mrf.mxu0
        %v1295 = vpop.f32.mrf.mxu0
        %v1296 = vadd.f32 0.0, %v1295
        %v1297 = vpop.f32.mrf.mxu0
        %1298 = vdwg.mxu0
        %v1299 = vrcp.pop %v1190
        %v1300 = vrcp.pop %v1193
        %v1301 = vrcp.pop %v1196
        %v1302 = vrcp.pop %v1199
        %v1303 = vrcp.pop %v1202
        %v1304 = vrcp.pop %v1205
        %v1305 = vrcp.pop %v1208
        %v1306 = vrcp.pop %v1211
        %v1307 = vmul.f32 %v1269, %v1299
        %v1308 = vmul.f32 %v1272, %v1300
        %v1309 = vmul.f32 %v1277, %v1301
        %v1310 = vmul.f32 %v1280, %v1302
        %v1311 = vmul.f32 %v1285, %v1303
        %v1312 = vmul.f32 %v1288, %v1304
        %v1313 = vmul.f32 %v1293, %v1305
        %v1314 = vmul.f32 %v1296, %v1306
        %v1315 = vld [vmem:[%s4] sm:$0xf]
        %v1316 = vld [vmem:[%s4 + $0x4] sm:$0xf]
        %v1317 = vld [vmem:[%s4 + $0x8] sm:$0xf]
        %v1318 = vld [vmem:[%s4 + $0xc] sm:$0xf]
        %v1319 = vld [vmem:[%s4 + $0x10] sm:$0xf]
        %v1320 = vld [vmem:[%s4 + $0x14] sm:$0xf]
        %v1321 = vld [vmem:[%s4 + $0x18] sm:$0xf]
        %v1322 = vld [vmem:[%s4 + $0x1c] sm:$0xf]
        %v1323 = vld [vmem:[%s4 + $0x20] sm:$0xf]
        %v1324 = vld [vmem:[%s4 + $0x24] sm:$0xf]
        %v1325 = vld [vmem:[%s4 + $0x28] sm:$0xf]
        %v1326 = vld [vmem:[%s4 + $0x2c] sm:$0xf]
        %v1327 = vld [vmem:[%s4 + $0x30] sm:$0xf]
        %v1328 = vld [vmem:[%s4 + $0x34] sm:$0xf]
        %v1329 = vld [vmem:[%s4 + $0x38] sm:$0xf]
        %v1330 = vld [vmem:[%s4 + $0x3c] sm:$0xf]
        %v1331 = vpack.c.bf16 %v1308, %v1307
        %v1332 = vpack.c.bf16 %v1310, %v1309
        %v1333 = vpack.c.bf16 %v1312, %v1311
        %v1334 = vpack.c.bf16 %v1314, %v1313
        %v1335 = vld [vmem:[#allocation2] sm:$0xf]
        %v1336 = vld [vmem:[#allocation2 + $0x4] sm:$0xf]
        %v1337 = vld [vmem:[#allocation2 + $0x8] sm:$0xf]
        %v1338 = vld [vmem:[#allocation2 + $0xc] sm:$0xf]
        %v1339 = vld [vmem:[#allocation2 + $0x10] sm:$0xf]
        %v1340 = vld [vmem:[#allocation2 + $0x14] sm:$0xf]
        %v1341 = vld [vmem:[#allocation2 + $0x18] sm:$0xf]
        %v1342 = vld [vmem:[#allocation2 + $0x1c] sm:$0xf]
        %v1343 = vld [vmem:[#allocation2 + $0x20] sm:$0xf]
        %v1344 = vld [vmem:[#allocation2 + $0x24] sm:$0xf]
        %v1345 = vld [vmem:[#allocation2 + $0x28] sm:$0xf]
        %v1346 = vld [vmem:[#allocation2 + $0x2c] sm:$0xf]
        %v1347 = vld [vmem:[#allocation2 + $0x30] sm:$0xf]
        %v1348 = vld [vmem:[#allocation2 + $0x34] sm:$0xf]
        %v1349 = vld [vmem:[#allocation2 + $0x38] sm:$0xf]
        %v1350 = vld [vmem:[#allocation2 + $0x3c] sm:$0xf]
        %v1367 = vunpack.c.l.b16 %v1335
        %v1368 = vunpack.c.l.b16 %v1336
        %v1369 = vunpack.c.l.b16 %v1337
        %v1370 = vunpack.c.l.b16 %v1338
        %v1371 = vunpack.c.l.b16 %v1339
        %v1372 = vunpack.c.l.b16 %v1340
        %v1373 = vunpack.c.l.b16 %v1341
        %v1374 = vunpack.c.l.b16 %v1342
        %v1375 = vunpack.c.l.b16 %v1343
        %v1376 = vunpack.c.l.b16 %v1344
        %v1377 = vunpack.c.l.b16 %v1345
        %v1378 = vunpack.c.l.b16 %v1346
        %v1379 = vunpack.c.l.b16 %v1347
        %v1380 = vunpack.c.l.b16 %v1348
        %v1381 = vunpack.c.l.b16 %v1349
        %v1382 = vunpack.c.l.b16 %v1350
        %v1383 = vpack.c.b16 %v1368, %v1367
        %v1384 = vpack.c.b16 %v1370, %v1369
        %v1385 = vpack.c.b16 %v1372, %v1371
        %v1386 = vpack.c.b16 %v1374, %v1373
        %v1387 = vpack.c.b16 %v1376, %v1375
        %v1388 = vpack.c.b16 %v1378, %v1377
        %v1389 = vpack.c.b16 %v1380, %v1379
        %v1390 = vpack.c.b16 %v1382, %v1381
        %1399 = vmatprep.subr.bf16.mxu0 0
        %1400 = vmatpush1.bf16.msra.mxu0 %v1390
        %1401 = vmatprep.subr.bf16.mxu0 0
        %1402 = vmatpush1.bf16.msra.mxu0 %v1389
        %1403 = vmatprep.subr.bf16.mxu0 0
        %1404 = vmatpush1.bf16.msra.mxu0 %v1388
        %1405 = vmatprep.subr.bf16.mxu0 0
        %1406 = vmatpush1.bf16.msra.mxu0 %v1387
        %1407 = vmatprep.subr.bf16.mxu0 0
        %1408 = vmatpush1.bf16.msra.mxu0 %v1386
        %1409 = vmatprep.subr.bf16.mxu0 0
        %1410 = vmatpush1.bf16.msra.mxu0 %v1385
        %1411 = vmatprep.subr.bf16.mxu0 0
        %1412 = vmatpush1.bf16.msra.mxu0 %v1384
        %1413 = vmatprep.subr.bf16.mxu0 0
        %1414 = vmatpush1.bf16.msra.mxu0 %v1383
        %1415 = vmatprep.subr.bf16.mxu0 0
        %1416 = vmatpush2.bf16.msra.mxu0 0
        %1417 = vmatprep.subr.bf16.mxu0 0
        %1418 = vmatpush2.bf16.msra.mxu0 0
        %1419 = vmatprep.subr.bf16.mxu0 0
        %1420 = vmatpush2.bf16.msra.mxu0 0
        %1421 = vmatprep.subr.bf16.mxu0 0
        %1422 = vmatpush2.bf16.msra.mxu0 0
        %1423 = vmatprep.subr.bf16.mxu0 0
        %1424 = vmatpush2.bf16.msra.mxu0 0
        %1425 = vmatprep.subr.bf16.mxu0 0
        %1426 = vmatpush2.bf16.msra.mxu0 0
        %1427 = vmatprep.subr.bf16.mxu0 0
        %1428 = vmatpush2.bf16.msra.mxu0 0
        %1429 = vmatprep.subr.bf16.mxu0 0
        %1430 = vmatpush2.bf16.msra.mxu0 0
        %1431 = vmatprep.mubr.bf16.mxu0 0
        %1432 = vmatmul.mubr.bf16.gmra.mxu0 %v1331
        %v1433 = vpop.f32.mrf.mxu0
        %v1434 = vadd.f32 0.0, %v1433
        %v1435 = vpop.f32.mrf.mxu0
        %v1436 = vpop.f32.mrf.mxu0
        %v1437 = vadd.f32 0.0, %v1436
        %v1438 = vpop.f32.mrf.mxu0
        %1439 = vmatprep.mubr.bf16.mxu0 0
        %1440 = vmatmul.mubr.bf16.gmra.mxu0 %v1332
        %v1441 = vpop.f32.mrf.mxu0
        %v1442 = vadd.f32 0.0, %v1441
        %v1443 = vpop.f32.mrf.mxu0
        %v1444 = vpop.f32.mrf.mxu0
        %v1445 = vadd.f32 0.0, %v1444
        %v1446 = vpop.f32.mrf.mxu0
        %1447 = vmatprep.mubr.bf16.mxu0 0
        %1448 = vmatmul.mubr.bf16.gmra.mxu0 %v1333
        %v1449 = vpop.f32.mrf.mxu0
        %v1450 = vadd.f32 0.0, %v1449
        %v1451 = vpop.f32.mrf.mxu0
        %v1452 = vpop.f32.mrf.mxu0
        %v1453 = vadd.f32 0.0, %v1452
        %v1454 = vpop.f32.mrf.mxu0
        %1455 = vmatprep.mubr.bf16.mxu0 0
        %1456 = vmatmul.mubr.bf16.gmra.mxu0 %v1334
        %v1457 = vpop.f32.mrf.mxu0
        %v1458 = vadd.f32 0.0, %v1457
        %v1459 = vpop.f32.mrf.mxu0
        %v1460 = vpop.f32.mrf.mxu0
        %v1461 = vadd.f32 0.0, %v1460
        %v1462 = vpop.f32.mrf.mxu0
        %1463 = vdwg.mxu0
        %v1472 = vunpack.c.l.b16 %v475
        %v1473 = vunpack.c.l.b16 %v476
        %v1474 = vunpack.c.l.b16 %v477
        %v1475 = vunpack.c.l.b16 %v478
        %v1476 = vunpack.c.l.b16 %v479
        %v1477 = vunpack.c.l.b16 %v480
        %v1478 = vunpack.c.l.b16 %v481
        %v1479 = vunpack.c.l.b16 %v482
        %v1480 = vpack.c.b16 %v1473, %v1472
        %v1481 = vpack.c.b16 %v1475, %v1474
        %v1482 = vpack.c.b16 %v1477, %v1476
        %v1483 = vpack.c.b16 %v1479, %v1478
        %v1504 = vunpack.c.l.b16 %v1315
        %v1505 = vunpack.c.l.b16 %v1316
        %v1506 = vunpack.c.l.b16 %v1317
        %v1507 = vunpack.c.l.b16 %v1318
        %v1508 = vunpack.c.l.b16 %v1319
        %v1509 = vunpack.c.l.b16 %v1320
        %v1510 = vunpack.c.l.b16 %v1321
        %v1511 = vunpack.c.l.b16 %v1322
        %v1512 = vunpack.c.l.b16 %v1323
        %v1513 = vunpack.c.l.b16 %v1324
        %v1514 = vunpack.c.l.b16 %v1325
        %v1515 = vunpack.c.l.b16 %v1326
        %v1516 = vunpack.c.l.b16 %v1327
        %v1517 = vunpack.c.l.b16 %v1328
        %v1518 = vunpack.c.l.b16 %v1329
        %v1519 = vunpack.c.l.b16 %v1330
        %v1520 = vpack.c.b16 %v1505, %v1504
        %v1521 = vpack.c.b16 %v1507, %v1506
        %v1522 = vpack.c.b16 %v1509, %v1508
        %v1523 = vpack.c.b16 %v1511, %v1510
        %v1524 = vpack.c.b16 %v1513, %v1512
        %v1525 = vpack.c.b16 %v1515, %v1514
        %v1526 = vpack.c.b16 %v1517, %v1516
        %v1527 = vpack.c.b16 %v1519, %v1518
        %1536 = vmatprep.subr.bf16.mxu0 0
        %1537 = vmatpush1.bf16.msra.mxu0 %v1527
        %1538 = vmatprep.subr.bf16.mxu0 0
        %1539 = vmatpush1.bf16.msra.mxu0 %v1526
        %1540 = vmatprep.subr.bf16.mxu0 0
        %1541 = vmatpush1.bf16.msra.mxu0 %v1525
        %1542 = vmatprep.subr.bf16.mxu0 0
        %1543 = vmatpush1.bf16.msra.mxu0 %v1524
        %1544 = vmatprep.subr.bf16.mxu0 0
        %1545 = vmatpush1.bf16.msra.mxu0 %v1523
        %1546 = vmatprep.subr.bf16.mxu0 0
        %1547 = vmatpush1.bf16.msra.mxu0 %v1522
        %1548 = vmatprep.subr.bf16.mxu0 0
        %1549 = vmatpush1.bf16.msra.mxu0 %v1521
        %1550 = vmatprep.subr.bf16.mxu0 0
        %1551 = vmatpush1.bf16.msra.mxu0 %v1520
        %1552 = vmatprep.subr.bf16.mxu0 0
        %1553 = vmatpush2.bf16.msra.mxu0 0
        %1554 = vmatprep.subr.bf16.mxu0 0
        %1555 = vmatpush2.bf16.msra.mxu0 0
        %1556 = vmatprep.subr.bf16.mxu0 0
        %1557 = vmatpush2.bf16.msra.mxu0 0
        %1558 = vmatprep.subr.bf16.mxu0 0
        %1559 = vmatpush2.bf16.msra.mxu0 0
        %1560 = vmatprep.subr.bf16.mxu0 0
        %1561 = vmatpush2.bf16.msra.mxu0 0
        %1562 = vmatprep.subr.bf16.mxu0 0
        %1563 = vmatpush2.bf16.msra.mxu0 0
        %1564 = vmatprep.subr.bf16.mxu0 0
        %1565 = vmatpush2.bf16.msra.mxu0 0
        %1566 = vmatprep.subr.bf16.mxu0 0
        %1567 = vmatpush2.bf16.msra.mxu0 0
        %1568 = vmatprep.mubr.bf16.mxu0 0
        %1569 = vmatmul.mubr.bf16.gmra.mxu0 %v1480
        %v1570 = vpop.f32.mrf.mxu0
        %v1571 = vadd.f32 %v1434, %v1570
        %v1572 = vpop.f32.mrf.mxu0
        %v1573 = vpop.f32.mrf.mxu0
        %v1574 = vadd.f32 %v1437, %v1573
        %v1575 = vpop.f32.mrf.mxu0
        %1576 = vmatprep.mubr.bf16.mxu0 0
        %1577 = vmatmul.mubr.bf16.gmra.mxu0 %v1481
        %v1578 = vpop.f32.mrf.mxu0
        %v1579 = vadd.f32 %v1442, %v1578
        %v1580 = vpop.f32.mrf.mxu0
        %v1581 = vpop.f32.mrf.mxu0
        %v1582 = vadd.f32 %v1445, %v1581
        %v1583 = vpop.f32.mrf.mxu0
        %1584 = vmatprep.mubr.bf16.mxu0 0
        %1585 = vmatmul.mubr.bf16.gmra.mxu0 %v1482
        %v1586 = vpop.f32.mrf.mxu0
        %v1587 = vadd.f32 %v1450, %v1586
        %v1588 = vpop.f32.mrf.mxu0
        %v1589 = vpop.f32.mrf.mxu0
        %v1590 = vadd.f32 %v1453, %v1589
        %v1591 = vpop.f32.mrf.mxu0
        %1592 = vmatprep.mubr.bf16.mxu0 0
        %1593 = vmatmul.mubr.bf16.gmra.mxu0 %v1483
        %v1594 = vpop.f32.mrf.mxu0
        %v1595 = vadd.f32 %v1458, %v1594
        %v1596 = vpop.f32.mrf.mxu0
        %v1597 = vpop.f32.mrf.mxu0
        %v1598 = vadd.f32 %v1461, %v1597
        %v1599 = vpop.f32.mrf.mxu0
        %1600 = vdwg.mxu0
        %v1601 = vld [vmem:[%s6] sm:$0x1]
        %v1602 = vlaneseq
        %v1603 = vshrl.u32 %v1602, 7
        %v1604 = vsub.s32 0, %v1603
        %v1605 = vrot.slane %v1601, %v1604
        %v1606 = vadd.f32 %v1571, %v1605
        %v1607 = vadd.f32 %v1574, %v1605
        %v1608 = vadd.f32 %v1579, %v1605
        %v1609 = vadd.f32 %v1582, %v1605
        %v1610 = vadd.f32 %v1587, %v1605
        %v1611 = vadd.f32 %v1590, %v1605
        %v1612 = vadd.f32 %v1595, %v1605
        %v1613 = vadd.f32 %v1598, %v1605
        %vm1614 = vcmp.gt.f32.partialorder %v1606, 0.0
        %vm1615 = vcmp.gt.f32.partialorder %v1607, 0.0
        %vm1616 = vcmp.gt.f32.partialorder %v1608, 0.0
        %vm1617 = vcmp.gt.f32.partialorder %v1609, 0.0
        %vm1618 = vcmp.gt.f32.partialorder %v1610, 0.0
        %vm1619 = vcmp.gt.f32.partialorder %v1611, 0.0
        %vm1620 = vcmp.gt.f32.partialorder %v1612, 0.0
        %vm1621 = vcmp.gt.f32.partialorder %v1613, 0.0
        %v1622 = vld [vmem:[%s6 + $0x1] sm:$0x1]
        %v1623 = vlaneseq
        %v1624 = vshrl.u32 %v1623, 7
        %v1625 = vsub.s32 0, %v1624
        %v1626 = vrot.slane %v1622, %v1625
        %v1627 = vmul.f32 %v1606, %v1626
        %v1628 = vmul.f32 %v1607, %v1626
        %v1629 = vmul.f32 %v1608, %v1626
        %v1630 = vmul.f32 %v1609, %v1626
        %v1631 = vmul.f32 %v1610, %v1626
        %v1632 = vmul.f32 %v1611, %v1626
        %v1633 = vmul.f32 %v1612, %v1626
        %v1634 = vmul.f32 %v1613, %v1626
        %v1635 = vsel %vm1614, %v1606, %v1627
        %v1636 = vsel %vm1615, %v1607, %v1628
        %v1637 = vsel %vm1616, %v1608, %v1629
        %v1638 = vsel %vm1617, %v1609, %v1630
        %v1639 = vsel %vm1618, %v1610, %v1631
        %v1640 = vsel %vm1619, %v1611, %v1632
        %v1641 = vsel %vm1620, %v1612, %v1633
        %v1642 = vsel %vm1621, %v1613, %v1634
        %v1643 = vpack.c.bf16 %v1636, %v1635
        %v1644 = vpack.c.bf16 %v1638, %v1637
        %v1645 = vpack.c.bf16 %v1640, %v1639
        %v1646 = vpack.c.bf16 %v1642, %v1641
        %v1647 = vld [vmem:[#allocation5] sm:$0xf]
        %v1648 = vld [vmem:[#allocation5 + $0x4] sm:$0xf]
        %v1649 = vld [vmem:[#allocation5 + $0x8] sm:$0xf]
        %v1650 = vld [vmem:[#allocation5 + $0xc] sm:$0xf]
        %v1651 = vld [vmem:[#allocation5 + $0x10] sm:$0xf]
        %v1652 = vld [vmem:[#allocation5 + $0x14] sm:$0xf]
        %v1653 = vld [vmem:[#allocation5 + $0x18] sm:$0xf]
        %v1654 = vld [vmem:[#allocation5 + $0x1c] sm:$0xf]
        %v1655 = vld [vmem:[#allocation5 + $0x20] sm:$0xf]
        %v1656 = vld [vmem:[#allocation5 + $0x24] sm:$0xf]
        %v1657 = vld [vmem:[#allocation5 + $0x28] sm:$0xf]
        %v1658 = vld [vmem:[#allocation5 + $0x2c] sm:$0xf]
        %v1659 = vld [vmem:[#allocation5 + $0x30] sm:$0xf]
        %v1660 = vld [vmem:[#allocation5 + $0x34] sm:$0xf]
        %v1661 = vld [vmem:[#allocation5 + $0x38] sm:$0xf]
        %v1662 = vld [vmem:[#allocation5 + $0x3c] sm:$0xf]
        %v1663 = vld [vmem:[%s8] sm:$0x1]
        %v1664 = vlaneseq
        %v1665 = vshrl.u32 %v1664, 7
        %v1666 = vsub.s32 0, %v1665
        %v1667 = vrot.slane %v1663, %v1666
        %v1684 = vunpack.c.l.b16 %v1647
        %v1685 = vunpack.c.l.b16 %v1648
        %v1686 = vunpack.c.l.b16 %v1649
        %v1687 = vunpack.c.l.b16 %v1650
        %v1688 = vunpack.c.l.b16 %v1651
        %v1689 = vunpack.c.l.b16 %v1652
        %v1690 = vunpack.c.l.b16 %v1653
        %v1691 = vunpack.c.l.b16 %v1654
        %v1692 = vunpack.c.l.b16 %v1655
        %v1693 = vunpack.c.l.b16 %v1656
        %v1694 = vunpack.c.l.b16 %v1657
        %v1695 = vunpack.c.l.b16 %v1658
        %v1696 = vunpack.c.l.b16 %v1659
        %v1697 = vunpack.c.l.b16 %v1660
        %v1698 = vunpack.c.l.b16 %v1661
        %v1699 = vunpack.c.l.b16 %v1662
        %v1700 = vpack.c.b16 %v1685, %v1684
        %v1701 = vpack.c.b16 %v1687, %v1686
        %v1702 = vpack.c.b16 %v1689, %v1688
        %v1703 = vpack.c.b16 %v1691, %v1690
        %v1704 = vpack.c.b16 %v1693, %v1692
        %v1705 = vpack.c.b16 %v1695, %v1694
        %v1706 = vpack.c.b16 %v1697, %v1696
        %v1707 = vpack.c.b16 %v1699, %v1698
        %1716 = vmatprep.subr.bf16.mxu0 0
        %1717 = vmatpush1.bf16.msra.mxu0 %v1707
        %1718 = vmatprep.subr.bf16.mxu0 0
        %1719 = vmatpush1.bf16.msra.mxu0 %v1706
        %1720 = vmatprep.subr.bf16.mxu0 0
        %1721 = vmatpush1.bf16.msra.mxu0 %v1705
        %1722 = vmatprep.subr.bf16.mxu0 0
        %1723 = vmatpush1.bf16.msra.mxu0 %v1704
        %1724 = vmatprep.subr.bf16.mxu0 0
        %1725 = vmatpush1.bf16.msra.mxu0 %v1703
        %1726 = vmatprep.subr.bf16.mxu0 0
        %1727 = vmatpush1.bf16.msra.mxu0 %v1702
        %1728 = vmatprep.subr.bf16.mxu0 0
        %1729 = vmatpush1.bf16.msra.mxu0 %v1701
        %1730 = vmatprep.subr.bf16.mxu0 0
        %1731 = vmatpush1.bf16.msra.mxu0 %v1700
        %1732 = vmatprep.subr.bf16.mxu0 0
        %1733 = vmatpush2.bf16.msra.mxu0 0
        %1734 = vmatprep.subr.bf16.mxu0 0
        %1735 = vmatpush2.bf16.msra.mxu0 0
        %1736 = vmatprep.subr.bf16.mxu0 0
        %1737 = vmatpush2.bf16.msra.mxu0 0
        %1738 = vmatprep.subr.bf16.mxu0 0
        %1739 = vmatpush2.bf16.msra.mxu0 0
        %1740 = vmatprep.subr.bf16.mxu0 0
        %1741 = vmatpush2.bf16.msra.mxu0 0
        %1742 = vmatprep.subr.bf16.mxu0 0
        %1743 = vmatpush2.bf16.msra.mxu0 0
        %1744 = vmatprep.subr.bf16.mxu0 0
        %1745 = vmatpush2.bf16.msra.mxu0 0
        %1746 = vmatprep.subr.bf16.mxu0 0
        %1747 = vmatpush2.bf16.msra.mxu0 0
        %1748 = vmatprep.mubr.bf16.mxu0 0
        %1749 = vmatmul.mubr.bf16.gmra.mxu0 %v1643
        %v1750 = vpop.f32.mrf.mxu0
        %v1751 = vadd.f32 %v1667, %v1750
        %v1752 = vpop.f32.mrf.mxu0
        %v1753 = vpop.f32.mrf.mxu0
        %v1754 = vadd.f32 %v1667, %v1753
        %v1755 = vpop.f32.mrf.mxu0
        %1756 = vmatprep.mubr.bf16.mxu0 0
        %1757 = vmatmul.mubr.bf16.gmra.mxu0 %v1644
        %v1758 = vpop.f32.mrf.mxu0
        %v1759 = vadd.f32 %v1667, %v1758
        %v1760 = vpop.f32.mrf.mxu0
        %v1761 = vpop.f32.mrf.mxu0
        %v1762 = vadd.f32 %v1667, %v1761
        %v1763 = vpop.f32.mrf.mxu0
        %1764 = vmatprep.mubr.bf16.mxu0 0
        %1765 = vmatmul.mubr.bf16.gmra.mxu0 %v1645
        %v1766 = vpop.f32.mrf.mxu0
        %v1767 = vadd.f32 %v1667, %v1766
        %v1768 = vpop.f32.mrf.mxu0
        %v1769 = vpop.f32.mrf.mxu0
        %v1770 = vadd.f32 %v1667, %v1769
        %v1771 = vpop.f32.mrf.mxu0
        %1772 = vmatprep.mubr.bf16.mxu0 0
        %1773 = vmatmul.mubr.bf16.gmra.mxu0 %v1646
        %v1774 = vpop.f32.mrf.mxu0
        %v1775 = vadd.f32 %v1667, %v1774
        %v1776 = vpop.f32.mrf.mxu0
        %v1777 = vpop.f32.mrf.mxu0
        %v1778 = vadd.f32 %v1667, %v1777
        %v1779 = vpop.f32.mrf.mxu0
        %1780 = vdwg.mxu0
        %vm1781 = vcmp.gt.f32.partialorder %v1751, 0.0
        %vm1782 = vcmp.gt.f32.partialorder %v1754, 0.0
        %vm1783 = vcmp.gt.f32.partialorder %v1759, 0.0
        %vm1784 = vcmp.gt.f32.partialorder %v1762, 0.0
        %vm1785 = vcmp.gt.f32.partialorder %v1767, 0.0
        %vm1786 = vcmp.gt.f32.partialorder %v1770, 0.0
        %vm1787 = vcmp.gt.f32.partialorder %v1775, 0.0
        %vm1788 = vcmp.gt.f32.partialorder %v1778, 0.0
        %v1789 = vld [vmem:[%s8 + $0x1] sm:$0x1]
        %v1790 = vlaneseq
        %v1791 = vshrl.u32 %v1790, 7
        %v1792 = vsub.s32 0, %v1791
        %v1793 = vrot.slane %v1789, %v1792
        %v1794 = vmul.f32 %v1751, %v1793
        %v1795 = vmul.f32 %v1754, %v1793
        %v1796 = vmul.f32 %v1759, %v1793
        %v1797 = vmul.f32 %v1762, %v1793
        %v1798 = vmul.f32 %v1767, %v1793
        %v1799 = vmul.f32 %v1770, %v1793
        %v1800 = vmul.f32 %v1775, %v1793
        %v1801 = vmul.f32 %v1778, %v1793
        %v1802 = vsel %vm1781, %v1751, %v1794
        %v1803 = vsel %vm1782, %v1754, %v1795
        %v1804 = vsel %vm1783, %v1759, %v1796
        %v1805 = vsel %vm1784, %v1762, %v1797
        %v1806 = vsel %vm1785, %v1767, %v1798
        %v1807 = vsel %vm1786, %v1770, %v1799
        %v1808 = vsel %vm1787, %v1775, %v1800
        %v1809 = vsel %vm1788, %v1778, %v1801
        %1810 = vst [vmem:[%s434] sm:$0xff] %v1802
        %1811 = vst [vmem:[%s434 + $0x8] sm:$0xff] %v1803
        %1812 = vst [vmem:[%s434 + $0x10] sm:$0xff] %v1804
        %1813 = vst [vmem:[%s434 + $0x18] sm:$0xff] %v1805
        %1814 = vst [vmem:[%s434 + $0x20] sm:$0xff] %v1806
        %1815 = vst [vmem:[%s434 + $0x28] sm:$0xff] %v1807
        %1816 = vst [vmem:[%s434 + $0x30] sm:$0xff] %v1808
        %1817 = vst [vmem:[%s434 + $0x38] sm:$0xff] %v1809
        %s1818 = sand.u32 %s260, 1
        %s1819 = scalar_lea.sflag [#allocation4], %s1818
        %s1820 = sand.u32 %s260, 1
        %s1821 = smul.addr %s1820, 64
        %s1822 = scalar_lea.vmem [#allocation7], %s1821
        // Predicated region
        $region65: #{tpu_custom_call.1} parent=55 // pred_check
          %p1823 = pneg %p270
        $region66: #{tpu_custom_call.1} parent=55 // pred_check_branch
          %1825 = sbr.rel (%p1823) target = $region68
        $region67: #{tpu_custom_call.1} parent=55 // pred_region
          %s1826 = smul.u32 8, %s30
          %s1828 = ssub.s32 1024, 1024
          %1829 = vsyncadd %s1819, %s1828
          %s1830 = smul.addr %s29, 8
          %s1831 = sadd.s32 %s1826, %s1830
          %s1832 = smul.addr %s1831, 128
          %s1833 = scalar_lea.hbm %s9, %s1832
          %s1834 = sshll.u32 %s1822, 4
          %s1835 = int_to_ptr.vmem [resolvable:$true] %s1834
          %1840 = dma.vmem_to_hbm [thread:$0]  %s1835, 1024, %s1833, %s1819, 128, 128, 8
        $region68: #{tpu_custom_call.1} parent=55 // pred_fallthru
          _
      $region56: #{tpu_custom_call.1} parent=5 // pred_fallthru
        _
      %p1841 = scmp.le.s32.totalorder 2, %s20
      // Predicated region
      $region69: #{tpu_custom_call.1} parent=5 // pred_check
        %p1842 = pneg %p1841
      $region70: #{tpu_custom_call.1} parent=5 // pred_check_branch
        %1844 = sbr.rel (%p1842) target = $region72
      $region71: #{tpu_custom_call.1} parent=5 // pred_region
        %s1845 = ssub.s32 %s20, 2
        // Predicated region
        $region73: #{tpu_custom_call.1} parent=71 // pred_check
          %p1846 = pneg %p276
        $region74: #{tpu_custom_call.1} parent=71 // pred_check_branch
          %1848 = sbr.rel (%p1846) target = $region76
        $region75: #{tpu_custom_call.1} parent=71 // pred_region
          %s1849 = sand.u32 %s261, 1
          %s1850 = scalar_lea.sflag [#allocation4], %s1849
          %s1851 = sand.u32 %s261, 1
          %s1852 = smul.addr %s1851, 64
          %s1853 = scalar_lea.vmem [#allocation7], %s1852
          %1854 = dma.done %s1850, 1024
        $region76: #{tpu_custom_call.1} parent=71 // pred_fallthru
          _
      $region72: #{tpu_custom_call.1} parent=5 // pred_fallthru
        _
    $region6: #{tpu_custom_call.1} parent=1 // loop_footer
      %s24 = sadd.s32 1, %s20
    $region7: #{tpu_custom_call.1} parent=1 // loop_footer_branch
      %19 = sbr.rel target = $region3
    $region8: #{tpu_custom_call.1} parent=1 // loop_exit
      _
    %1855 = vsyncpa [#allocation3], 1
    %s1856 = scalar_lea.sflag [#allocation3], 1
    %1857 = vsyncpa %s1856, 1
    %1858 = vsyncpa [#allocation6], 1
    %1859 = vsyncpa [#allocation4], 1
    %s1860 = scalar_lea.sflag [#allocation4], 1
    %1861 = vsyncpa %s1860, 1

// kernel: tpu_custom_call.1
$region0: #{tpu_custom_call.1}
  #allocation0 [shape = 'u32[]', space=smem, size = 0x4, offset = 0x4, fixed_abs, tag = 'smem constant byte address 0x4 - core index']
  #allocation1 [shape = 'u32[144,128]{1,0:T(1,128)}', space=vmem, size = 0x12000, scoped, tag = 'internal scratch']
  %s0 = inlined_call_operand.vmem [shape: f32[2,64,3], index: 0, kind: input, shape index: {}]
  %s1 = inlined_call_operand.vmem [shape: f32[2,3,16], index: 1, kind: input, shape index: {}]
  %s2 = inlined_call_operand.vmem [shape: bf16[2,64,128], index: 2, kind: input, shape index: {}]
  %s3 = inlined_call_operand.vmem [shape: bf16[2,16,128], index: 3, kind: input, shape index: {}]
  %s4 = inlined_call_operand.vmem [shape: bf16[128,128], index: 4, kind: input, shape index: {}]
  %s5 = inlined_call_operand.hbm [shape: bf16[128,128], index: 5, kind: input, shape index: {}]
  %s6 = inlined_call_operand.vmem [shape: f32[2,128], index: 6, kind: input, shape index: {}]
  %s7 = inlined_call_operand.hbm [shape: bf16[128,128], index: 7, kind: input, shape index: {}]
  %s8 = inlined_call_operand.vmem [shape: f32[2,128], index: 8, kind: input, shape index: {}]
  %s9 = inlined_call_operand.hbm [shape: f32[2,64,128], index: 9, kind: output, shape index: {}]
  %s10 = sld [smem:[#allocation0]]
  $region77: #{tpu_custom_call.1} parent=0
    _
  %s12 = ssub.s32 1, %s10
  %s13 = scalar_select 0, %s12, %s10
  $region1: #{tpu_custom_call.1} parent=0
    #allocation2 [shape = 'u8[32768]{0}', space=vmem, size = 0x8000, scoped, tag = 'input window, operand 5, single buffered']
    #allocation3 [shape = 's32[2]{0}', space=sflag, size = 0x8, scoped, tag = 'scoped memory for tpu_custom_call.1']
    #allocation4 [shape = 's32[2]{0}', space=sflag, size = 0x8, scoped, tag = 'scoped memory for tpu_custom_call.1']
    #allocation5 [shape = 'u8[32768]{0}', space=vmem, size = 0x8000, scoped, tag = 'input window, operand 7, single buffered']
    #allocation6 [shape = 's32[1]{0}', space=sflag, size = 0x4, scoped, tag = 'scoped memory for tpu_custom_call.1']
    #allocation7 [shape = 'u8[65536]{0}', space=vmem, size = 0x10000, scoped, tag = 'output window, operand 0']
    %14 = vsyncpa [#allocation3], 0
    %15 = vsyncpa [#allocation6], 0
    %16 = vsyncpa [#allocation4], 0
    %s17 = scalar_lea.sflag [#allocation4], 1
    %18 = vsyncpa %s17, 0
    loop: start=0, step=1, limit=4
    $region2: #{tpu_custom_call.1} parent=1 // loop_pre_header
      _
    $region3: #{tpu_custom_call.1} parent=1 // loop_header
      %s20 = sphi 0, %s24
      %p21 = scmp.ge.s32.totalorder %s20, 4
      %s27 = sphi 0, %s39
      %s28 = sphi 0, %s35
      %s29 = sphi 0, %s27
      %s30 = sphi 0, %s28
      %s31 = sphi 0, %s29
      %s32 = sphi 0, %s30
      %s44 = sphi 0, %s46
      %s47 = sphi 0, %s44
      %s48 = sphi 0, %s47
      %s64 = sphi 0, %s48
      %s70 = sphi 0, %s72
      %s73 = sphi 0, %s70
      %s74 = sphi 0, %s73
      %s90 = sphi 0, %s74
      %s98 = sphi 0, %s100
      %s101 = sphi 0, %s98
      %s102 = sphi 0, %s101
      %s118 = sphi 0, %s102
      %s124 = sphi 0, %s126
      %s127 = sphi 0, %s124
      %s128 = sphi 0, %s127
      %s144 = sphi 0, %s128
      %s148 = sphi 0, %s148
      %s150 = sphi 0, %s148
      %s151 = sphi 0, %s150
      %s165 = sphi 0, %s151
      %s169 = sphi 0, %s169
      %s171 = sphi 0, %s169
      %s172 = sphi 0, %s171
      %s186 = sphi 0, %s172
      %s190 = sphi 0, %s190
      %s192 = sphi 0, %s190
      %s193 = sphi 0, %s192
      %s207 = sphi 0, %s193
      %s211 = sphi 0, %s211
      %s213 = sphi 0, %s211
      %s214 = sphi 0, %s213
      %s228 = sphi 0, %s214
      %s232 = sphi 0, %s232
      %s234 = sphi 0, %s232
      %s235 = sphi 0, %s234
      %s249 = sphi 0, %s235
      %s257 = sphi 0, %s259
      %s260 = sphi 0, %s257
      %s261 = sphi 0, %s260
      %s277 = sphi 0, %s261
    $region4: #{tpu_custom_call.1} parent=1 // loop_header_branch
      %23 = sbr.rel (%p21) target = $region8
    $region5: #{tpu_custom_call.1} parent=1 // loop_body
      %s25 = ssub.s32 %s20, 1
      %s26 = ssub.s32 %s20, 2
      %s33 = sadd.s32 1, %s28
      %p34 = scmp.ge.s32.totalorder %s33, 1
      %s35 = scalar_select %p34, 0, %s33
      %s36 = sadd.s32 1, %s27
      %s37 = scalar_select %p34, %s36, %s27
      %p38 = scmp.ge.s32.totalorder %s37, 2
      %s39 = scalar_select %p38, 0, %s37
      %s40 = ssub.s32 %s27, %s39
      %s41 = ssub.s32 %s28, %s35
      %s42 = sor.u32 %s40, %s41
      %p43 = scmp.eq.s32.totalorder %s42, 0
      %s45 = sadd.s32 %s44, 1
      %s46 = scalar_select %p43, %s44, %s45
      %p49 = pneg %p43
      %p50 = scmp.eq.s32.totalorder %s20, 1
      %p51 = por %p49, %p50
      %p52 = scmp.ne.s32.totalorder %s44, %s47
      %p53 = scmp.eq.s32.totalorder %s20, 0
      %p54 = por %p52, %p53
      %p55 = scmp.ne.s32.totalorder %s44, %s47
      %p56 = scmp.eq.s32.totalorder %s25, 1
      %p57 = por %p55, %p56
      %p58 = scmp.ne.s32.totalorder %s47, %s48
      %p59 = scmp.eq.s32.totalorder %s25, 0
      %p60 = por %p58, %p59
      %p61 = scmp.ne.s32.totalorder %s47, %s48
      %p62 = scmp.eq.s32.totalorder %s26, 1
      %p63 = por %p61, %p62
      %p65 = scmp.ne.s32.totalorder %s48, %s64
      %p66 = scmp.eq.s32.totalorder %s26, 0
      %p67 = por %p65, %p66
      %s68 = ssub.s32 %s27, %s39
      %p69 = scmp.eq.s32.totalorder %s68, 0
      %s71 = sadd.s32 %s70, 1
      %s72 = scalar_select %p69, %s70, %s71
      %p75 = pneg %p69
      %p76 = scmp.eq.s32.totalorder %s20, 1
      %p77 = por %p75, %p76
      %p78 = scmp.ne.s32.totalorder %s70, %s73
      %p79 = scmp.eq.s32.totalorder %s20, 0
      %p80 = por %p78, %p79
      %p81 = scmp.ne.s32.totalorder %s70, %s73
      %p82 = scmp.eq.s32.totalorder %s25, 1
      %p83 = por %p81, %p82
      %p84 = scmp.ne.s32.totalorder %s73, %s74
      %p85 = scmp.eq.s32.totalorder %s25, 0
      %p86 = por %p84, %p85
      %p87 = scmp.ne.s32.totalorder %s73, %s74
      %p88 = scmp.eq.s32.totalorder %s26, 1
      %p89 = por %p87, %p88
      %p91 = scmp.ne.s32.totalorder %s74, %s90
      %p92 = scmp.eq.s32.totalorder %s26, 0
      %p93 = por %p91, %p92
      %s94 = ssub.s32 %s27, %s39
      %s95 = ssub.s32 %s28, %s35
      %s96 = sor.u32 %s94, %s95
      %p97 = scmp.eq.s32.totalorder %s96, 0
      %s99 = sadd.s32 %s98, 1
      %s100 = scalar_select %p97, %s98, %s99
      %p103 = pneg %p97
      %p104 = scmp.eq.s32.totalorder %s20, 1
      %p105 = por %p103, %p104
      %p106 = scmp.ne.s32.totalorder %s98, %s101
      %p107 = scmp.eq.s32.totalorder %s20, 0
      %p108 = por %p106, %p107
      %p109 = scmp.ne.s32.totalorder %s98, %s101
      %p110 = scmp.eq.s32.totalorder %s25, 1
      %p111 = por %p109, %p110
      %p112 = scmp.ne.s32.totalorder %s101, %s102
      %p113 = scmp.eq.s32.totalorder %s25, 0
      %p114 = por %p112, %p113
      %p115 = scmp.ne.s32.totalorder %s101, %s102
      %p116 = scmp.eq.s32.totalorder %s26, 1
      %p117 = por %p115, %p116
      %p119 = scmp.ne.s32.totalorder %s102, %s118
      %p120 = scmp.eq.s32.totalorder %s26, 0
      %p121 = por %p119, %p120
      %s122 = ssub.s32 %s27, %s39
      %p123 = scmp.eq.s32.totalorder %s122, 0
      %s125 = sadd.s32 %s124, 1
      %s126 = scalar_select %p123, %s124, %s125
      %p129 = pneg %p123
      %p130 = scmp.eq.s32.totalorder %s20, 1
      %p131 = por %p129, %p130
      %p132 = scmp.ne.s32.totalorder %s124, %s127
      %p133 = scmp.eq.s32.totalorder %s20, 0
      %p134 = por %p132, %p133
      %p135 = scmp.ne.s32.totalorder %s124, %s127
      %p136 = scmp.eq.s32.totalorder %s25, 1
      %p137 = por %p135, %p136
      %p138 = scmp.ne.s32.totalorder %s127, %s128
      %p139 = scmp.eq.s32.totalorder %s25, 0
      %p140 = por %p138, %p139
      %p141 = scmp.ne.s32.totalorder %s127, %s128
      %p142 = scmp.eq.s32.totalorder %s26, 1
      %p143 = por %p141, %p142
      %p145 = scmp.ne.s32.totalorder %s128, %s144
      %p146 = scmp.eq.s32.totalorder %s26, 0
      %p147 = por %p145, %p146
      %s149 = sadd.s32 %s148, 1
      %p152 = scmp.eq.s32.totalorder %s20, 1
      %p153 = scmp.ne.s32.totalorder %s148, %s150
      %p154 = scmp.eq.s32.totalorder %s20, 0
      %p155 = por %p153, %p154
      %p156 = scmp.ne.s32.totalorder %s148, %s150
      %p157 = scmp.eq.s32.totalorder %s25, 1
      %p158 = por %p156, %p157
      %p159 = scmp.ne.s32.totalorder %s150, %s151
      %p160 = scmp.eq.s32.totalorder %s25, 0
      %p161 = por %p159, %p160
      %p162 = scmp.ne.s32.totalorder %s150, %s151
      %p163 = scmp.eq.s32.totalorder %s26, 1
      %p164 = por %p162, %p163
      %p166 = scmp.ne.s32.totalorder %s151, %s165
      %p167 = scmp.eq.s32.totalorder %s26, 0
      %p168 = por %p166, %p167
      %s170 = sadd.s32 %s169, 1
      %p173 = scmp.eq.s32.totalorder %s20, 1
      %p174 = scmp.ne.s32.totalorder %s169, %s171
      %p175 = scmp.eq.s32.totalorder %s20, 0
      %p176 = por %p174, %p175
      %p177 = scmp.ne.s32.totalorder %s169, %s171
      %p178 = scmp.eq.s32.totalorder %s25, 1
      %p179 = por %p177, %p178
      %p180 = scmp.ne.s32.totalorder %s171, %s172
      %p181 = scmp.eq.s32.totalorder %s25, 0
      %p182 = por %p180, %p181
      %p183 = scmp.ne.s32.totalorder %s171, %s172
      %p184 = scmp.eq.s32.totalorder %s26, 1
      %p185 = por %p183, %p184
      %p187 = scmp.ne.s32.totalorder %s172, %s186
      %p188 = scmp.eq.s32.totalorder %s26, 0
      %p189 = por %p187, %p188
      %s191 = sadd.s32 %s190, 1
      %p194 = scmp.eq.s32.totalorder %s20, 1
      %p195 = scmp.ne.s32.totalorder %s190, %s192
      %p196 = scmp.eq.s32.totalorder %s20, 0
      %p197 = por %p195, %p196
      %p198 = scmp.ne.s32.totalorder %s190, %s192
      %p199 = scmp.eq.s32.totalorder %s25, 1
      %p200 = por %p198, %p199
      %p201 = scmp.ne.s32.totalorder %s192, %s193
      %p202 = scmp.eq.s32.totalorder %s25, 0
      %p203 = por %p201, %p202
      %p204 = scmp.ne.s32.totalorder %s192, %s193
      %p205 = scmp.eq.s32.totalorder %s26, 1
      %p206 = por %p204, %p205
      %p208 = scmp.ne.s32.totalorder %s193, %s207
      %p209 = scmp.eq.s32.totalorder %s26, 0
      %p210 = por %p208, %p209
      %s212 = sadd.s32 %s211, 1
      %p215 = scmp.eq.s32.totalorder %s20, 1
      %p216 = scmp.ne.s32.totalorder %s211, %s213
      %p217 = scmp.eq.s32.totalorder %s20, 0
      %p218 = por %p216, %p217
      %p219 = scmp.ne.s32.totalorder %s211, %s213
      %p220 = scmp.eq.s32.totalorder %s25, 1
      %p221 = por %p219, %p220
      %p222 = scmp.ne.s32.totalorder %s213, %s214
      %p223 = scmp.eq.s32.totalorder %s25, 0
      %p224 = por %p222, %p223
      %p225 = scmp.ne.s32.totalorder %s213, %s214
      %p226 = scmp.eq.s32.totalorder %s26, 1
      %p227 = por %p225, %p226
      %p229 = scmp.ne.s32.totalorder %s214, %s228
      %p230 = scmp.eq.s32.totalorder %s26, 0
      %p231 = por %p229, %p230
      %s233 = sadd.s32 %s232, 1
      %p236 = scmp.eq.s32.totalorder %s20, 1
      %p237 = scmp.ne.s32.totalorder %s232, %s234
      %p238 = scmp.eq.s32.totalorder %s20, 0
      %p239 = por %p237, %p238
      %p240 = scmp.ne.s32.totalorder %s232, %s234
      %p241 = scmp.eq.s32.totalorder %s25, 1
      %p242 = por %p240, %p241
      %p243 = scmp.ne.s32.totalorder %s234, %s235
      %p244 = scmp.eq.s32.totalorder %s25, 0
      %p245 = por %p243, %p244
      %p246 = scmp.ne.s32.totalorder %s234, %s235
      %p247 = scmp.eq.s32.totalorder %s26, 1
      %p248 = por %p246, %p247
      %p250 = scmp.ne.s32.totalorder %s235, %s249
      %p251 = scmp.eq.s32.totalorder %s26, 0
      %p252 = por %p250, %p251
      %s253 = ssub.s32 %s27, %s39
      %s254 = ssub.s32 %s28, %s35
      %s255 = sor.u32 %s253, %s254
      %p256 = scmp.eq.s32.totalorder %s255, 0
      %s258 = sadd.s32 %s257, 1
      %s259 = scalar_select %p256, %s257, %s258
      %p262 = pneg %p256
      %p263 = scmp.eq.s32.totalorder %s20, 1
      %p264 = por %p262, %p263
      %p265 = scmp.ne.s32.totalorder %s257, %s260
      %p266 = scmp.eq.s32.totalorder %s20, 0
      %p267 = por %p265, %p266
      %p268 = scmp.ne.s32.totalorder %s257, %s260
      %p269 = scmp.eq.s32.totalorder %s25, 1
      %p270 = por %p268, %p269
      %p271 = scmp.ne.s32.totalorder %s260, %s261
      %p272 = scmp.eq.s32.totalorder %s25, 0
      %p273 = por %p271, %p272
      %p274 = scmp.ne.s32.totalorder %s260, %s261
      %p275 = scmp.eq.s32.totalorder %s26, 1
      %p276 = por %p274, %p275
      %p278 = scmp.ne.s32.totalorder %s261, %s277
      %p279 = scmp.eq.s32.totalorder %s26, 0
      %p280 = por %p278, %p279
      %p281 = scmp.le.s32.totalorder 1, %s20
      %p282 = scmp.lt.s32.totalorder %s20, 3
      %p283 = pnand %p281, %p282
      %p284 = pneg %p283
      // Predicated region
      $region9: #{tpu_custom_call.1} parent=5 // pred_check
        _
      $region10: #{tpu_custom_call.1} parent=5 // pred_check_branch
        %286 = sbr.rel (%p283) target = $region12
      $region11: #{tpu_custom_call.1} parent=5 // pred_region
        %s287 = ssub.s32 %s20, 1
        // Predicated region
        $region13: #{tpu_custom_call.1} parent=11 // pred_check
          %p288 = pneg %p161
        $region14: #{tpu_custom_call.1} parent=11 // pred_check_branch
          %290 = sbr.rel (%p288) target = $region16
        $region15: #{tpu_custom_call.1} parent=11 // pred_region
          _
        $region16: #{tpu_custom_call.1} parent=11 // pred_fallthru
          _
        // Predicated region
        $region17: #{tpu_custom_call.1} parent=11 // pred_check
          %p291 = pneg %p182
        $region18: #{tpu_custom_call.1} parent=11 // pred_check_branch
          %293 = sbr.rel (%p291) target = $region20
        $region19: #{tpu_custom_call.1} parent=11 // pred_region
          %s295 = ssub.s32 1024, 1024
          %296 = vsyncadd [#allocation3], %s295
          %s297 = sshll.u32 [#allocation2], 4
          %s298 = int_to_ptr.vmem [resolvable:$true] %s297
          %303 = dma.hbm_to_vmem [thread:$0]  %s5, 1024, %s298, [#allocation3], 64, 64, 4
        $region20: #{tpu_custom_call.1} parent=11 // pred_fallthru
          _
        // Predicated region
        $region21: #{tpu_custom_call.1} parent=11 // pred_check
          %p304 = pneg %p203
        $region22: #{tpu_custom_call.1} parent=11 // pred_check_branch
          %306 = sbr.rel (%p304) target = $region24
        $region23: #{tpu_custom_call.1} parent=11 // pred_region
          _
        $region24: #{tpu_custom_call.1} parent=11 // pred_fallthru
          _
        // Predicated region
        $region25: #{tpu_custom_call.1} parent=11 // pred_check
          %p307 = pneg %p224
        $region26: #{tpu_custom_call.1} parent=11 // pred_check_branch
          %309 = sbr.rel (%p307) target = $region28
        $region27: #{tpu_custom_call.1} parent=11 // pred_region
          %s311 = ssub.s32 1024, 1024
          %312 = vsyncadd [#allocation6], %s311
          %s313 = sshll.u32 [#allocation5], 4
          %s314 = int_to_ptr.vmem [resolvable:$true] %s313
          %319 = dma.hbm_to_vmem [thread:$0]  %s7, 1024, %s314, [#allocation6], 64, 64, 4
        $region28: #{tpu_custom_call.1} parent=11 // pred_fallthru
          _
        // Predicated region
        $region29: #{tpu_custom_call.1} parent=11 // pred_check
          %p320 = pneg %p245
        $region30: #{tpu_custom_call.1} parent=11 // pred_check_branch
          %322 = sbr.rel (%p320) target = $region32
        $region31: #{tpu_custom_call.1} parent=11 // pred_region
          _
        $region32: #{tpu_custom_call.1} parent=11 // pred_fallthru
          _
      $region12: #{tpu_custom_call.1} parent=5 // pred_fallthru
        _
      %p323 = scmp.lt.s32.totalorder %s20, 2
      // Predicated region
      $region33: #{tpu_custom_call.1} parent=5 // pred_check
        %p324 = pneg %p323
      $region34: #{tpu_custom_call.1} parent=5 // pred_check_branch
        %326 = sbr.rel (%p324) target = $region36
      $region35: #{tpu_custom_call.1} parent=5 // pred_region
        // Predicated region
        $region37: #{tpu_custom_call.1} parent=35 // pred_check
          %p327 = pneg %p54
        $region38: #{tpu_custom_call.1} parent=35 // pred_check_branch
          %329 = sbr.rel (%p327) target = $region40
        $region39: #{tpu_custom_call.1} parent=35 // pred_region
          %s330 = smul.u32 8, %s28
          %p331 = scmp.lt.s32.totalorder %s27, 1
          %s332 = scalar_select %p331, %s27, 1
          %p333 = scmp.lt.s32.totalorder %s330, 7
          %s334 = scalar_select %p333, %s330, 7
          %s335 = smul.addr %s332, 8
          %s336 = sadd.s32 %s334, %s335
          %s337 = smul.addr %s336, 8
          %s338 = scalar_lea.vmem %s0, %s337
          %s339 = smul.u32 8, %s28
        $region40: #{tpu_custom_call.1} parent=35 // pred_fallthru
          _
        // Predicated region
        $region41: #{tpu_custom_call.1} parent=35 // pred_check
          %p340 = pneg %p80
        $region42: #{tpu_custom_call.1} parent=35 // pred_check_branch
          %342 = sbr.rel (%p340) target = $region44
        $region43: #{tpu_custom_call.1} parent=35 // pred_region
          %p343 = scmp.lt.s32.totalorder %s27, 1
          %s344 = scalar_select %p343, %s27, 1
          %s345 = smul.addr %s344, 4
          %s346 = scalar_lea.vmem %s1, %s345
        $region44: #{tpu_custom_call.1} parent=35 // pred_fallthru
          _
        // Predicated region
        $region45: #{tpu_custom_call.1} parent=35 // pred_check
          %p347 = pneg %p108
        $region46: #{tpu_custom_call.1} parent=35 // pred_check_branch
          %349 = sbr.rel (%p347) target = $region48
        $region47: #{tpu_custom_call.1} parent=35 // pred_region
          %s350 = smul.u32 8, %s28
          %p351 = scmp.lt.s32.totalorder %s27, 1
          %s352 = scalar_select %p351, %s27, 1
          %p353 = scmp.lt.s32.totalorder %s350, 7
          %s354 = scalar_select %p353, %s350, 7
          %s355 = smul.addr %s352, 8
          %s356 = sadd.s32 %s354, %s355
          %s357 = smul.addr %s356, 4
          %s358 = scalar_lea.vmem %s2, %s357
          %s359 = smul.u32 8, %s28
        $region48: #{tpu_custom_call.1} parent=35 // pred_fallthru
          _
        // Predicated region
        $region49: #{tpu_custom_call.1} parent=35 // pred_check
          %p360 = pneg %p134
        $region50: #{tpu_custom_call.1} parent=35 // pred_check_branch
          %362 = sbr.rel (%p360) target = $region52
        $region51: #{tpu_custom_call.1} parent=35 // pred_region
          %p363 = scmp.lt.s32.totalorder %s27, 1
          %s364 = scalar_select %p363, %s27, 1
          %s365 = smul.addr %s364, 2
          %s366 = smul.addr %s365, 4
          %s367 = scalar_lea.vmem %s3, %s366
        $region52: #{tpu_custom_call.1} parent=35 // pred_fallthru
          _
      $region36: #{tpu_custom_call.1} parent=5 // pred_fallthru
        _
      %p368 = scmp.le.s32.totalorder 1, %s20
      %p369 = scmp.lt.s32.totalorder %s20, 3
      %p370 = pnand %p368, %p369
      %p371 = pneg %p370
      // Predicated region
      $region53: #{tpu_custom_call.1} parent=5 // pred_check
        _
      $region54: #{tpu_custom_call.1} parent=5 // pred_check_branch
        %373 = sbr.rel (%p370) target = $region56
      $region55: #{tpu_custom_call.1} parent=5 // pred_region
        %s374 = ssub.s32 %s20, 1
        // Predicated region
        $region57: #{tpu_custom_call.1} parent=55 // pred_check
          %p375 = pneg %p182
        $region58: #{tpu_custom_call.1} parent=55 // pred_check_branch
          %377 = sbr.rel (%p375) target = $region60
        $region59: #{tpu_custom_call.1} parent=55 // pred_region
          %378 = dma.done [#allocation3], 1024
        $region60: #{tpu_custom_call.1} parent=55 // pred_fallthru
          _
        // Predicated region
        $region61: #{tpu_custom_call.1} parent=55 // pred_check
          %p379 = pneg %p224
        $region62: #{tpu_custom_call.1} parent=55 // pred_check_branch
          %381 = sbr.rel (%p379) target = $region64
        $region63: #{tpu_custom_call.1} parent=55 // pred_region
          %382 = dma.done [#allocation6], 1024
        $region64: #{tpu_custom_call.1} parent=55 // pred_fallthru
          _
        %s383 = smul.u32 8, %s30
        %p384 = scmp.lt.s32.totalorder %s29, 1
        %s385 = scalar_select %p384, %s29, 1
        %p386 = scmp.lt.s32.totalorder %s383, 7
        %s387 = scalar_select %p386, %s383, 7
        %s388 = smul.addr %s385, 8
        %s389 = sadd.s32 %s387, %s388
        %s390 = smul.addr %s389, 8
        %s391 = scalar_lea.vmem %s0, %s390
        %p392 = pneg %p60
        %p393 = pneg %p57
        %p394 = scmp.lt.s32.totalorder %s29, 1
        %s395 = scalar_select %p394, %s29, 1
        %s396 = smul.addr %s395, 4
        %s397 = scalar_lea.vmem %s1, %s396
        %p398 = pneg %p86
        %p399 = pneg %p83
        %s400 = smul.u32 8, %s30
        %p401 = scmp.lt.s32.totalorder %s29, 1
        %s402 = scalar_select %p401, %s29, 1
        %p403 = scmp.lt.s32.totalorder %s400, 7
        %s404 = scalar_select %p403, %s400, 7
        %s405 = smul.addr %s402, 8
        %s406 = sadd.s32 %s404, %s405
        %s407 = smul.addr %s406, 4
        %s408 = scalar_lea.vmem %s2, %s407
        %p409 = pneg %p114
        %p410 = pneg %p111
        %p411 = scmp.lt.s32.totalorder %s29, 1
        %s412 = scalar_select %p411, %s29, 1
        %s413 = smul.addr %s412, 2
        %s414 = smul.addr %s413, 4
        %s415 = scalar_lea.vmem %s3, %s414
        %p416 = pneg %p140
        %p417 = pneg %p137
        %p418 = pneg %p161
        %p419 = pneg %p158
        %p420 = pneg %p182
        %p421 = pneg %p179
        %p422 = pneg %p203
        %p423 = pneg %p200
        %p424 = pneg %p224
        %p425 = pneg %p221
        %p426 = pneg %p245
        %p427 = pneg %p242
        %p428 = pneg %p273
        %p429 = pneg %p270
        %s430 = sand.u32 %s260, 1
        %s431 = scalar_lea.sflag [#allocation4], %s430
        %s432 = sand.u32 %s260, 1
        %s433 = smul.addr %s432, 64
        %s434 = scalar_lea.vmem [#allocation7], %s433
        %s435 = smul.u32 8, %s30
        %p436 = scmp.lt.s32.totalorder %s29, 1
        %s437 = scalar_select %p436, %s29, 1
        %p438 = scmp.lt.s32.totalorder %s435, 7
        %s439 = scalar_select %p438, %s435, 7
        %s440 = smul.addr %s437, 8
        %s441 = sadd.s32 %s439, %s440
        %s442 = smul.addr %s441, 8
        %s443 = scalar_lea.vmem %s0, %s442
        %s444 = smul.u32 8, %s30
        %p445 = scmp.lt.s32.totalorder %s29, 1
        %s446 = scalar_select %p445, %s29, 1
        %s447 = smul.addr %s446, 4
        %s448 = scalar_lea.vmem %s1, %s447
        %s449 = smul.u32 8, %s30
        %p450 = scmp.lt.s32.totalorder %s29, 1
        %s451 = scalar_select %p450, %s29, 1
        %p452 = scmp.lt.s32.totalorder %s449, 7
        %s453 = scalar_select %p452, %s449, 7
        %s454 = smul.addr %s451, 8
        %s455 = sadd.s32 %s453, %s454
        %s456 = smul.addr %s455, 4
        %s457 = scalar_lea.vmem %s2, %s456
        %s458 = smul.u32 8, %s30
        %p459 = scmp.lt.s32.totalorder %s29, 1
        %s460 = scalar_select %p459, %s29, 1
        %s461 = smul.addr %s460, 2
        %s462 = smul.addr %s461, 4
        %s463 = scalar_lea.vmem %s3, %s462
        %s464 = smul.u32 8, %s30
        %v466 = vld [vmem:[%s443] sm:$0xff]
        %v467 = vld [vmem:[%s443 + $0x8] sm:$0xff]
        %v468 = vld [vmem:[%s443 + $0x10] sm:$0xff]
        %v469 = vld [vmem:[%s443 + $0x18] sm:$0xff]
        %v470 = vld [vmem:[%s443 + $0x20] sm:$0xff]
        %v471 = vld [vmem:[%s443 + $0x28] sm:$0xff]
        %v472 = vld [vmem:[%s443 + $0x30] sm:$0xff]
        %v473 = vld [vmem:[%s443 + $0x38] sm:$0xff]
        %v474 = vld [vmem:[%s448] sm:$0x7]
        %v475 = vld [vmem:[%s457] sm:$0xf]
        %v476 = vld [vmem:[%s457 + $0x4] sm:$0xf]
        %v477 = vld [vmem:[%s457 + $0x8] sm:$0xf]
        %v478 = vld [vmem:[%s457 + $0xc] sm:$0xf]
        %v479 = vld [vmem:[%s457 + $0x10] sm:$0xf]
        %v480 = vld [vmem:[%s457 + $0x14] sm:$0xf]
        %v481 = vld [vmem:[%s457 + $0x18] sm:$0xf]
        %v482 = vld [vmem:[%s457 + $0x1c] sm:$0xf]
        %v483 = vld [vmem:[%s463] sm:$0xf]
        %v484 = vld [vmem:[%s463 + $0x4] sm:$0xf]
        %486 = vset.pattern.permute.xlu0 0
        %487 = vperm.xlu0 %486, %v466
        %v488 = vpop.permute.xlu0 %487
        %491 = vset.pattern.permute.xlu0 0
        %492 = vperm.xlu0 %491, %v467
        %v493 = vpop.permute.xlu0 %492
        %496 = vset.pattern.permute.xlu0 0
        %497 = vperm.xlu0 %496, %v468
        %v498 = vpop.permute.xlu0 %497
        %501 = vset.pattern.permute.xlu0 0
        %502 = vperm.xlu0 %501, %v469
        %v503 = vpop.permute.xlu0 %502
        %506 = vset.pattern.permute.xlu0 0
        %507 = vperm.xlu0 %506, %v470
        %v508 = vpop.permute.xlu0 %507
        %511 = vset.pattern.permute.xlu0 0
        %512 = vperm.xlu0 %511, %v471
        %v513 = vpop.permute.xlu0 %512
        %516 = vset.pattern.permute.xlu0 0
        %517 = vperm.xlu0 %516, %v472
        %v518 = vpop.permute.xlu0 %517
        %521 = vset.pattern.permute.xlu0 0
        %522 = vperm.xlu0 %521, %v473
        %v523 = vpop.permute.xlu0 %522
        %v525 = vlaneseq
        %v526 = vshrl.u32 %v525, 7
        %v527 = vsub.s32 0, %v526
        %v528 = vrot.slane %v474, %v527
        %v529 = vsub.f32 %v488, %v528
        %v530 = vsub.f32 %v493, %v528
        %v531 = vsub.f32 %v498, %v528
        %v532 = vsub.f32 %v503, %v528
        %v533 = vsub.f32 %v508, %v528
        %v534 = vsub.f32 %v513, %v528
        %v535 = vsub.f32 %v518, %v528
        %v536 = vsub.f32 %v523, %v528
        %537 = vset.pattern.permute.xlu0 1
        %538 = vperm.xlu0 %537, %v466
        %v539 = vpop.permute.xlu0 %538
        %541 = vset.pattern.permute.xlu0 1
        %542 = vperm.xlu0 %541, %v467
        %v543 = vpop.permute.xlu0 %542
        %545 = vset.pattern.permute.xlu0 1
        %546 = vperm.xlu0 %545, %v468
        %v547 = vpop.permute.xlu0 %546
        %549 = vset.pattern.permute.xlu0 1
        %550 = vperm.xlu0 %549, %v469
        %v551 = vpop.permute.xlu0 %550
        %553 = vset.pattern.permute.xlu0 1
        %554 = vperm.xlu0 %553, %v470
        %v555 = vpop.permute.xlu0 %554
        %557 = vset.pattern.permute.xlu0 1
        %558 = vperm.xlu0 %557, %v471
        %v559 = vpop.permute.xlu0 %558
        %561 = vset.pattern.permute.xlu0 1
        %562 = vperm.xlu0 %561, %v472
        %v563 = vpop.permute.xlu0 %562
        %565 = vset.pattern.permute.xlu0 1
        %566 = vperm.xlu0 %565, %v473
        %v567 = vpop.permute.xlu0 %566
        %v569 = vlaneseq
        %v570 = vshrl.u32 %v569, 7
        %v571 = vsub.s32 1, %v570
        %v572 = vrot.slane %v474, %v571
        %v573 = vsub.f32 %v539, %v572
        %v574 = vsub.f32 %v543, %v572
        %v575 = vsub.f32 %v547, %v572
        %v576 = vsub.f32 %v551, %v572
        %v577 = vsub.f32 %v555, %v572
        %v578 = vsub.f32 %v559, %v572
        %v579 = vsub.f32 %v563, %v572
        %v580 = vsub.f32 %v567, %v572
        %581 = vset.pattern.permute.xlu0 2
        %582 = vperm.xlu0 %581, %v466
        %v583 = vpop.permute.xlu0 %582
        %585 = vset.pattern.permute.xlu0 2
        %586 = vperm.xlu0 %585, %v467
        %v587 = vpop.permute.xlu0 %586
        %589 = vset.pattern.permute.xlu0 2
        %590 = vperm.xlu0 %589, %v468
        %v591 = vpop.permute.xlu0 %590
        %593 = vset.pattern.permute.xlu0 2
        %594 = vperm.xlu0 %593, %v469
        %v595 = vpop.permute.xlu0 %594
        %597 = vset.pattern.permute.xlu0 2
        %598 = vperm.xlu0 %597, %v470
        %v599 = vpop.permute.xlu0 %598
        %601 = vset.pattern.permute.xlu0 2
        %602 = vperm.xlu0 %601, %v471
        %v603 = vpop.permute.xlu0 %602
        %605 = vset.pattern.permute.xlu0 2
        %606 = vperm.xlu0 %605, %v472
        %v607 = vpop.permute.xlu0 %606
        %609 = vset.pattern.permute.xlu0 2
        %610 = vperm.xlu0 %609, %v473
        %v611 = vpop.permute.xlu0 %610
        %v613 = vlaneseq
        %v614 = vshrl.u32 %v613, 7
        %v615 = vsub.s32 2, %v614
        %v616 = vrot.slane %v474, %v615
        %v617 = vsub.f32 %v583, %v616
        %v618 = vsub.f32 %v587, %v616
        %v619 = vsub.f32 %v591, %v616
        %v620 = vsub.f32 %v595, %v616
        %v621 = vsub.f32 %v599, %v616
        %v622 = vsub.f32 %v603, %v616
        %v623 = vsub.f32 %v607, %v616
        %v624 = vsub.f32 %v611, %v616
        %v625 = vmul.f32 %v529, %v529
        %v626 = vmul.f32 %v530, %v530
        %v627 = vmul.f32 %v531, %v531
        %v628 = vmul.f32 %v532, %v532
        %v629 = vmul.f32 %v533, %v533
        %v630 = vmul.f32 %v534, %v534
        %v631 = vmul.f32 %v535, %v535
        %v632 = vmul.f32 %v536, %v536
        %v633 = vmul.f32 %v573, %v573
        %v634 = vmul.f32 %v574, %v574
        %v635 = vmul.f32 %v575, %v575
        %v636 = vmul.f32 %v576, %v576
        %v637 = vmul.f32 %v577, %v577
        %v638 = vmul.f32 %v578, %v578
        %v639 = vmul.f32 %v579, %v579
        %v640 = vmul.f32 %v580, %v580
        %v641 = vadd.f32 %v625, %v633
        %v642 = vadd.f32 %v626, %v634
        %v643 = vadd.f32 %v627, %v635
        %v644 = vadd.f32 %v628, %v636
        %v645 = vadd.f32 %v629, %v637
        %v646 = vadd.f32 %v630, %v638
        %v647 = vadd.f32 %v631, %v639
        %v648 = vadd.f32 %v632, %v640
        %v649 = vmul.f32 %v617, %v617
        %v650 = vmul.f32 %v618, %v618
        %v651 = vmul.f32 %v619, %v619
        %v652 = vmul.f32 %v620, %v620
        %v653 = vmul.f32 %v621, %v621
        %v654 = vmul.f32 %v622, %v622
        %v655 = vmul.f32 %v623, %v623
        %v656 = vmul.f32 %v624, %v624
        %v657 = vadd.f32 %v641, %v649
        %v658 = vadd.f32 %v642, %v650
        %v659 = vadd.f32 %v643, %v651
        %v660 = vadd.f32 %v644, %v652
        %v661 = vadd.f32 %v645, %v653
        %v662 = vadd.f32 %v646, %v654
        %v663 = vadd.f32 %v647, %v655
        %v664 = vadd.f32 %v648, %v656
        %v665 = vadd.f32 %v657, 1e-08
        %v666 = vadd.f32 %v658, 1e-08
        %v667 = vadd.f32 %v659, 1e-08
        %v668 = vadd.f32 %v660, 1e-08
        %v669 = vadd.f32 %v661, 1e-08
        %v670 = vadd.f32 %v662, 1e-08
        %v671 = vadd.f32 %v663, 1e-08
        %v672 = vadd.f32 %v664, 1e-08
        %v673 = vrcp.pop %v665
        %v674 = vmul.f32 1.0, %v673
        %v675 = vrcp.pop %v666
        %v676 = vmul.f32 1.0, %v675
        %v677 = vrcp.pop %v667
        %v678 = vmul.f32 1.0, %v677
        %v679 = vrcp.pop %v668
        %v680 = vmul.f32 1.0, %v679
        %v681 = vrcp.pop %v669
        %v682 = vmul.f32 1.0, %v681
        %v683 = vrcp.pop %v670
        %v684 = vmul.f32 1.0, %v683
        %v685 = vrcp.pop %v671
        %v686 = vmul.f32 1.0, %v685
        %v687 = vrcp.pop %v672
        %v688 = vmul.f32 1.0, %v687
        %v689 = vlaneseq
        %v690 = vand.u32 %v689, 127
        %v699 = vand.u32 %v657, 4294967280
        %v700 = vand.u32 %v658, 4294967280
        %v701 = vand.u32 %v659, 4294967280
        %v702 = vand.u32 %v660, 4294967280
        %v703 = vand.u32 %v661, 4294967280
        %v704 = vand.u32 %v662, 4294967280
        %v705 = vand.u32 %v663, 4294967280
        %v706 = vand.u32 %v664, 4294967280
        %v707 = vor.u32 %v699, %v690
        %v708 = vor.u32 %v700, %v690
        %v709 = vor.u32 %v701, %v690
        %v710 = vor.u32 %v702, %v690
        %v711 = vor.u32 %v703, %v690
        %v712 = vor.u32 %v704, %v690
        %v713 = vor.u32 %v705, %v690
        %v714 = vor.u32 %v706, %v690
        %vm715 = vcmask 130048
        %v716 = vsel %vm715, %v707, 2147483647
        %v717 = vand.u32 %v716, 65535
        %v718 = vshra.s32 %v716, 16
        %v719 = vcvt.s32.f32 %v717
        %v720 = vcvt.s32.f32 %v718
        %721 = vmin.xlane.f32.xlu0 %v720
        %v722 = vpop.xlane.xlu0 %721
        %vm723 = vcmp.eq.f32.partialorder %v720, %v722
        %v724 = vsel %vm723, %v719, inf
        %725 = vmin.xlane.f32.xlu0 %v724
        %v726 = vpop.xlane.xlu0 %725
        %v727 = vcvt.f32.s32 %v726
        %v728 = vcvt.f32.s32 %v722
        %v729 = vshll.u32 %v728, 16
        %v730 = vadd.s32 %v729, %v727
        %v731 = vsel %vm715, %v708, 2147483647
        %v732 = vand.u32 %v731, 65535
        %v733 = vshra.s32 %v731, 16
        %v734 = vcvt.s32.f32 %v732
        %v735 = vcvt.s32.f32 %v733
        %736 = vmin.xlane.f32.xlu0 %v735
        %v737 = vpop.xlane.xlu0 %736
        %vm738 = vcmp.eq.f32.partialorder %v735, %v737
        %v739 = vsel %vm738, %v734, inf
        %740 = vmin.xlane.f32.xlu0 %v739
        %v741 = vpop.xlane.xlu0 %740
        %v742 = vcvt.f32.s32 %v741
        %v743 = vcvt.f32.s32 %v737
        %v744 = vshll.u32 %v743, 16
        %v745 = vadd.s32 %v744, %v742
        %v746 = vsel %vm715, %v709, 2147483647
        %v747 = vand.u32 %v746, 65535
        %v748 = vshra.s32 %v746, 16
        %v749 = vcvt.s32.f32 %v747
        %v750 = vcvt.s32.f32 %v748
        %751 = vmin.xlane.f32.xlu0 %v750
        %v752 = vpop.xlane.xlu0 %751
        %vm753 = vcmp.eq.f32.partialorder %v750, %v752
        %v754 = vsel %vm753, %v749, inf
        %755 = vmin.xlane.f32.xlu0 %v754
        %v756 = vpop.xlane.xlu0 %755
        %v757 = vcvt.f32.s32 %v756
        %v758 = vcvt.f32.s32 %v752
        %v759 = vshll.u32 %v758, 16
        %v760 = vadd.s32 %v759, %v757
        %v761 = vsel %vm715, %v710, 2147483647
        %v762 = vand.u32 %v761, 65535
        %v763 = vshra.s32 %v761, 16
        %v764 = vcvt.s32.f32 %v762
        %v765 = vcvt.s32.f32 %v763
        %766 = vmin.xlane.f32.xlu0 %v765
        %v767 = vpop.xlane.xlu0 %766
        %vm768 = vcmp.eq.f32.partialorder %v765, %v767
        %v769 = vsel %vm768, %v764, inf
        %770 = vmin.xlane.f32.xlu0 %v769
        %v771 = vpop.xlane.xlu0 %770
        %v772 = vcvt.f32.s32 %v771
        %v773 = vcvt.f32.s32 %v767
        %v774 = vshll.u32 %v773, 16
        %v775 = vadd.s32 %v774, %v772
        %v776 = vsel %vm715, %v711, 2147483647
        %v777 = vand.u32 %v776, 65535
        %v778 = vshra.s32 %v776, 16
        %v779 = vcvt.s32.f32 %v777
        %v780 = vcvt.s32.f32 %v778
        %781 = vmin.xlane.f32.xlu0 %v780
        %v782 = vpop.xlane.xlu0 %781
        %vm783 = vcmp.eq.f32.partialorder %v780, %v782
        %v784 = vsel %vm783, %v779, inf
        %785 = vmin.xlane.f32.xlu0 %v784
        %v786 = vpop.xlane.xlu0 %785
        %v787 = vcvt.f32.s32 %v786
        %v788 = vcvt.f32.s32 %v782
        %v789 = vshll.u32 %v788, 16
        %v790 = vadd.s32 %v789, %v787
        %v791 = vsel %vm715, %v712, 2147483647
        %v792 = vand.u32 %v791, 65535
        %v793 = vshra.s32 %v791, 16
        %v794 = vcvt.s32.f32 %v792
        %v795 = vcvt.s32.f32 %v793
        %796 = vmin.xlane.f32.xlu0 %v795
        %v797 = vpop.xlane.xlu0 %796
        %vm798 = vcmp.eq.f32.partialorder %v795, %v797
        %v799 = vsel %vm798, %v794, inf
        %800 = vmin.xlane.f32.xlu0 %v799
        %v801 = vpop.xlane.xlu0 %800
        %v802 = vcvt.f32.s32 %v801
        %v803 = vcvt.f32.s32 %v797
        %v804 = vshll.u32 %v803, 16
        %v805 = vadd.s32 %v804, %v802
        %v806 = vsel %vm715, %v713, 2147483647
        %v807 = vand.u32 %v806, 65535
        %v808 = vshra.s32 %v806, 16
        %v809 = vcvt.s32.f32 %v807
        %v810 = vcvt.s32.f32 %v808
        %811 = vmin.xlane.f32.xlu0 %v810
        %v812 = vpop.xlane.xlu0 %811
        %vm813 = vcmp.eq.f32.partialorder %v810, %v812
        %v814 = vsel %vm813, %v809, inf
        %815 = vmin.xlane.f32.xlu0 %v814
        %v816 = vpop.xlane.xlu0 %815
        %v817 = vcvt.f32.s32 %v816
        %v818 = vcvt.f32.s32 %v812
        %v819 = vshll.u32 %v818, 16
        %v820 = vadd.s32 %v819, %v817
        %v821 = vsel %vm715, %v714, 2147483647
        %v822 = vand.u32 %v821, 65535
        %v823 = vshra.s32 %v821, 16
        %v824 = vcvt.s32.f32 %v822
        %v825 = vcvt.s32.f32 %v823
        %826 = vmin.xlane.f32.xlu0 %v825
        %v827 = vpop.xlane.xlu0 %826
        %vm828 = vcmp.eq.f32.partialorder %v825, %v827
        %v829 = vsel %vm828, %v824, inf
        %830 = vmin.xlane.f32.xlu0 %v829
        %v831 = vpop.xlane.xlu0 %830
        %v832 = vcvt.f32.s32 %v831
        %v833 = vcvt.f32.s32 %v827
        %v834 = vshll.u32 %v833, 16
        %v835 = vadd.s32 %v834, %v832
        %v836 = vand.u32 %v730, 15
        %v837 = vand.u32 %v745, 15
        %v838 = vand.u32 %v760, 15
        %v839 = vand.u32 %v775, 15
        %v840 = vand.u32 %v790, 15
        %v841 = vand.u32 %v805, 15
        %v842 = vand.u32 %v820, 15
        %v843 = vand.u32 %v835, 15
        %vm844 = vcmp.eq.s32.totalorder %v690, %v836
        %vm845 = vcmp.eq.s32.totalorder %v690, %v837
        %vm846 = vcmp.eq.s32.totalorder %v690, %v838
        %vm847 = vcmp.eq.s32.totalorder %v690, %v839
        %vm848 = vcmp.eq.s32.totalorder %v690, %v840
        %vm849 = vcmp.eq.s32.totalorder %v690, %v841
        %vm850 = vcmp.eq.s32.totalorder %v690, %v842
        %vm851 = vcmp.eq.s32.totalorder %v690, %v843
        %v852 = vsel %vm844, %v674, 0.0
        %v853 = vsel %vm845, %v676, 0.0
        %v854 = vsel %vm846, %v678, 0.0
        %v855 = vsel %vm847, %v680, 0.0
        %v856 = vsel %vm848, %v682, 0.0
        %v857 = vsel %vm849, %v684, 0.0
        %v858 = vsel %vm850, %v686, 0.0
        %v859 = vsel %vm851, %v688, 0.0
        %v860 = vadd.f32 %v852, 0.0
        %v861 = vadd.f32 %v853, 0.0
        %v862 = vadd.f32 %v854, 0.0
        %v863 = vadd.f32 %v855, 0.0
        %v864 = vadd.f32 %v856, 0.0
        %v865 = vadd.f32 %v857, 0.0
        %v866 = vadd.f32 %v858, 0.0
        %v867 = vadd.f32 %v859, 0.0
        %v868 = vsel %vm844, 2139095039, %v707
        %v869 = vsel %vm845, 2139095039, %v708
        %v870 = vsel %vm846, 2139095039, %v709
        %v871 = vsel %vm847, 2139095039, %v710
        %v872 = vsel %vm848, 2139095039, %v711
        %v873 = vsel %vm849, 2139095039, %v712
        %v874 = vsel %vm850, 2139095039, %v713
        %v875 = vsel %vm851, 2139095039, %v714
        %v876 = vsel %vm715, %v868, 2147483647
        %v877 = vand.u32 %v876, 65535
        %v878 = vshra.s32 %v876, 16
        %v879 = vcvt.s32.f32 %v877
        %v880 = vcvt.s32.f32 %v878
        %881 = vmin.xlane.f32.xlu0 %v880
        %v882 = vpop.xlane.xlu0 %881
        %vm883 = vcmp.eq.f32.partialorder %v880, %v882
        %v884 = vsel %vm883, %v879, inf
        %885 = vmin.xlane.f32.xlu0 %v884
        %v886 = vpop.xlane.xlu0 %885
        %v887 = vcvt.f32.s32 %v886
        %v888 = vcvt.f32.s32 %v882
        %v889 = vshll.u32 %v888, 16
        %v890 = vadd.s32 %v889, %v887
        %v891 = vsel %vm715, %v869, 2147483647
        %v892 = vand.u32 %v891, 65535
        %v893 = vshra.s32 %v891, 16
        %v894 = vcvt.s32.f32 %v892
        %v895 = vcvt.s32.f32 %v893
        %896 = vmin.xlane.f32.xlu0 %v895
        %v897 = vpop.xlane.xlu0 %896
        %vm898 = vcmp.eq.f32.partialorder %v895, %v897
        %v899 = vsel %vm898, %v894, inf
        %900 = vmin.xlane.f32.xlu0 %v899
        %v901 = vpop.xlane.xlu0 %900
        %v902 = vcvt.f32.s32 %v901
        %v903 = vcvt.f32.s32 %v897
        %v904 = vshll.u32 %v903, 16
        %v905 = vadd.s32 %v904, %v902
        %v906 = vsel %vm715, %v870, 2147483647
        %v907 = vand.u32 %v906, 65535
        %v908 = vshra.s32 %v906, 16
        %v909 = vcvt.s32.f32 %v907
        %v910 = vcvt.s32.f32 %v908
        %911 = vmin.xlane.f32.xlu0 %v910
        %v912 = vpop.xlane.xlu0 %911
        %vm913 = vcmp.eq.f32.partialorder %v910, %v912
        %v914 = vsel %vm913, %v909, inf
        %915 = vmin.xlane.f32.xlu0 %v914
        %v916 = vpop.xlane.xlu0 %915
        %v917 = vcvt.f32.s32 %v916
        %v918 = vcvt.f32.s32 %v912
        %v919 = vshll.u32 %v918, 16
        %v920 = vadd.s32 %v919, %v917
        %v921 = vsel %vm715, %v871, 2147483647
        %v922 = vand.u32 %v921, 65535
        %v923 = vshra.s32 %v921, 16
        %v924 = vcvt.s32.f32 %v922
        %v925 = vcvt.s32.f32 %v923
        %926 = vmin.xlane.f32.xlu0 %v925
        %v927 = vpop.xlane.xlu0 %926
        %vm928 = vcmp.eq.f32.partialorder %v925, %v927
        %v929 = vsel %vm928, %v924, inf
        %930 = vmin.xlane.f32.xlu0 %v929
        %v931 = vpop.xlane.xlu0 %930
        %v932 = vcvt.f32.s32 %v931
        %v933 = vcvt.f32.s32 %v927
        %v934 = vshll.u32 %v933, 16
        %v935 = vadd.s32 %v934, %v932
        %v936 = vsel %vm715, %v872, 2147483647
        %v937 = vand.u32 %v936, 65535
        %v938 = vshra.s32 %v936, 16
        %v939 = vcvt.s32.f32 %v937
        %v940 = vcvt.s32.f32 %v938
        %941 = vmin.xlane.f32.xlu0 %v940
        %v942 = vpop.xlane.xlu0 %941
        %vm943 = vcmp.eq.f32.partialorder %v940, %v942
        %v944 = vsel %vm943, %v939, inf
        %945 = vmin.xlane.f32.xlu0 %v944
        %v946 = vpop.xlane.xlu0 %945
        %v947 = vcvt.f32.s32 %v946
        %v948 = vcvt.f32.s32 %v942
        %v949 = vshll.u32 %v948, 16
        %v950 = vadd.s32 %v949, %v947
        %v951 = vsel %vm715, %v873, 2147483647
        %v952 = vand.u32 %v951, 65535
        %v953 = vshra.s32 %v951, 16
        %v954 = vcvt.s32.f32 %v952
        %v955 = vcvt.s32.f32 %v953
        %956 = vmin.xlane.f32.xlu0 %v955
        %v957 = vpop.xlane.xlu0 %956
        %vm958 = vcmp.eq.f32.partialorder %v955, %v957
        %v959 = vsel %vm958, %v954, inf
        %960 = vmin.xlane.f32.xlu0 %v959
        %v961 = vpop.xlane.xlu0 %960
        %v962 = vcvt.f32.s32 %v961
        %v963 = vcvt.f32.s32 %v957
        %v964 = vshll.u32 %v963, 16
        %v965 = vadd.s32 %v964, %v962
        %v966 = vsel %vm715, %v874, 2147483647
        %v967 = vand.u32 %v966, 65535
        %v968 = vshra.s32 %v966, 16
        %v969 = vcvt.s32.f32 %v967
        %v970 = vcvt.s32.f32 %v968
        %971 = vmin.xlane.f32.xlu0 %v970
        %v972 = vpop.xlane.xlu0 %971
        %vm973 = vcmp.eq.f32.partialorder %v970, %v972
        %v974 = vsel %vm973, %v969, inf
        %975 = vmin.xlane.f32.xlu0 %v974
        %v976 = vpop.xlane.xlu0 %975
        %v977 = vcvt.f32.s32 %v976
        %v978 = vcvt.f32.s32 %v972
        %v979 = vshll.u32 %v978, 16
        %v980 = vadd.s32 %v979, %v977
        %v981 = vsel %vm715, %v875, 2147483647
        %v982 = vand.u32 %v981, 65535
        %v983 = vshra.s32 %v981, 16
        %v984 = vcvt.s32.f32 %v982
        %v985 = vcvt.s32.f32 %v983
        %986 = vmin.xlane.f32.xlu0 %v985
        %v987 = vpop.xlane.xlu0 %986
        %vm988 = vcmp.eq.f32.partialorder %v985, %v987
        %v989 = vsel %vm988, %v984, inf
        %990 = vmin.xlane.f32.xlu0 %v989
        %v991 = vpop.xlane.xlu0 %990
        %v992 = vcvt.f32.s32 %v991
        %v993 = vcvt.f32.s32 %v987
        %v994 = vshll.u32 %v993, 16
        %v995 = vadd.s32 %v994, %v992
        %v996 = vand.u32 %v890, 15
        %v997 = vand.u32 %v905, 15
        %v998 = vand.u32 %v920, 15
        %v999 = vand.u32 %v935, 15
        %v1000 = vand.u32 %v950, 15
        %v1001 = vand.u32 %v965, 15
        %v1002 = vand.u32 %v980, 15
        %v1003 = vand.u32 %v995, 15
        %vm1004 = vcmp.eq.s32.totalorder %v690, %v996
        %vm1005 = vcmp.eq.s32.totalorder %v690, %v997
        %vm1006 = vcmp.eq.s32.totalorder %v690, %v998
        %vm1007 = vcmp.eq.s32.totalorder %v690, %v999
        %vm1008 = vcmp.eq.s32.totalorder %v690, %v1000
        %vm1009 = vcmp.eq.s32.totalorder %v690, %v1001
        %vm1010 = vcmp.eq.s32.totalorder %v690, %v1002
        %vm1011 = vcmp.eq.s32.totalorder %v690, %v1003
        %v1012 = vsel %vm1004, %v674, 0.0
        %v1013 = vsel %vm1005, %v676, 0.0
        %v1014 = vsel %vm1006, %v678, 0.0
        %v1015 = vsel %vm1007, %v680, 0.0
        %v1016 = vsel %vm1008, %v682, 0.0
        %v1017 = vsel %vm1009, %v684, 0.0
        %v1018 = vsel %vm1010, %v686, 0.0
        %v1019 = vsel %vm1011, %v688, 0.0
        %v1020 = vadd.f32 %v860, %v1012
        %v1021 = vadd.f32 %v861, %v1013
        %v1022 = vadd.f32 %v862, %v1014
        %v1023 = vadd.f32 %v863, %v1015
        %v1024 = vadd.f32 %v864, %v1016
        %v1025 = vadd.f32 %v865, %v1017
        %v1026 = vadd.f32 %v866, %v1018
        %v1027 = vadd.f32 %v867, %v1019
        %v1028 = vsel %vm1004, 2139095039, %v868
        %v1029 = vsel %vm1005, 2139095039, %v869
        %v1030 = vsel %vm1006, 2139095039, %v870
        %v1031 = vsel %vm1007, 2139095039, %v871
        %v1032 = vsel %vm1008, 2139095039, %v872
        %v1033 = vsel %vm1009, 2139095039, %v873
        %v1034 = vsel %vm1010, 2139095039, %v874
        %v1035 = vsel %vm1011, 2139095039, %v875
        %v1036 = vsel %vm715, %v1028, 2147483647
        %v1037 = vand.u32 %v1036, 65535
        %v1038 = vshra.s32 %v1036, 16
        %v1039 = vcvt.s32.f32 %v1037
        %v1040 = vcvt.s32.f32 %v1038
        %1041 = vmin.xlane.f32.xlu0 %v1040
        %v1042 = vpop.xlane.xlu0 %1041
        %vm1043 = vcmp.eq.f32.partialorder %v1040, %v1042
        %v1044 = vsel %vm1043, %v1039, inf
        %1045 = vmin.xlane.f32.xlu0 %v1044
        %v1046 = vpop.xlane.xlu0 %1045
        %v1047 = vcvt.f32.s32 %v1046
        %v1048 = vcvt.f32.s32 %v1042
        %v1049 = vshll.u32 %v1048, 16
        %v1050 = vadd.s32 %v1049, %v1047
        %v1051 = vsel %vm715, %v1029, 2147483647
        %v1052 = vand.u32 %v1051, 65535
        %v1053 = vshra.s32 %v1051, 16
        %v1054 = vcvt.s32.f32 %v1052
        %v1055 = vcvt.s32.f32 %v1053
        %1056 = vmin.xlane.f32.xlu0 %v1055
        %v1057 = vpop.xlane.xlu0 %1056
        %vm1058 = vcmp.eq.f32.partialorder %v1055, %v1057
        %v1059 = vsel %vm1058, %v1054, inf
        %1060 = vmin.xlane.f32.xlu0 %v1059
        %v1061 = vpop.xlane.xlu0 %1060
        %v1062 = vcvt.f32.s32 %v1061
        %v1063 = vcvt.f32.s32 %v1057
        %v1064 = vshll.u32 %v1063, 16
        %v1065 = vadd.s32 %v1064, %v1062
        %v1066 = vsel %vm715, %v1030, 2147483647
        %v1067 = vand.u32 %v1066, 65535
        %v1068 = vshra.s32 %v1066, 16
        %v1069 = vcvt.s32.f32 %v1067
        %v1070 = vcvt.s32.f32 %v1068
        %1071 = vmin.xlane.f32.xlu0 %v1070
        %v1072 = vpop.xlane.xlu0 %1071
        %vm1073 = vcmp.eq.f32.partialorder %v1070, %v1072
        %v1074 = vsel %vm1073, %v1069, inf
        %1075 = vmin.xlane.f32.xlu0 %v1074
        %v1076 = vpop.xlane.xlu0 %1075
        %v1077 = vcvt.f32.s32 %v1076
        %v1078 = vcvt.f32.s32 %v1072
        %v1079 = vshll.u32 %v1078, 16
        %v1080 = vadd.s32 %v1079, %v1077
        %v1081 = vsel %vm715, %v1031, 2147483647
        %v1082 = vand.u32 %v1081, 65535
        %v1083 = vshra.s32 %v1081, 16
        %v1084 = vcvt.s32.f32 %v1082
        %v1085 = vcvt.s32.f32 %v1083
        %1086 = vmin.xlane.f32.xlu0 %v1085
        %v1087 = vpop.xlane.xlu0 %1086
        %vm1088 = vcmp.eq.f32.partialorder %v1085, %v1087
        %v1089 = vsel %vm1088, %v1084, inf
        %1090 = vmin.xlane.f32.xlu0 %v1089
        %v1091 = vpop.xlane.xlu0 %1090
        %v1092 = vcvt.f32.s32 %v1091
        %v1093 = vcvt.f32.s32 %v1087
        %v1094 = vshll.u32 %v1093, 16
        %v1095 = vadd.s32 %v1094, %v1092
        %v1096 = vsel %vm715, %v1032, 2147483647
        %v1097 = vand.u32 %v1096, 65535
        %v1098 = vshra.s32 %v1096, 16
        %v1099 = vcvt.s32.f32 %v1097
        %v1100 = vcvt.s32.f32 %v1098
        %1101 = vmin.xlane.f32.xlu0 %v1100
        %v1102 = vpop.xlane.xlu0 %1101
        %vm1103 = vcmp.eq.f32.partialorder %v1100, %v1102
        %v1104 = vsel %vm1103, %v1099, inf
        %1105 = vmin.xlane.f32.xlu0 %v1104
        %v1106 = vpop.xlane.xlu0 %1105
        %v1107 = vcvt.f32.s32 %v1106
        %v1108 = vcvt.f32.s32 %v1102
        %v1109 = vshll.u32 %v1108, 16
        %v1110 = vadd.s32 %v1109, %v1107
        %v1111 = vsel %vm715, %v1033, 2147483647
        %v1112 = vand.u32 %v1111, 65535
        %v1113 = vshra.s32 %v1111, 16
        %v1114 = vcvt.s32.f32 %v1112
        %v1115 = vcvt.s32.f32 %v1113
        %1116 = vmin.xlane.f32.xlu0 %v1115
        %v1117 = vpop.xlane.xlu0 %1116
        %vm1118 = vcmp.eq.f32.partialorder %v1115, %v1117
        %v1119 = vsel %vm1118, %v1114, inf
        %1120 = vmin.xlane.f32.xlu0 %v1119
        %v1121 = vpop.xlane.xlu0 %1120
        %v1122 = vcvt.f32.s32 %v1121
        %v1123 = vcvt.f32.s32 %v1117
        %v1124 = vshll.u32 %v1123, 16
        %v1125 = vadd.s32 %v1124, %v1122
        %v1126 = vsel %vm715, %v1034, 2147483647
        %v1127 = vand.u32 %v1126, 65535
        %v1128 = vshra.s32 %v1126, 16
        %v1129 = vcvt.s32.f32 %v1127
        %v1130 = vcvt.s32.f32 %v1128
        %1131 = vmin.xlane.f32.xlu0 %v1130
        %v1132 = vpop.xlane.xlu0 %1131
        %vm1133 = vcmp.eq.f32.partialorder %v1130, %v1132
        %v1134 = vsel %vm1133, %v1129, inf
        %1135 = vmin.xlane.f32.xlu0 %v1134
        %v1136 = vpop.xlane.xlu0 %1135
        %v1137 = vcvt.f32.s32 %v1136
        %v1138 = vcvt.f32.s32 %v1132
        %v1139 = vshll.u32 %v1138, 16
        %v1140 = vadd.s32 %v1139, %v1137
        %v1141 = vsel %vm715, %v1035, 2147483647
        %v1142 = vand.u32 %v1141, 65535
        %v1143 = vshra.s32 %v1141, 16
        %v1144 = vcvt.s32.f32 %v1142
        %v1145 = vcvt.s32.f32 %v1143
        %1146 = vmin.xlane.f32.xlu0 %v1145
        %v1147 = vpop.xlane.xlu0 %1146
        %vm1148 = vcmp.eq.f32.partialorder %v1145, %v1147
        %v1149 = vsel %vm1148, %v1144, inf
        %1150 = vmin.xlane.f32.xlu0 %v1149
        %v1151 = vpop.xlane.xlu0 %1150
        %v1152 = vcvt.f32.s32 %v1151
        %v1153 = vcvt.f32.s32 %v1147
        %v1154 = vshll.u32 %v1153, 16
        %v1155 = vadd.s32 %v1154, %v1152
        %v1156 = vand.u32 %v1050, 15
        %v1157 = vand.u32 %v1065, 15
        %v1158 = vand.u32 %v1080, 15
        %v1159 = vand.u32 %v1095, 15
        %v1160 = vand.u32 %v1110, 15
        %v1161 = vand.u32 %v1125, 15
        %v1162 = vand.u32 %v1140, 15
        %v1163 = vand.u32 %v1155, 15
        %vm1164 = vcmp.eq.s32.totalorder %v690, %v1156
        %vm1165 = vcmp.eq.s32.totalorder %v690, %v1157
        %vm1166 = vcmp.eq.s32.totalorder %v690, %v1158
        %vm1167 = vcmp.eq.s32.totalorder %v690, %v1159
        %vm1168 = vcmp.eq.s32.totalorder %v690, %v1160
        %vm1169 = vcmp.eq.s32.totalorder %v690, %v1161
        %vm1170 = vcmp.eq.s32.totalorder %v690, %v1162
        %vm1171 = vcmp.eq.s32.totalorder %v690, %v1163
        %v1172 = vsel %vm1164, %v674, 0.0
        %v1173 = vsel %vm1165, %v676, 0.0
        %v1174 = vsel %vm1166, %v678, 0.0
        %v1175 = vsel %vm1167, %v680, 0.0
        %v1176 = vsel %vm1168, %v682, 0.0
        %v1177 = vsel %vm1169, %v684, 0.0
        %v1178 = vsel %vm1170, %v686, 0.0
        %v1179 = vsel %vm1171, %v688, 0.0
        %v1180 = vadd.f32 %v1020, %v1172
        %v1181 = vadd.f32 %v1021, %v1173
        %v1182 = vadd.f32 %v1022, %v1174
        %v1183 = vadd.f32 %v1023, %v1175
        %v1184 = vadd.f32 %v1024, %v1176
        %v1185 = vadd.f32 %v1025, %v1177
        %v1186 = vadd.f32 %v1026, %v1178
        %v1187 = vadd.f32 %v1027, %v1179
        %v1188 = vsel %vm715, %v1180, 0.0
        %1189 = vadd.xlane.f32.xlu0 %v1188
        %v1190 = vpop.xlane.xlu0 %1189
        %v1191 = vsel %vm715, %v1181, 0.0
        %1192 = vadd.xlane.f32.xlu0 %v1191
        %v1193 = vpop.xlane.xlu0 %1192
        %v1194 = vsel %vm715, %v1182, 0.0
        %1195 = vadd.xlane.f32.xlu0 %v1194
        %v1196 = vpop.xlane.xlu0 %1195
        %v1197 = vsel %vm715, %v1183, 0.0
        %1198 = vadd.xlane.f32.xlu0 %v1197
        %v1199 = vpop.xlane.xlu0 %1198
        %v1200 = vsel %vm715, %v1184, 0.0
        %1201 = vadd.xlane.f32.xlu0 %v1200
        %v1202 = vpop.xlane.xlu0 %1201
        %v1203 = vsel %vm715, %v1185, 0.0
        %1204 = vadd.xlane.f32.xlu0 %v1203
        %v1205 = vpop.xlane.xlu0 %1204
        %v1206 = vsel %vm715, %v1186, 0.0
        %1207 = vadd.xlane.f32.xlu0 %v1206
        %v1208 = vpop.xlane.xlu0 %1207
        %v1209 = vsel %vm715, %v1187, 0.0
        %1210 = vadd.xlane.f32.xlu0 %v1209
        %v1211 = vpop.xlane.xlu0 %1210
        %v1212 = vpack.c.bf16 %v1181, %v1180
        %v1213 = vpack.c.bf16 %v1183, %v1182
        %v1214 = vpack.c.bf16 %v1185, %v1184
        %v1215 = vpack.c.bf16 %v1187, %v1186
        %v1218 = vunpack.c.l.b16 %v483
        %v1219 = vunpack.c.l.b16 %v484
        %v1220 = vpack.c.b16 %v1219, %v1218
        %v1223 = vsel %vm715, %v1212, 0
        %v1226 = vsel %vm715, %v1213, 0
        %v1229 = vsel %vm715, %v1214, 0
        %v1232 = vsel %vm715, %v1215, 0
        %1234 = vmatprep.subr.bf16.mxu0 0
        %1235 = vmatpush1.bf16.msra.mxu0 0
        %1236 = vmatprep.subr.bf16.mxu0 0
        %1237 = vmatpush1.bf16.msra.mxu0 0
        %1238 = vmatprep.subr.bf16.mxu0 0
        %1239 = vmatpush1.bf16.msra.mxu0 0
        %1240 = vmatprep.subr.bf16.mxu0 0
        %1241 = vmatpush1.bf16.msra.mxu0 0
        %1242 = vmatprep.subr.bf16.mxu0 0
        %1243 = vmatpush1.bf16.msra.mxu0 0
        %1244 = vmatprep.subr.bf16.mxu0 0
        %1245 = vmatpush1.bf16.msra.mxu0 0
        %1246 = vmatprep.subr.bf16.mxu0 0
        %1247 = vmatpush1.bf16.msra.mxu0 0
        %1248 = vmatprep.subr.bf16.mxu0 0
        %1249 = vmatpush1.bf16.msra.mxu0 %v1220
        %1250 = vmatprep.subr.bf16.mxu0 0
        %1251 = vmatpush2.bf16.msra.mxu0 0
        %1252 = vmatprep.subr.bf16.mxu0 0
        %1253 = vmatpush2.bf16.msra.mxu0 0
        %1254 = vmatprep.subr.bf16.mxu0 0
        %1255 = vmatpush2.bf16.msra.mxu0 0
        %1256 = vmatprep.subr.bf16.mxu0 0
        %1257 = vmatpush2.bf16.msra.mxu0 0
        %1258 = vmatprep.subr.bf16.mxu0 0
        %1259 = vmatpush2.bf16.msra.mxu0 0
        %1260 = vmatprep.subr.bf16.mxu0 0
        %1261 = vmatpush2.bf16.msra.mxu0 0
        %1262 = vmatprep.subr.bf16.mxu0 0
        %1263 = vmatpush2.bf16.msra.mxu0 0
        %1264 = vmatprep.subr.bf16.mxu0 0
        %1265 = vmatpush2.bf16.msra.mxu0 0
        %1266 = vmatprep.mubr.bf16.mxu0 0
        %1267 = vmatmul.mubr.bf16.gmra.mxu0 %v1223
        %v1268 = vpop.f32.mrf.mxu0
        %v1269 = vadd.f32 0.0, %v1268
        %v1270 = vpop.f32.mrf.mxu0
        %v1271 = vpop.f32.mrf.mxu0
        %v1272 = vadd.f32 0.0, %v1271
        %v1273 = vpop.f32.mrf.mxu0
        %1274 = vmatprep.mubr.bf16.mxu0 0
        %1275 = vmatmul.mubr.bf16.gmra.mxu0 %v1226
        %v1276 = vpop.f32.mrf.mxu0
        %v1277 = vadd.f32 0.0, %v1276
        %v1278 = vpop.f32.mrf.mxu0
        %v1279 = vpop.f32.mrf.mxu0
        %v1280 = vadd.f32 0.0, %v1279
        %v1281 = vpop.f32.mrf.mxu0
        %1282 = vmatprep.mubr.bf16.mxu0 0
        %1283 = vmatmul.mubr.bf16.gmra.mxu0 %v1229
        %v1284 = vpop.f32.mrf.mxu0
        %v1285 = vadd.f32 0.0, %v1284
        %v1286 = vpop.f32.mrf.mxu0
        %v1287 = vpop.f32.mrf.mxu0
        %v1288 = vadd.f32 0.0, %v1287
        %v1289 = vpop.f32.mrf.mxu0
        %1290 = vmatprep.mubr.bf16.mxu0 0
        %1291 = vmatmul.mubr.bf16.gmra.mxu0 %v1232
        %v1292 = vpop.f32.mrf.mxu0
        %v1293 = vadd.f32 0.0, %v1292
        %v1294 = vpop.f32.mrf.mxu0
        %v1295 = vpop.f32.mrf.mxu0
        %v1296 = vadd.f32 0.0, %v1295
        %v1297 = vpop.f32.mrf.mxu0
        %1298 = vdwg.mxu0
        %v1299 = vrcp.pop %v1190
        %v1300 = vrcp.pop %v1193
        %v1301 = vrcp.pop %v1196
        %v1302 = vrcp.pop %v1199
        %v1303 = vrcp.pop %v1202
        %v1304 = vrcp.pop %v1205
        %v1305 = vrcp.pop %v1208
        %v1306 = vrcp.pop %v1211
        %v1307 = vmul.f32 %v1269, %v1299
        %v1308 = vmul.f32 %v1272, %v1300
        %v1309 = vmul.f32 %v1277, %v1301
        %v1310 = vmul.f32 %v1280, %v1302
        %v1311 = vmul.f32 %v1285, %v1303
        %v1312 = vmul.f32 %v1288, %v1304
        %v1313 = vmul.f32 %v1293, %v1305
        %v1314 = vmul.f32 %v1296, %v1306
        %v1315 = vld [vmem:[%s4] sm:$0xf]
        %v1316 = vld [vmem:[%s4 + $0x4] sm:$0xf]
        %v1317 = vld [vmem:[%s4 + $0x8] sm:$0xf]
        %v1318 = vld [vmem:[%s4 + $0xc] sm:$0xf]
        %v1319 = vld [vmem:[%s4 + $0x10] sm:$0xf]
        %v1320 = vld [vmem:[%s4 + $0x14] sm:$0xf]
        %v1321 = vld [vmem:[%s4 + $0x18] sm:$0xf]
        %v1322 = vld [vmem:[%s4 + $0x1c] sm:$0xf]
        %v1323 = vld [vmem:[%s4 + $0x20] sm:$0xf]
        %v1324 = vld [vmem:[%s4 + $0x24] sm:$0xf]
        %v1325 = vld [vmem:[%s4 + $0x28] sm:$0xf]
        %v1326 = vld [vmem:[%s4 + $0x2c] sm:$0xf]
        %v1327 = vld [vmem:[%s4 + $0x30] sm:$0xf]
        %v1328 = vld [vmem:[%s4 + $0x34] sm:$0xf]
        %v1329 = vld [vmem:[%s4 + $0x38] sm:$0xf]
        %v1330 = vld [vmem:[%s4 + $0x3c] sm:$0xf]
        %v1331 = vpack.c.bf16 %v1308, %v1307
        %v1332 = vpack.c.bf16 %v1310, %v1309
        %v1333 = vpack.c.bf16 %v1312, %v1311
        %v1334 = vpack.c.bf16 %v1314, %v1313
        %v1335 = vld [vmem:[#allocation2] sm:$0xf]
        %v1336 = vld [vmem:[#allocation2 + $0x4] sm:$0xf]
        %v1337 = vld [vmem:[#allocation2 + $0x8] sm:$0xf]
        %v1338 = vld [vmem:[#allocation2 + $0xc] sm:$0xf]
        %v1339 = vld [vmem:[#allocation2 + $0x10] sm:$0xf]
        %v1340 = vld [vmem:[#allocation2 + $0x14] sm:$0xf]
        %v1341 = vld [vmem:[#allocation2 + $0x18] sm:$0xf]
        %v1342 = vld [vmem:[#allocation2 + $0x1c] sm:$0xf]
        %v1343 = vld [vmem:[#allocation2 + $0x20] sm:$0xf]
        %v1344 = vld [vmem:[#allocation2 + $0x24] sm:$0xf]
        %v1345 = vld [vmem:[#allocation2 + $0x28] sm:$0xf]
        %v1346 = vld [vmem:[#allocation2 + $0x2c] sm:$0xf]
        %v1347 = vld [vmem:[#allocation2 + $0x30] sm:$0xf]
        %v1348 = vld [vmem:[#allocation2 + $0x34] sm:$0xf]
        %v1349 = vld [vmem:[#allocation2 + $0x38] sm:$0xf]
        %v1350 = vld [vmem:[#allocation2 + $0x3c] sm:$0xf]
        %v1367 = vunpack.c.l.b16 %v1335
        %v1368 = vunpack.c.l.b16 %v1336
        %v1369 = vunpack.c.l.b16 %v1337
        %v1370 = vunpack.c.l.b16 %v1338
        %v1371 = vunpack.c.l.b16 %v1339
        %v1372 = vunpack.c.l.b16 %v1340
        %v1373 = vunpack.c.l.b16 %v1341
        %v1374 = vunpack.c.l.b16 %v1342
        %v1375 = vunpack.c.l.b16 %v1343
        %v1376 = vunpack.c.l.b16 %v1344
        %v1377 = vunpack.c.l.b16 %v1345
        %v1378 = vunpack.c.l.b16 %v1346
        %v1379 = vunpack.c.l.b16 %v1347
        %v1380 = vunpack.c.l.b16 %v1348
        %v1381 = vunpack.c.l.b16 %v1349
        %v1382 = vunpack.c.l.b16 %v1350
        %v1383 = vpack.c.b16 %v1368, %v1367
        %v1384 = vpack.c.b16 %v1370, %v1369
        %v1385 = vpack.c.b16 %v1372, %v1371
        %v1386 = vpack.c.b16 %v1374, %v1373
        %v1387 = vpack.c.b16 %v1376, %v1375
        %v1388 = vpack.c.b16 %v1378, %v1377
        %v1389 = vpack.c.b16 %v1380, %v1379
        %v1390 = vpack.c.b16 %v1382, %v1381
        %1399 = vmatprep.subr.bf16.mxu0 0
        %1400 = vmatpush1.bf16.msra.mxu0 %v1390
        %1401 = vmatprep.subr.bf16.mxu0 0
        %1402 = vmatpush1.bf16.msra.mxu0 %v1389
        %1403 = vmatprep.subr.bf16.mxu0 0
        %1404 = vmatpush1.bf16.msra.mxu0 %v1388
        %1405 = vmatprep.subr.bf16.mxu0 0
        %1406 = vmatpush1.bf16.msra.mxu0 %v1387
        %1407 = vmatprep.subr.bf16.mxu0 0
        %1408 = vmatpush1.bf16.msra.mxu0 %v1386
        %1409 = vmatprep.subr.bf16.mxu0 0
        %1410 = vmatpush1.bf16.msra.mxu0 %v1385
        %1411 = vmatprep.subr.bf16.mxu0 0
        %1412 = vmatpush1.bf16.msra.mxu0 %v1384
        %1413 = vmatprep.subr.bf16.mxu0 0
        %1414 = vmatpush1.bf16.msra.mxu0 %v1383
        %1415 = vmatprep.subr.bf16.mxu0 0
        %1416 = vmatpush2.bf16.msra.mxu0 0
        %1417 = vmatprep.subr.bf16.mxu0 0
        %1418 = vmatpush2.bf16.msra.mxu0 0
        %1419 = vmatprep.subr.bf16.mxu0 0
        %1420 = vmatpush2.bf16.msra.mxu0 0
        %1421 = vmatprep.subr.bf16.mxu0 0
        %1422 = vmatpush2.bf16.msra.mxu0 0
        %1423 = vmatprep.subr.bf16.mxu0 0
        %1424 = vmatpush2.bf16.msra.mxu0 0
        %1425 = vmatprep.subr.bf16.mxu0 0
        %1426 = vmatpush2.bf16.msra.mxu0 0
        %1427 = vmatprep.subr.bf16.mxu0 0
        %1428 = vmatpush2.bf16.msra.mxu0 0
        %1429 = vmatprep.subr.bf16.mxu0 0
        %1430 = vmatpush2.bf16.msra.mxu0 0
        %1431 = vmatprep.mubr.bf16.mxu0 0
        %1432 = vmatmul.mubr.bf16.gmra.mxu0 %v1331
        %v1433 = vpop.f32.mrf.mxu0
        %v1434 = vadd.f32 0.0, %v1433
        %v1435 = vpop.f32.mrf.mxu0
        %v1436 = vpop.f32.mrf.mxu0
        %v1437 = vadd.f32 0.0, %v1436
        %v1438 = vpop.f32.mrf.mxu0
        %1439 = vmatprep.mubr.bf16.mxu0 0
        %1440 = vmatmul.mubr.bf16.gmra.mxu0 %v1332
        %v1441 = vpop.f32.mrf.mxu0
        %v1442 = vadd.f32 0.0, %v1441
        %v1443 = vpop.f32.mrf.mxu0
        %v1444 = vpop.f32.mrf.mxu0
        %v1445 = vadd.f32 0.0, %v1444
        %v1446 = vpop.f32.mrf.mxu0
        %1447 = vmatprep.mubr.bf16.mxu0 0
        %1448 = vmatmul.mubr.bf16.gmra.mxu0 %v1333
        %v1449 = vpop.f32.mrf.mxu0
        %v1450 = vadd.f32 0.0, %v1449
        %v1451 = vpop.f32.mrf.mxu0
        %v1452 = vpop.f32.mrf.mxu0
        %v1453 = vadd.f32 0.0, %v1452
        %v1454 = vpop.f32.mrf.mxu0
        %1455 = vmatprep.mubr.bf16.mxu0 0
        %1456 = vmatmul.mubr.bf16.gmra.mxu0 %v1334
        %v1457 = vpop.f32.mrf.mxu0
        %v1458 = vadd.f32 0.0, %v1457
        %v1459 = vpop.f32.mrf.mxu0
        %v1460 = vpop.f32.mrf.mxu0
        %v1461 = vadd.f32 0.0, %v1460
        %v1462 = vpop.f32.mrf.mxu0
        %1463 = vdwg.mxu0
        %v1472 = vunpack.c.l.b16 %v475
        %v1473 = vunpack.c.l.b16 %v476
        %v1474 = vunpack.c.l.b16 %v477
        %v1475 = vunpack.c.l.b16 %v478
        %v1476 = vunpack.c.l.b16 %v479
        %v1477 = vunpack.c.l.b16 %v480
        %v1478 = vunpack.c.l.b16 %v481
        %v1479 = vunpack.c.l.b16 %v482
        %v1480 = vpack.c.b16 %v1473, %v1472
        %v1481 = vpack.c.b16 %v1475, %v1474
        %v1482 = vpack.c.b16 %v1477, %v1476
        %v1483 = vpack.c.b16 %v1479, %v1478
        %v1504 = vunpack.c.l.b16 %v1315
        %v1505 = vunpack.c.l.b16 %v1316
        %v1506 = vunpack.c.l.b16 %v1317
        %v1507 = vunpack.c.l.b16 %v1318
        %v1508 = vunpack.c.l.b16 %v1319
        %v1509 = vunpack.c.l.b16 %v1320
        %v1510 = vunpack.c.l.b16 %v1321
        %v1511 = vunpack.c.l.b16 %v1322
        %v1512 = vunpack.c.l.b16 %v1323
        %v1513 = vunpack.c.l.b16 %v1324
        %v1514 = vunpack.c.l.b16 %v1325
        %v1515 = vunpack.c.l.b16 %v1326
        %v1516 = vunpack.c.l.b16 %v1327
        %v1517 = vunpack.c.l.b16 %v1328
        %v1518 = vunpack.c.l.b16 %v1329
        %v1519 = vunpack.c.l.b16 %v1330
        %v1520 = vpack.c.b16 %v1505, %v1504
        %v1521 = vpack.c.b16 %v1507, %v1506
        %v1522 = vpack.c.b16 %v1509, %v1508
        %v1523 = vpack.c.b16 %v1511, %v1510
        %v1524 = vpack.c.b16 %v1513, %v1512
        %v1525 = vpack.c.b16 %v1515, %v1514
        %v1526 = vpack.c.b16 %v1517, %v1516
        %v1527 = vpack.c.b16 %v1519, %v1518
        %1536 = vmatprep.subr.bf16.mxu0 0
        %1537 = vmatpush1.bf16.msra.mxu0 %v1527
        %1538 = vmatprep.subr.bf16.mxu0 0
        %1539 = vmatpush1.bf16.msra.mxu0 %v1526
        %1540 = vmatprep.subr.bf16.mxu0 0
        %1541 = vmatpush1.bf16.msra.mxu0 %v1525
        %1542 = vmatprep.subr.bf16.mxu0 0
        %1543 = vmatpush1.bf16.msra.mxu0 %v1524
        %1544 = vmatprep.subr.bf16.mxu0 0
        %1545 = vmatpush1.bf16.msra.mxu0 %v1523
        %1546 = vmatprep.subr.bf16.mxu0 0
        %1547 = vmatpush1.bf16.msra.mxu0 %v1522
        %1548 = vmatprep.subr.bf16.mxu0 0
        %1549 = vmatpush1.bf16.msra.mxu0 %v1521
        %1550 = vmatprep.subr.bf16.mxu0 0
        %1551 = vmatpush1.bf16.msra.mxu0 %v1520
        %1552 = vmatprep.subr.bf16.mxu0 0
        %1553 = vmatpush2.bf16.msra.mxu0 0
        %1554 = vmatprep.subr.bf16.mxu0 0
        %1555 = vmatpush2.bf16.msra.mxu0 0
        %1556 = vmatprep.subr.bf16.mxu0 0
        %1557 = vmatpush2.bf16.msra.mxu0 0
        %1558 = vmatprep.subr.bf16.mxu0 0
        %1559 = vmatpush2.bf16.msra.mxu0 0
        %1560 = vmatprep.subr.bf16.mxu0 0
        %1561 = vmatpush2.bf16.msra.mxu0 0
        %1562 = vmatprep.subr.bf16.mxu0 0
        %1563 = vmatpush2.bf16.msra.mxu0 0
        %1564 = vmatprep.subr.bf16.mxu0 0
        %1565 = vmatpush2.bf16.msra.mxu0 0
        %1566 = vmatprep.subr.bf16.mxu0 0
        %1567 = vmatpush2.bf16.msra.mxu0 0
        %1568 = vmatprep.mubr.bf16.mxu0 0
        %1569 = vmatmul.mubr.bf16.gmra.mxu0 %v1480
        %v1570 = vpop.f32.mrf.mxu0
        %v1571 = vadd.f32 %v1434, %v1570
        %v1572 = vpop.f32.mrf.mxu0
        %v1573 = vpop.f32.mrf.mxu0
        %v1574 = vadd.f32 %v1437, %v1573
        %v1575 = vpop.f32.mrf.mxu0
        %1576 = vmatprep.mubr.bf16.mxu0 0
        %1577 = vmatmul.mubr.bf16.gmra.mxu0 %v1481
        %v1578 = vpop.f32.mrf.mxu0
        %v1579 = vadd.f32 %v1442, %v1578
        %v1580 = vpop.f32.mrf.mxu0
        %v1581 = vpop.f32.mrf.mxu0
        %v1582 = vadd.f32 %v1445, %v1581
        %v1583 = vpop.f32.mrf.mxu0
        %1584 = vmatprep.mubr.bf16.mxu0 0
        %1585 = vmatmul.mubr.bf16.gmra.mxu0 %v1482
        %v1586 = vpop.f32.mrf.mxu0
        %v1587 = vadd.f32 %v1450, %v1586
        %v1588 = vpop.f32.mrf.mxu0
        %v1589 = vpop.f32.mrf.mxu0
        %v1590 = vadd.f32 %v1453, %v1589
        %v1591 = vpop.f32.mrf.mxu0
        %1592 = vmatprep.mubr.bf16.mxu0 0
        %1593 = vmatmul.mubr.bf16.gmra.mxu0 %v1483
        %v1594 = vpop.f32.mrf.mxu0
        %v1595 = vadd.f32 %v1458, %v1594
        %v1596 = vpop.f32.mrf.mxu0
        %v1597 = vpop.f32.mrf.mxu0
        %v1598 = vadd.f32 %v1461, %v1597
        %v1599 = vpop.f32.mrf.mxu0
        %1600 = vdwg.mxu0
        %v1601 = vld [vmem:[%s6] sm:$0x1]
        %v1602 = vlaneseq
        %v1603 = vshrl.u32 %v1602, 7
        %v1604 = vsub.s32 0, %v1603
        %v1605 = vrot.slane %v1601, %v1604
        %v1606 = vadd.f32 %v1571, %v1605
        %v1607 = vadd.f32 %v1574, %v1605
        %v1608 = vadd.f32 %v1579, %v1605
        %v1609 = vadd.f32 %v1582, %v1605
        %v1610 = vadd.f32 %v1587, %v1605
        %v1611 = vadd.f32 %v1590, %v1605
        %v1612 = vadd.f32 %v1595, %v1605
        %v1613 = vadd.f32 %v1598, %v1605
        %vm1614 = vcmp.gt.f32.partialorder %v1606, 0.0
        %vm1615 = vcmp.gt.f32.partialorder %v1607, 0.0
        %vm1616 = vcmp.gt.f32.partialorder %v1608, 0.0
        %vm1617 = vcmp.gt.f32.partialorder %v1609, 0.0
        %vm1618 = vcmp.gt.f32.partialorder %v1610, 0.0
        %vm1619 = vcmp.gt.f32.partialorder %v1611, 0.0
        %vm1620 = vcmp.gt.f32.partialorder %v1612, 0.0
        %vm1621 = vcmp.gt.f32.partialorder %v1613, 0.0
        %v1622 = vld [vmem:[%s6 + $0x1] sm:$0x1]
        %v1623 = vlaneseq
        %v1624 = vshrl.u32 %v1623, 7
        %v1625 = vsub.s32 0, %v1624
        %v1626 = vrot.slane %v1622, %v1625
        %v1627 = vmul.f32 %v1606, %v1626
        %v1628 = vmul.f32 %v1607, %v1626
        %v1629 = vmul.f32 %v1608, %v1626
        %v1630 = vmul.f32 %v1609, %v1626
        %v1631 = vmul.f32 %v1610, %v1626
        %v1632 = vmul.f32 %v1611, %v1626
        %v1633 = vmul.f32 %v1612, %v1626
        %v1634 = vmul.f32 %v1613, %v1626
        %v1635 = vsel %vm1614, %v1606, %v1627
        %v1636 = vsel %vm1615, %v1607, %v1628
        %v1637 = vsel %vm1616, %v1608, %v1629
        %v1638 = vsel %vm1617, %v1609, %v1630
        %v1639 = vsel %vm1618, %v1610, %v1631
        %v1640 = vsel %vm1619, %v1611, %v1632
        %v1641 = vsel %vm1620, %v1612, %v1633
        %v1642 = vsel %vm1621, %v1613, %v1634
        %v1643 = vpack.c.bf16 %v1636, %v1635
        %v1644 = vpack.c.bf16 %v1638, %v1637
        %v1645 = vpack.c.bf16 %v1640, %v1639
        %v1646 = vpack.c.bf16 %v1642, %v1641
        %v1647 = vld [vmem:[#allocation5] sm:$0xf]
        %v1648 = vld [vmem:[#allocation5 + $0x4] sm:$0xf]
        %v1649 = vld [vmem:[#allocation5 + $0x8] sm:$0xf]
        %v1650 = vld [vmem:[#allocation5 + $0xc] sm:$0xf]
        %v1651 = vld [vmem:[#allocation5 + $0x10] sm:$0xf]
        %v1652 = vld [vmem:[#allocation5 + $0x14] sm:$0xf]
        %v1653 = vld [vmem:[#allocation5 + $0x18] sm:$0xf]
        %v1654 = vld [vmem:[#allocation5 + $0x1c] sm:$0xf]
        %v1655 = vld [vmem:[#allocation5 + $0x20] sm:$0xf]
        %v1656 = vld [vmem:[#allocation5 + $0x24] sm:$0xf]
        %v1657 = vld [vmem:[#allocation5 + $0x28] sm:$0xf]
        %v1658 = vld [vmem:[#allocation5 + $0x2c] sm:$0xf]
        %v1659 = vld [vmem:[#allocation5 + $0x30] sm:$0xf]
        %v1660 = vld [vmem:[#allocation5 + $0x34] sm:$0xf]
        %v1661 = vld [vmem:[#allocation5 + $0x38] sm:$0xf]
        %v1662 = vld [vmem:[#allocation5 + $0x3c] sm:$0xf]
        %v1663 = vld [vmem:[%s8] sm:$0x1]
        %v1664 = vlaneseq
        %v1665 = vshrl.u32 %v1664, 7
        %v1666 = vsub.s32 0, %v1665
        %v1667 = vrot.slane %v1663, %v1666
        %v1684 = vunpack.c.l.b16 %v1647
        %v1685 = vunpack.c.l.b16 %v1648
        %v1686 = vunpack.c.l.b16 %v1649
        %v1687 = vunpack.c.l.b16 %v1650
        %v1688 = vunpack.c.l.b16 %v1651
        %v1689 = vunpack.c.l.b16 %v1652
        %v1690 = vunpack.c.l.b16 %v1653
        %v1691 = vunpack.c.l.b16 %v1654
        %v1692 = vunpack.c.l.b16 %v1655
        %v1693 = vunpack.c.l.b16 %v1656
        %v1694 = vunpack.c.l.b16 %v1657
        %v1695 = vunpack.c.l.b16 %v1658
        %v1696 = vunpack.c.l.b16 %v1659
        %v1697 = vunpack.c.l.b16 %v1660
        %v1698 = vunpack.c.l.b16 %v1661
        %v1699 = vunpack.c.l.b16 %v1662
        %v1700 = vpack.c.b16 %v1685, %v1684
        %v1701 = vpack.c.b16 %v1687, %v1686
        %v1702 = vpack.c.b16 %v1689, %v1688
        %v1703 = vpack.c.b16 %v1691, %v1690
        %v1704 = vpack.c.b16 %v1693, %v1692
        %v1705 = vpack.c.b16 %v1695, %v1694
        %v1706 = vpack.c.b16 %v1697, %v1696
        %v1707 = vpack.c.b16 %v1699, %v1698
        %1716 = vmatprep.subr.bf16.mxu0 0
        %1717 = vmatpush1.bf16.msra.mxu0 %v1707
        %1718 = vmatprep.subr.bf16.mxu0 0
        %1719 = vmatpush1.bf16.msra.mxu0 %v1706
        %1720 = vmatprep.subr.bf16.mxu0 0
        %1721 = vmatpush1.bf16.msra.mxu0 %v1705
        %1722 = vmatprep.subr.bf16.mxu0 0
        %1723 = vmatpush1.bf16.msra.mxu0 %v1704
        %1724 = vmatprep.subr.bf16.mxu0 0
        %1725 = vmatpush1.bf16.msra.mxu0 %v1703
        %1726 = vmatprep.subr.bf16.mxu0 0
        %1727 = vmatpush1.bf16.msra.mxu0 %v1702
        %1728 = vmatprep.subr.bf16.mxu0 0
        %1729 = vmatpush1.bf16.msra.mxu0 %v1701
        %1730 = vmatprep.subr.bf16.mxu0 0
        %1731 = vmatpush1.bf16.msra.mxu0 %v1700
        %1732 = vmatprep.subr.bf16.mxu0 0
        %1733 = vmatpush2.bf16.msra.mxu0 0
        %1734 = vmatprep.subr.bf16.mxu0 0
        %1735 = vmatpush2.bf16.msra.mxu0 0
        %1736 = vmatprep.subr.bf16.mxu0 0
        %1737 = vmatpush2.bf16.msra.mxu0 0
        %1738 = vmatprep.subr.bf16.mxu0 0
        %1739 = vmatpush2.bf16.msra.mxu0 0
        %1740 = vmatprep.subr.bf16.mxu0 0
        %1741 = vmatpush2.bf16.msra.mxu0 0
        %1742 = vmatprep.subr.bf16.mxu0 0
        %1743 = vmatpush2.bf16.msra.mxu0 0
        %1744 = vmatprep.subr.bf16.mxu0 0
        %1745 = vmatpush2.bf16.msra.mxu0 0
        %1746 = vmatprep.subr.bf16.mxu0 0
        %1747 = vmatpush2.bf16.msra.mxu0 0
        %1748 = vmatprep.mubr.bf16.mxu0 0
        %1749 = vmatmul.mubr.bf16.gmra.mxu0 %v1643
        %v1750 = vpop.f32.mrf.mxu0
        %v1751 = vadd.f32 %v1667, %v1750
        %v1752 = vpop.f32.mrf.mxu0
        %v1753 = vpop.f32.mrf.mxu0
        %v1754 = vadd.f32 %v1667, %v1753
        %v1755 = vpop.f32.mrf.mxu0
        %1756 = vmatprep.mubr.bf16.mxu0 0
        %1757 = vmatmul.mubr.bf16.gmra.mxu0 %v1644
        %v1758 = vpop.f32.mrf.mxu0
        %v1759 = vadd.f32 %v1667, %v1758
        %v1760 = vpop.f32.mrf.mxu0
        %v1761 = vpop.f32.mrf.mxu0
        %v1762 = vadd.f32 %v1667, %v1761
        %v1763 = vpop.f32.mrf.mxu0
        %1764 = vmatprep.mubr.bf16.mxu0 0
        %1765 = vmatmul.mubr.bf16.gmra.mxu0 %v1645
        %v1766 = vpop.f32.mrf.mxu0
        %v1767 = vadd.f32 %v1667, %v1766
        %v1768 = vpop.f32.mrf.mxu0
        %v1769 = vpop.f32.mrf.mxu0
        %v1770 = vadd.f32 %v1667, %v1769
        %v1771 = vpop.f32.mrf.mxu0
        %1772 = vmatprep.mubr.bf16.mxu0 0
        %1773 = vmatmul.mubr.bf16.gmra.mxu0 %v1646
        %v1774 = vpop.f32.mrf.mxu0
        %v1775 = vadd.f32 %v1667, %v1774
        %v1776 = vpop.f32.mrf.mxu0
        %v1777 = vpop.f32.mrf.mxu0
        %v1778 = vadd.f32 %v1667, %v1777
        %v1779 = vpop.f32.mrf.mxu0
        %1780 = vdwg.mxu0
        %vm1781 = vcmp.gt.f32.partialorder %v1751, 0.0
        %vm1782 = vcmp.gt.f32.partialorder %v1754, 0.0
        %vm1783 = vcmp.gt.f32.partialorder %v1759, 0.0
        %vm1784 = vcmp.gt.f32.partialorder %v1762, 0.0
        %vm1785 = vcmp.gt.f32.partialorder %v1767, 0.0
        %vm1786 = vcmp.gt.f32.partialorder %v1770, 0.0
        %vm1787 = vcmp.gt.f32.partialorder %v1775, 0.0
        %vm1788 = vcmp.gt.f32.partialorder %v1778, 0.0
        %v1789 = vld [vmem:[%s8 + $0x1] sm:$0x1]
        %v1790 = vlaneseq
        %v1791 = vshrl.u32 %v1790, 7
        %v1792 = vsub.s32 0, %v1791
        %v1793 = vrot.slane %v1789, %v1792
        %v1794 = vmul.f32 %v1751, %v1793
        %v1795 = vmul.f32 %v1754, %v1793
        %v1796 = vmul.f32 %v1759, %v1793
        %v1797 = vmul.f32 %v1762, %v1793
        %v1798 = vmul.f32 %v1767, %v1793
        %v1799 = vmul.f32 %v1770, %v1793
        %v1800 = vmul.f32 %v1775, %v1793
        %v1801 = vmul.f32 %v1778, %v1793
        %v1802 = vsel %vm1781, %v1751, %v1794
        %v1803 = vsel %vm1782, %v1754, %v1795
        %v1804 = vsel %vm1783, %v1759, %v1796
        %v1805 = vsel %vm1784, %v1762, %v1797
        %v1806 = vsel %vm1785, %v1767, %v1798
        %v1807 = vsel %vm1786, %v1770, %v1799
        %v1808 = vsel %vm1787, %v1775, %v1800
        %v1809 = vsel %vm1788, %v1778, %v1801
        %1810 = vst [vmem:[%s434] sm:$0xff] %v1802
        %1811 = vst [vmem:[%s434 + $0x8] sm:$0xff] %v1803
        %1812 = vst [vmem:[%s434 + $0x10] sm:$0xff] %v1804
        %1813 = vst [vmem:[%s434 + $0x18] sm:$0xff] %v1805
        %1814 = vst [vmem:[%s434 + $0x20] sm:$0xff] %v1806
        %1815 = vst [vmem:[%s434 + $0x28] sm:$0xff] %v1807
        %1816 = vst [vmem:[%s434 + $0x30] sm:$0xff] %v1808
        %1817 = vst [vmem:[%s434 + $0x38] sm:$0xff] %v1809
        %s1818 = sand.u32 %s260, 1
        %s1819 = scalar_lea.sflag [#allocation4], %s1818
        %s1820 = sand.u32 %s260, 1
        %s1821 = smul.addr %s1820, 64
        %s1822 = scalar_lea.vmem [#allocation7], %s1821
        // Predicated region
        $region65: #{tpu_custom_call.1} parent=55 // pred_check
          %p1823 = pneg %p270
        $region66: #{tpu_custom_call.1} parent=55 // pred_check_branch
          %1825 = sbr.rel (%p1823) target = $region68
        $region67: #{tpu_custom_call.1} parent=55 // pred_region
          %s1826 = smul.u32 8, %s30
          %s1828 = ssub.s32 1024, 1024
          %1829 = vsyncadd %s1819, %s1828
          %s1830 = smul.addr %s29, 8
          %s1831 = sadd.s32 %s1826, %s1830
          %s1832 = smul.addr %s1831, 128
          %s1833 = scalar_lea.hbm %s9, %s1832
          %s1834 = sshll.u32 %s1822, 4
          %s1835 = int_to_ptr.vmem [resolvable:$true] %s1834
          %1840 = dma.vmem_to_hbm [thread:$0]  %s1835, 1024, %s1833, %s1819, 128, 128, 8
        $region68: #{tpu_custom_call.1} parent=55 // pred_fallthru
          _
      $region56: #{tpu_custom_call.1} parent=5 // pred_fallthru
        _
      %p1841 = scmp.le.s32.totalorder 2, %s20
      // Predicated region
      $region69: #{tpu_custom_call.1} parent=5 // pred_check
        %p1842 = pneg %p1841
      $region70: #{tpu_custom_call.1} parent=5 // pred_check_branch
        %1844 = sbr.rel (%p1842) target = $region72
      $region71: #{tpu_custom_call.1} parent=5 // pred_region
        %s1845 = ssub.s32 %s20, 2
        // Predicated region
        $region73: #{tpu_custom_call.1} parent=71 // pred_check
          %p1846 = pneg %p276
        $region74: #{tpu_custom_call.1} parent=71 // pred_check_branch
          %1848 = sbr.rel (%p1846) target = $region76
        $region75: #{tpu_custom_call.1} parent=71 // pred_region
          %s1849 = sand.u32 %s261, 1
          %s1850 = scalar_lea.sflag [#allocation4], %s1849
          %s1851 = sand.u32 %s261, 1
          %s1852 = smul.addr %s1851, 64
          %s1853 = scalar_lea.vmem [#allocation7], %s1852
          %1854 = dma.done %s1850, 1024
        $region76: #{tpu_custom_call.1} parent=71 // pred_fallthru
          _
      $region72: #{tpu_custom_call.1} parent=5 // pred_fallthru
        _
    $region6: #{tpu_custom_call.1} parent=1 // loop_footer
      %s24 = sadd.s32 1, %s20
    $region7: #{tpu_custom_call.1} parent=1 // loop_footer_branch
      %19 = sbr.rel target = $region3
    $region8: #{tpu_custom_call.1} parent=1 // loop_exit
      _
    %1855 = vsyncpa [#allocation3], 1
    %s1856 = scalar_lea.sflag [#allocation3], 1
    %1857 = vsyncpa %s1856, 1
    %1858 = vsyncpa [#allocation6], 1
    %1859 = vsyncpa [#allocation4], 1
    %s1860 = scalar_lea.sflag [#allocation4], 1
    %1861 = vsyncpa %s1860, 1

</llo_original>
